<compile_context>
chip_gen: v5e
topology: v5e:2x2
jax: 0.10.0
libtpu: 0.0.40
codegen_flags: <defaults>
</compile_context>

<pallas_src>
import functools

import jax
import jax.numpy as jnp
from jax.experimental import pallas as pl
from jax.experimental.pallas import tpu as pltpu

BN_EPS = 1e-5
LEAKY_SLOPE = 0.1

_DIMSEM = pltpu.CompilerParams(dimension_semantics=("parallel", "parallel"))


# ------------------------------ Pallas kernels ------------------------------ #

def _gemm_stats_kernel(x_ref, w_ref, y_ref, s_ref):
    # x: (Mt, K) bf16, w: (K, Ct) bf16 -> y: (Mt, Ct) f32,
    # s: (1, 2, Ct) per-tile partial [sum, sum-of-squares] for BatchNorm stats.
    y = jnp.dot(x_ref[...], w_ref[...], preferred_element_type=jnp.float32)
    y_ref[...] = y
    ssum = jnp.sum(y, axis=0, keepdims=True)
    ssq = jnp.sum(y * y, axis=0, keepdims=True)
    s_ref[0] = jnp.concatenate([ssum, ssq], axis=0)


def _bn_act_kernel(y_ref, scale_ref, shift_ref, o_ref):
    # Folded BatchNorm affine + LeakyReLU(0.1); bf16 output.
    yn = y_ref[...] * scale_ref[...] + shift_ref[...]
    o_ref[...] = jnp.where(yn >= 0, yn, LEAKY_SLOPE * yn).astype(o_ref.dtype)


def _bn_act_res_kernel(y_ref, scale_ref, shift_ref, res_ref, o_ref):
    # Same as above, with the Res_Unit residual add fused into the epilogue.
    yn = y_ref[...] * scale_ref[...] + shift_ref[...]
    act = jnp.where(yn >= 0, yn, LEAKY_SLOPE * yn)
    o_ref[...] = (act + res_ref[...].astype(jnp.float32)).astype(o_ref.dtype)


def _gemm_bias_kernel(x_ref, w_ref, b_ref, o_ref):
    # Plain Conv2d (YOLO head 1x1): bf16 GEMM + bias, no BN / activation.
    o_ref[...] = (jnp.dot(x_ref[...], w_ref[...],
                          preferred_element_type=jnp.float32)
                  + b_ref[...]).astype(o_ref.dtype)


# ------------------------------ tiling helpers ------------------------------ #

def _pick_ct(c):
    if c % 256 == 0:
        return 256
    if c % 128 == 0:
        return 128
    return c            # block == full dim is always legal (e.g. 32, 64, 192)


def _pick_mt(m):
    if m <= 1024:
        return m
    for t in (1024, 512, 256, 128, 64, 32, 16, 8):
        if m % t == 0:
            return t
    return m


def _im2col_nhwc(x, k, stride, pad):
    """NHWC patch extraction.  1x1 is a pure reshape; 3x3 concatenates shifted
    views along the (fast) channel axis, so K index = (i*kw + j)*Cin + c."""
    n, h, w, c = x.shape
    ho = (h + 2 * pad - k) // stride + 1
    wo = (w + 2 * pad - k) // stride + 1
    if k == 1 and pad == 0:
        if stride != 1:
            x = x[:, ::stride, ::stride, :]
        return x.reshape(n * ho * wo, c), ho, wo
    xp = jnp.pad(x, ((0, 0), (pad, pad), (pad, pad), (0, 0)))
    patches = [xp[:, i:i + stride * ho:stride, j:j + stride * wo:stride, :]
               for i in range(k) for j in range(k)]
    col = jnp.concatenate(patches, axis=-1)          # (N, Ho, Wo, k*k*C)
    return col.reshape(n * ho * wo, k * k * c), ho, wo


# ------------------------------- conv wrappers ------------------------------ #

@functools.partial(jax.jit, static_argnames=("ksize", "stride", "pad"))
def conv_bn_leaky(x, w, gamma, beta, res, *, ksize, stride, pad):
    """Conv2d (bias-free; bias cancels under train-mode BN) + BatchNorm2d(train)
    + LeakyReLU(0.1), optional fused residual add.  NHWC bf16 in / bf16 out."""
    n = x.shape[0]
    cols, ho, wo = _im2col_nhwc(x, ksize, stride, pad)
    m, k = cols.shape
    cout = w.shape[1]
    mt, ct = _pick_mt(m), _pick_ct(cout)
    grid = (m // mt, cout // ct)

    # Pass 1: tiled bf16 MXU GEMM (f32 accumulation) + partial BN statistics.
    y, stats = pl.pallas_call(
        _gemm_stats_kernel,
        out_shape=(jax.ShapeDtypeStruct((m, cout), jnp.float32),
                   jax.ShapeDtypeStruct((m // mt, 2, cout), jnp.float32)),
        grid=grid,
        in_specs=[pl.BlockSpec((mt, k), lambda i, j: (i, 0)),
                  pl.BlockSpec((k, ct), lambda i, j: (0, j))],
        out_specs=(pl.BlockSpec((mt, ct), lambda i, j: (i, j)),
                   pl.BlockSpec((1, 2, ct), lambda i, j: (i, 0, j))),
        compiler_params=_DIMSEM,
    )(cols, w)

    # Tiny cross-tile reduction + BN affine folding (biased batch variance,
    # exactly PyTorch BatchNorm2d in training mode).
    sums = jnp.sum(stats, axis=0)
    mean = sums[0] / m
    var = jnp.maximum(sums[1] / m - mean * mean, 0.0)
    scale = gamma * jax.lax.rsqrt(var + BN_EPS)
    shift = beta - mean * scale

    # Pass 2: normalize + LeakyReLU (+ fused residual), bf16 out.
    in_specs = [pl.BlockSpec((mt, ct), lambda i, j: (i, j)),
                pl.BlockSpec((1, ct), lambda i, j: (0, j)),
                pl.BlockSpec((1, ct), lambda i, j: (0, j))]
    args = [y, scale.reshape(1, cout), shift.reshape(1, cout)]
    kernel = _bn_act_kernel
    if res is not None:
        kernel = _bn_act_res_kernel
        in_specs.append(pl.BlockSpec((mt, ct), lambda i, j: (i, j)))
        args.append(res.reshape(m, cout))
    out = pl.pallas_call(
        kernel,
        out_shape=jax.ShapeDtypeStruct((m, cout), jnp.bfloat16),
        grid=grid,
        in_specs=in_specs,
        out_specs=pl.BlockSpec((mt, ct), lambda i, j: (i, j)),
        compiler_params=_DIMSEM,
    )(*args)
    return out.reshape(n, ho, wo, cout)


@functools.partial(jax.jit, static_argnames=("ksize", "stride", "pad"))
def conv_bias(x, w, b, *, ksize, stride, pad):
    """Plain Conv2d (+bias) for the YOLO heads; cout already padded to 256."""
    n = x.shape[0]
    cols, ho, wo = _im2col_nhwc(x, ksize, stride, pad)
    m, k = cols.shape
    cout = w.shape[1]
    mt, ct = _pick_mt(m), _pick_ct(cout)
    grid = (m // mt, cout // ct)
    out = pl.pallas_call(
        _gemm_bias_kernel,
        out_shape=jax.ShapeDtypeStruct((m, cout), jnp.float32),
        grid=grid,
        in_specs=[pl.BlockSpec((mt, k), lambda i, j: (i, 0)),
                  pl.BlockSpec((k, ct), lambda i, j: (0, j)),
                  pl.BlockSpec((1, ct), lambda i, j: (0, j))],
        out_specs=pl.BlockSpec((mt, ct), lambda i, j: (i, j)),
        compiler_params=_DIMSEM,
    )(cols, w, b.reshape(1, cout))
    return out.reshape(n, ho, wo, cout)


def _upsample2_nhwc(x):
    # nn.Upsample(scale_factor=2, mode='nearest') on NHWC.
    # TODO(synk): could be fused into the consumer conv's index_map instead of
    # materializing the upsampled/concatenated tensor in HBM.
    return jnp.repeat(jnp.repeat(x, 2, axis=1), 2, axis=2)


# ---------------------------- parameter building ---------------------------- #

class _KeyGen:
    def __init__(self, seed):
        self._base = jax.random.PRNGKey(seed)
        self._i = 0

    def __call__(self):
        k = jax.random.fold_in(self._base, self._i)
        self._i += 1
        return k


def _init_cbl(kg, cin, cout, ksize):
    fan_in = cin * ksize * ksize
    bound = 1.0 / (fan_in ** 0.5)
    # Weight created directly in GEMM layout (kh*kw*cin, cout) — a permutation
    # of PyTorch's (cout, cin, kh, kw) Conv2d init with the same distribution.
    w = jax.random.uniform(kg(), (ksize * ksize * cin, cout), jnp.float32,
                           -bound, bound).astype(jnp.bfloat16)
    # Conv2d bias omitted: exactly cancelled by train-mode BatchNorm mean sub.
    return {"w": w,
            "gamma": jnp.ones((cout,), jnp.float32),
            "beta": jnp.zeros((cout,), jnp.float32),
            "k": ksize}


def _init_head_conv(kg, cin, cout=255, cpad=256):
    bound = 1.0 / (cin ** 0.5)
    w = jax.random.uniform(kg(), (cin, cout), jnp.float32, -bound, bound)
    b = jax.random.uniform(kg(), (cout,), jnp.float32, -bound, bound)
    # Pad 255 -> 256 channels for lane-dense stores; sliced back in forward.
    w = jnp.pad(w, ((0, 0), (0, cpad - cout))).astype(jnp.bfloat16)
    b = jnp.pad(b, (0, cpad - cout))
    return {"w": w, "b": b}


def _init_cbl5(kg, cin):
    return [_init_cbl(kg, cin, cin // 2, 1),
            _init_cbl(kg, cin // 2, cin, 3),
            _init_cbl(kg, cin, cin // 2, 1),
            _init_cbl(kg, cin // 2, cin, 3),
            _init_cbl(kg, cin, cin // 2, 1)]


def _init_res_unit(kg, in_num, out_num):
    return [_init_cbl(kg, in_num, out_num, 1),
            _init_cbl(kg, out_num, in_num, 3)]


def _init_resx(kg, in_num, out_num, block_num):
    return {"cbl": _init_cbl(kg, in_num, out_num, 3),
            "blocks": [_init_res_unit(kg, out_num, in_num)
                       for _ in range(block_num)]}


def _init_darknet53(kg):
    return {"cbl": _init_cbl(kg, 3, 32, 3),
            "res1": _init_resx(kg, 32, 64, 1),
            "res2": _init_resx(kg, 64, 128, 2),
            "res3": _init_resx(kg, 128, 256, 8),
            "res4": _init_resx(kg, 256, 512, 8),
            "res5": _init_resx(kg, 512, 1024, 4)}


def _init_yolo_head(kg, in_num):
    return {"cbl": _init_cbl(kg, in_num, in_num * 2, 3),
            "conv": _init_head_conv(kg, in_num * 2)}


def init_yolov3(kg):
    return {"backbone": _init_darknet53(kg),
            "l1_cbl5": _init_cbl5(kg, 1024),
            "l1_head": _init_yolo_head(kg, 1024 // 2),
            "l2_cbl": _init_cbl(kg, 512, 256, 1),
            "l2_cbl5": _init_cbl5(kg, 768),
            "l2_head": _init_yolo_head(kg, 768 // 2),
            "l3_cbl": _init_cbl(kg, 384, 128, 1),
            "l3_cbl5": _init_cbl5(kg, 384),
            "l3_head": _init_yolo_head(kg, 384 // 2)}


# ------------------------------ forward passes ------------------------------ #

def _cbl_fwd(p, x, stride, pad, res=None):
    return conv_bn_leaky(x, p["w"], p["gamma"], p["beta"], res,
                         ksize=p["k"], stride=stride, pad=pad)


def _cbl5_fwd(ps, x):
    x = _cbl_fwd(ps[0], x, 1, 0)
    x = _cbl_fwd(ps[1], x, 1, 1)
    x = _cbl_fwd(ps[2], x, 1, 0)
    x = _cbl_fwd(ps[3], x, 1, 1)
    x = _cbl_fwd(ps[4], x, 1, 0)
    return x


def _res_unit_fwd(ps, x):
    h = _cbl_fwd(ps[0], x, 1, 0)
    # Residual add fused into the second CBL's BN/activation epilogue kernel.
    return _cbl_fwd(ps[1], h, 1, 1, res=x)


def _resx_fwd(p, x):
    x = _cbl_fwd(p["cbl"], x, 2, 1)
    for bp in p["blocks"]:
        x = _res_unit_fwd(bp, x)
    return x


def _darknet53_fwd(p, x):
    x = _cbl_fwd(p["cbl"], x, 1, 1)
    x = _resx_fwd(p["res1"], x)
    x = _resx_fwd(p["res2"], x)
    x = _resx_fwd(p["res3"], x)
    out3 = x
    x = _resx_fwd(p["res4"], x)
    out4 = x
    x = _resx_fwd(p["res5"], x)
    return out3, out4, x


def _yolo_head_fwd(p, x):
    x = _cbl_fwd(p["cbl"], x, 1, 1)
    y = conv_bias(x, p["conv"]["w"], p["conv"]["b"], ksize=1, stride=1, pad=0)
    return y[..., :255]          # strip the lane-padding channel


def yolov3_forward(params, x_nchw):
    # Single NCHW->NHWC conversion; everything downstream is channels-last bf16.
    x = jnp.transpose(x_nchw, (0, 2, 3, 1)).astype(jnp.bfloat16)
    x3, x4, x5 = _darknet53_fwd(params["backbone"], x)

    layer1_branch = _cbl5_fwd(params["l1_cbl5"], x5)
    layer1_out = _yolo_head_fwd(params["l1_head"], layer1_branch)

    layer2_in = _cbl_fwd(params["l2_cbl"], layer1_branch, 1, 0)
    layer2_in = _upsample2_nhwc(layer2_in)
    layer2_in = jnp.concatenate([layer2_in, x4], axis=-1)
    layer2_branch = _cbl5_fwd(params["l2_cbl5"], layer2_in)
    layer2_out = _yolo_head_fwd(params["l2_head"], layer2_branch)

    layer3_in = _cbl_fwd(params["l3_cbl"], layer2_branch, 1, 0)
    layer3_in = _upsample2_nhwc(layer3_in)
    layer3_in = jnp.concatenate([layer3_in, x3], axis=-1)
    layer3_branch = _cbl5_fwd(params["l3_cbl5"], layer3_in)
    layer3_out = _yolo_head_fwd(params["l3_head"], layer3_branch)

    # Back to PyTorch's NCHW output layout (three tiny tensors).
    to_nchw = lambda t: jnp.transpose(t, (0, 3, 1, 2)).astype(jnp.float32)
    return to_nchw(layer1_out), to_nchw(layer2_out), to_nchw(layer3_out)


# ----------------------------------- main ----------------------------------- #

if __name__ == "__main__":
    kg = _KeyGen(0)
    params = init_yolov3(kg)

    # Small input consistent with the module: N=2, RGB, 64x64 (divisible by 32
    # so all 5 stride-2 stages and the two nearest-upsamples line up).
    x = jax.random.normal(jax.random.PRNGKey(0), (2, 3, 64, 64), jnp.float32)

    out1, out2, out3 = yolov3_forward(params, x)
    jax.block_until_ready((out1, out2, out3))

    assert out1.shape == (2, 255, 2, 2), out1.shape
    assert out2.shape == (2, 255, 4, 4), out2.shape
    assert out3.shape == (2, 255, 8, 8), out3.shape
    assert bool(jnp.isfinite(out1).all() & jnp.isfinite(out2).all()
                & jnp.isfinite(out3).all())
    print("KERNEL_OK")
</pallas_src>

<mosaic_0001>
module attributes {stable_mosaic.version = 11 : i64} {
  func.func @_bn_act_kernel(%arg0: i32, %arg1: i32, %arg2: memref<1024x32xf32, #tpu.memory_space<vmem>>, %arg3: memref<1x32xf32, #tpu.memory_space<vmem>>, %arg4: memref<1x32xf32, #tpu.memory_space<vmem>>, %arg5: memref<1024x32xbf16, #tpu.memory_space<vmem>>) attributes {dimension_semantics = [#tpu.dimension_semantics<parallel>, #tpu.dimension_semantics<parallel>], iteration_bounds = array<i64: 8, 1>, scalar_prefetch = 0 : i64, scratch_operands = 0 : i64, tpu.core_type = #tpu.core_type<tc>, window_params = [{transform_indices = @transform_0, window_bounds = array<i64: 1024, 32>}, {transform_indices = @transform_1, window_bounds = array<i64: 1, 32>}, {transform_indices = @transform_2, window_bounds = array<i64: 1, 32>}, {transform_indices = @transform_3, window_bounds = array<i64: 1024, 32>}]} {
    %c0 = arith.constant 0 : index
    %c0_0 = arith.constant 0 : index
    %0 = vector.load %arg2[%c0, %c0_0] : memref<1024x32xf32, #tpu.memory_space<vmem>>, vector<1024x32xf32>
    %c0_1 = arith.constant 0 : index
    %c0_2 = arith.constant 0 : index
    %1 = vector.load %arg3[%c0_1, %c0_2] : memref<1x32xf32, #tpu.memory_space<vmem>>, vector<1x32xf32>
    %2 = vector.broadcast %1 : vector<1x32xf32> to vector<1024x32xf32>
    %3 = arith.mulf %0, %2 : vector<1024x32xf32>
    %c0_3 = arith.constant 0 : index
    %c0_4 = arith.constant 0 : index
    %4 = vector.load %arg4[%c0_3, %c0_4] : memref<1x32xf32, #tpu.memory_space<vmem>>, vector<1x32xf32>
    %5 = vector.broadcast %4 : vector<1x32xf32> to vector<1024x32xf32>
    %6 = arith.addf %3, %5 : vector<1024x32xf32>
    %cst = arith.constant 0.000000e+00 : f32
    %7 = vector.broadcast %cst : f32 to vector<1024x32xf32>
    %8 = arith.cmpf oge, %6, %7 : vector<1024x32xf32>
    %cst_5 = arith.constant 1.000000e-01 : f32
    %9 = vector.broadcast %cst_5 : f32 to vector<1024x32xf32>
    %10 = arith.mulf %9, %6 : vector<1024x32xf32>
    %11 = arith.select %8, %6, %10 : vector<1024x32xi1>, vector<1024x32xf32>
    %12 = arith.truncf %11 : vector<1024x32xf32> to vector<1024x32xbf16>
    %c0_6 = arith.constant 0 : index
    %c0_7 = arith.constant 0 : index
    %13 = vector.load %arg5[%c0_6, %c0_7] : memref<1024x32xbf16, #tpu.memory_space<vmem>>, vector<1024x32xbf16>
    tpu.vector_store %arg5[%c0_6, %c0_7], %12 {strides = array<i32>} : memref<1024x32xbf16, #tpu.memory_space<vmem>>, vector<1024x32xbf16>,
    return
  }
  func.func @transform_0(%arg0: i32, %arg1: i32) -> (i32, i32) {
    %c0_i32 = arith.constant 0 : i32
    return %arg0, %arg1 : i32, i32
  }
  func.func @transform_1(%arg0: i32, %arg1: i32) -> (i32, i32) {
    %c0_i32 = arith.constant 0 : i32
    %c0_i32_0 = arith.constant 0 : i32
    return %c0_i32, %arg1 : i32, i32
  }
  func.func @transform_2(%arg0: i32, %arg1: i32) -> (i32, i32) {
    %c0_i32 = arith.constant 0 : i32
    %c0_i32_0 = arith.constant 0 : i32
    return %c0_i32, %arg1 : i32, i32
  }
  func.func @transform_3(%arg0: i32, %arg1: i32) -> (i32, i32) {
    %c0_i32 = arith.constant 0 : i32
    return %arg0, %arg1 : i32, i32
  }
}

module attributes {stable_mosaic.version = 11 : i64} {
  func.func @_gemm_stats_kernel(%arg0: i32, %arg1: i32, %arg2: memref<1024x27xbf16, #tpu.memory_space<vmem>>, %arg3: memref<27x32xbf16, #tpu.memory_space<vmem>>, %arg4: memref<1024x32xf32, #tpu.memory_space<vmem>>, %arg5: memref<1x2x32xf32, #tpu.memory_space<vmem>>) attributes {dimension_semantics = [#tpu.dimension_semantics<parallel>, #tpu.dimension_semantics<parallel>], iteration_bounds = array<i64: 8, 1>, scalar_prefetch = 0 : i64, scratch_operands = 0 : i64, tpu.core_type = #tpu.core_type<tc>, window_params = [{transform_indices = @transform_0, window_bounds = array<i64: 1024, 27>}, {transform_indices = @transform_1, window_bounds = array<i64: 27, 32>}, {transform_indices = @transform_2, window_bounds = array<i64: 1024, 32>}, {transform_indices = @transform_3, window_bounds = array<i64: 1, 2, 32>}]} {
    %c0 = arith.constant 0 : index
    %c0_0 = arith.constant 0 : index
    %0 = vector.load %arg2[%c0, %c0_0] : memref<1024x27xbf16, #tpu.memory_space<vmem>>, vector<1024x27xbf16>
    %c0_1 = arith.constant 0 : index
    %c0_2 = arith.constant 0 : index
    %1 = vector.load %arg3[%c0_1, %c0_2] : memref<27x32xbf16, #tpu.memory_space<vmem>>, vector<27x32xbf16>
    %cst = arith.constant dense<0.000000e+00> : vector<1024x32xf32>
    %2 = tpu.matmul %0, %1, %cst {dimension_numbers = #tpu.dot_dimension_numbers<[1], [0], [0], [1], [0, 0, 1, 1], [], []>} : vector<1024x27xbf16>, vector<27x32xbf16>, vector<1024x32xf32> -> vector<1024x32xf32>
    %c0_3 = arith.constant 0 : index
    %c0_4 = arith.constant 0 : index
    %3 = vector.load %arg4[%c0_3, %c0_4] : memref<1024x32xf32, #tpu.memory_space<vmem>>, vector<1024x32xf32>
    tpu.vector_store %arg4[%c0_3, %c0_4], %2 {strides = array<i32>} : memref<1024x32xf32, #tpu.memory_space<vmem>>, vector<1024x32xf32>,
    %cst_5 = arith.constant dense<0.000000e+00> : vector<32xf32>
    %4 = vector.multi_reduction <add>, %2, %cst_5 [0] : vector<1024x32xf32> to vector<32xf32>
    %5 = vector.shape_cast %4 : vector<32xf32> to vector<1x32xf32>
    %6 = arith.mulf %2, %2 : vector<1024x32xf32>
    %cst_6 = arith.constant dense<0.000000e+00> : vector<32xf32>
    %7 = vector.multi_reduction <add>, %6, %cst_6 [0] : vector<1024x32xf32> to vector<32xf32>
    %8 = vector.shape_cast %7 : vector<32xf32> to vector<1x32xf32>
    %9 = tpu.concatenate %5, %8 in 0 : vector<1x32xf32>, vector<1x32xf32> -> vector<2x32xf32>
    %c0_7 = arith.constant 0 : index
    %c0_8 = arith.constant 0 : index
    %c0_9 = arith.constant 0 : index
    %10 = vector.load %arg5[%c0_7, %c0_8, %c0_9] : memref<1x2x32xf32, #tpu.memory_space<vmem>>, vector<1x2x32xf32>
    %11 = vector.shape_cast %10 : vector<1x2x32xf32> to vector<2x32xf32>
    %12 = vector.shape_cast %9 : vector<2x32xf32> to vector<1x2x32xf32>
    tpu.vector_store %arg5[%c0_7, %c0_8, %c0_9], %12 {strides = array<i32>} : memref<1x2x32xf32, #tpu.memory_space<vmem>>, vector<1x2x32xf32>,
    return
  }
  func.func @transform_0(%arg0: i32, %arg1: i32) -> (i32, i32) {
    %c0_i32 = arith.constant 0 : i32
    %c0_i32_0 = arith.constant 0 : i32
    return %arg0, %c0_i32 : i32, i32
  }
  func.func @transform_1(%arg0: i32, %arg1: i32) -> (i32, i32) {
    %c0_i32 = arith.constant 0 : i32
    %c0_i32_0 = arith.constant 0 : i32
    return %c0_i32, %arg1 : i32, i32
  }
  func.func @transform_2(%arg0: i32, %arg1: i32) -> (i32, i32) {
    %c0_i32 = arith.constant 0 : i32
    return %arg0, %arg1 : i32, i32
  }
  func.func @transform_3(%arg0: i32, %arg1: i32) -> (i32, i32, i32) {
    %c0_i32 = arith.constant 0 : i32
    %c0_i32_0 = arith.constant 0 : i32
    return %arg0, %c0_i32, %arg1 : i32, i32, i32
  }
}

</mosaic_0001>

<llo_original>
// kernel: conv_bn_leaky.3
$region0: #{conv_bn_leaky.3}
  #allocation0 [shape = 'u32[]', space=smem, size = 0x4, offset = 0x4, fixed_abs, tag = 'smem constant byte address 0x4 - core index']
  #allocation1 [shape = 'u32[72,128]{1,0:T(1,128)}', space=vmem, size = 0x9000, scoped, tag = 'internal scratch']
  %s0 = inlined_call_operand.vmem [shape: f32[8192,32], index: 0, kind: input, shape index: {}]
  %s1 = inlined_call_operand.vmem [shape: f32[1,32], index: 1, kind: input, shape index: {}]
  %s2 = inlined_call_operand.vmem [shape: f32[1,32], index: 2, kind: input, shape index: {}]
  %s3 = inlined_call_operand.vmem [shape: bf16[8192,32], index: 3, kind: output, shape index: {}]
  %s4 = sld [smem:[#allocation0]]
  $region45: #{conv_bn_leaky.3} parent=0
    _
  %s6 = ssub.s32 1, %s4
  %s7 = scalar_select 0, %s6, %s4
  loop: start=0, step=1, limit=10
  $region2: #{conv_bn_leaky.3} parent=0 // loop_pre_header
    _
  $region3: #{conv_bn_leaky.3} parent=0 // loop_header
    %s9 = sphi 0, %s13
    %p10 = scmp.ge.s32.totalorder %s9, 10
    %s16 = sphi 0, %s28
    %s17 = sphi 0, %s24
    %s18 = sphi 0, %s16
    %s19 = sphi 0, %s17
    %s20 = sphi 0, %s18
    %s21 = sphi 0, %s19
    %s33 = sphi 0, %s35
    %s36 = sphi 0, %s33
    %s37 = sphi 0, %s36
    %s53 = sphi 0, %s37
    %s59 = sphi 0, %s61
    %s62 = sphi 0, %s59
    %s63 = sphi 0, %s62
    %s79 = sphi 0, %s63
    %s85 = sphi 0, %s87
    %s88 = sphi 0, %s85
    %s89 = sphi 0, %s88
    %s105 = sphi 0, %s89
    %s113 = sphi 0, %s115
    %s116 = sphi 0, %s113
    %s117 = sphi 0, %s116
    %s133 = sphi 0, %s117
  $region4: #{conv_bn_leaky.3} parent=0 // loop_header_branch
    %12 = sbr.rel (%p10) target = $region8
  $region5: #{conv_bn_leaky.3} parent=0 // loop_body
    %s14 = ssub.s32 %s9, 1
    %s15 = ssub.s32 %s9, 2
    %s22 = sadd.s32 1, %s17
    %p23 = scmp.ge.s32.totalorder %s22, 1
    %s24 = scalar_select %p23, 0, %s22
    %s25 = sadd.s32 1, %s16
    %s26 = scalar_select %p23, %s25, %s16
    %p27 = scmp.ge.s32.totalorder %s26, 8
    %s28 = scalar_select %p27, 0, %s26
    %s29 = ssub.s32 %s16, %s28
    %s30 = ssub.s32 %s17, %s24
    %s31 = sor.u32 %s29, %s30
    %p32 = scmp.eq.s32.totalorder %s31, 0
    %s34 = sadd.s32 %s33, 1
    %s35 = scalar_select %p32, %s33, %s34
    %p38 = pneg %p32
    %p39 = scmp.eq.s32.totalorder %s9, 7
    %p40 = por %p38, %p39
    %p41 = scmp.ne.s32.totalorder %s33, %s36
    %p42 = scmp.eq.s32.totalorder %s9, 0
    %p43 = por %p41, %p42
    %p44 = scmp.ne.s32.totalorder %s33, %s36
    %p45 = scmp.eq.s32.totalorder %s14, 7
    %p46 = por %p44, %p45
    %p47 = scmp.ne.s32.totalorder %s36, %s37
    %p48 = scmp.eq.s32.totalorder %s14, 0
    %p49 = por %p47, %p48
    %p50 = scmp.ne.s32.totalorder %s36, %s37
    %p51 = scmp.eq.s32.totalorder %s15, 7
    %p52 = por %p50, %p51
    %p54 = scmp.ne.s32.totalorder %s37, %s53
    %p55 = scmp.eq.s32.totalorder %s15, 0
    %p56 = por %p54, %p55
    %s57 = ssub.s32 %s17, %s24
    %p58 = scmp.eq.s32.totalorder %s57, 0
    %s60 = sadd.s32 %s59, 1
    %s61 = scalar_select %p58, %s59, %s60
    %p64 = pneg %p58
    %p65 = scmp.eq.s32.totalorder %s9, 7
    %p66 = por %p64, %p65
    %p67 = scmp.ne.s32.totalorder %s59, %s62
    %p68 = scmp.eq.s32.totalorder %s9, 0
    %p69 = por %p67, %p68
    %p70 = scmp.ne.s32.totalorder %s59, %s62
    %p71 = scmp.eq.s32.totalorder %s14, 7
    %p72 = por %p70, %p71
    %p73 = scmp.ne.s32.totalorder %s62, %s63
    %p74 = scmp.eq.s32.totalorder %s14, 0
    %p75 = por %p73, %p74
    %p76 = scmp.ne.s32.totalorder %s62, %s63
    %p77 = scmp.eq.s32.totalorder %s15, 7
    %p78 = por %p76, %p77
    %p80 = scmp.ne.s32.totalorder %s63, %s79
    %p81 = scmp.eq.s32.totalorder %s15, 0
    %p82 = por %p80, %p81
    %s83 = ssub.s32 %s17, %s24
    %p84 = scmp.eq.s32.totalorder %s83, 0
    %s86 = sadd.s32 %s85, 1
    %s87 = scalar_select %p84, %s85, %s86
    %p90 = pneg %p84
    %p91 = scmp.eq.s32.totalorder %s9, 7
    %p92 = por %p90, %p91
    %p93 = scmp.ne.s32.totalorder %s85, %s88
    %p94 = scmp.eq.s32.totalorder %s9, 0
    %p95 = por %p93, %p94
    %p96 = scmp.ne.s32.totalorder %s85, %s88
    %p97 = scmp.eq.s32.totalorder %s14, 7
    %p98 = por %p96, %p97
    %p99 = scmp.ne.s32.totalorder %s88, %s89
    %p100 = scmp.eq.s32.totalorder %s14, 0
    %p101 = por %p99, %p100
    %p102 = scmp.ne.s32.totalorder %s88, %s89
    %p103 = scmp.eq.s32.totalorder %s15, 7
    %p104 = por %p102, %p103
    %p106 = scmp.ne.s32.totalorder %s89, %s105
    %p107 = scmp.eq.s32.totalorder %s15, 0
    %p108 = por %p106, %p107
    %s109 = ssub.s32 %s16, %s28
    %s110 = ssub.s32 %s17, %s24
    %s111 = sor.u32 %s109, %s110
    %p112 = scmp.eq.s32.totalorder %s111, 0
    %s114 = sadd.s32 %s113, 1
    %s115 = scalar_select %p112, %s113, %s114
    %p118 = pneg %p112
    %p119 = scmp.eq.s32.totalorder %s9, 7
    %p120 = por %p118, %p119
    %p121 = scmp.ne.s32.totalorder %s113, %s116
    %p122 = scmp.eq.s32.totalorder %s9, 0
    %p123 = por %p121, %p122
    %p124 = scmp.ne.s32.totalorder %s113, %s116
    %p125 = scmp.eq.s32.totalorder %s14, 7
    %p126 = por %p124, %p125
    %p127 = scmp.ne.s32.totalorder %s116, %s117
    %p128 = scmp.eq.s32.totalorder %s14, 0
    %p129 = por %p127, %p128
    %p130 = scmp.ne.s32.totalorder %s116, %s117
    %p131 = scmp.eq.s32.totalorder %s15, 7
    %p132 = por %p130, %p131
    %p134 = scmp.ne.s32.totalorder %s117, %s133
    %p135 = scmp.eq.s32.totalorder %s15, 0
    %p136 = por %p134, %p135
    %p137 = scmp.le.s32.totalorder 1, %s9
    %p138 = scmp.lt.s32.totalorder %s9, 9
    %p139 = pnand %p137, %p138
    %p140 = pneg %p139
    // Predicated region
    $region9: #{conv_bn_leaky.3} parent=5 // pred_check
      _
    $region10: #{conv_bn_leaky.3} parent=5 // pred_check_branch
      %142 = sbr.rel (%p139) target = $region12
    $region11: #{conv_bn_leaky.3} parent=5 // pred_region
      %s143 = ssub.s32 %s9, 1
      // Predicated region
      $region13: #{conv_bn_leaky.3} parent=11 // pred_check
        %p144 = pneg %p75
      $region14: #{conv_bn_leaky.3} parent=11 // pred_check_branch
        %146 = sbr.rel (%p144) target = $region16
      $region15: #{conv_bn_leaky.3} parent=11 // pred_region
        %p147 = scmp.lt.s32.totalorder %s19, 0
        %s148 = scalar_select %p147, %s19, 0
        %s149 = scalar_lea.vmem %s1, %s148
      $region16: #{conv_bn_leaky.3} parent=11 // pred_fallthru
        _
      // Predicated region
      $region17: #{conv_bn_leaky.3} parent=11 // pred_check
        %p150 = pneg %p101
      $region18: #{conv_bn_leaky.3} parent=11 // pred_check_branch
        %152 = sbr.rel (%p150) target = $region20
      $region19: #{conv_bn_leaky.3} parent=11 // pred_region
        %p153 = scmp.lt.s32.totalorder %s19, 0
        %s154 = scalar_select %p153, %s19, 0
        %s155 = scalar_lea.vmem %s2, %s154
      $region20: #{conv_bn_leaky.3} parent=11 // pred_fallthru
        _
    $region12: #{conv_bn_leaky.3} parent=5 // pred_fallthru
      _
    %p156 = scmp.lt.s32.totalorder %s9, 8
    // Predicated region
    $region21: #{conv_bn_leaky.3} parent=5 // pred_check
      %p157 = pneg %p156
    $region22: #{conv_bn_leaky.3} parent=5 // pred_check_branch
      %159 = sbr.rel (%p157) target = $region24
    $region23: #{conv_bn_leaky.3} parent=5 // pred_region
      // Predicated region
      $region25: #{conv_bn_leaky.3} parent=23 // pred_check
        %p160 = pneg %p43
      $region26: #{conv_bn_leaky.3} parent=23 // pred_check_branch
        %162 = sbr.rel (%p160) target = $region28
      $region27: #{conv_bn_leaky.3} parent=23 // pred_region
        %s163 = smul.u32 128, %s16
        %p164 = scmp.lt.s32.totalorder %s163, 1023
        %s165 = scalar_select %p164, %s163, 1023
        %p166 = scmp.lt.s32.totalorder %s17, 0
        %s167 = scalar_select %p166, %s17, 0
        %s168 = sadd.s32 %s167, %s165
        %s169 = smul.addr %s168, 8
        %s170 = scalar_lea.vmem %s0, %s169
        %s171 = smul.u32 128, %s16
      $region28: #{conv_bn_leaky.3} parent=23 // pred_fallthru
        _
    $region24: #{conv_bn_leaky.3} parent=5 // pred_fallthru
      _
    %p172 = scmp.le.s32.totalorder 1, %s9
    %p173 = scmp.lt.s32.totalorder %s9, 9
    %p174 = pnand %p172, %p173
    %p175 = pneg %p174
    // Predicated region
    $region29: #{conv_bn_leaky.3} parent=5 // pred_check
      _
    $region30: #{conv_bn_leaky.3} parent=5 // pred_check_branch
      %177 = sbr.rel (%p174) target = $region32
    $region31: #{conv_bn_leaky.3} parent=5 // pred_region
      %s178 = ssub.s32 %s9, 1
      %s179 = smul.u32 128, %s18
      %p180 = scmp.lt.s32.totalorder %s179, 1023
      %s181 = scalar_select %p180, %s179, 1023
      %p182 = scmp.lt.s32.totalorder %s19, 0
      %s183 = scalar_select %p182, %s19, 0
      %s184 = sadd.s32 %s183, %s181
      %s185 = smul.addr %s184, 8
      %s186 = scalar_lea.vmem %s0, %s185
      %p187 = pneg %p49
      %p188 = pneg %p46
      %p189 = scmp.lt.s32.totalorder %s19, 0
      %s190 = scalar_select %p189, %s19, 0
      %s191 = scalar_lea.vmem %s1, %s190
      %p192 = pneg %p75
      %p193 = pneg %p72
      %p194 = scmp.lt.s32.totalorder %s19, 0
      %s195 = scalar_select %p194, %s19, 0
      %s196 = scalar_lea.vmem %s2, %s195
      %p197 = pneg %p101
      %p198 = pneg %p98
      %p199 = pneg %p129
      %p200 = pneg %p126
      %s201 = smul.u32 128, %s18
      %p202 = scmp.lt.s32.totalorder %s201, 1023
      %s203 = scalar_select %p202, %s201, 1023
      %p204 = scmp.lt.s32.totalorder %s19, 0
      %s205 = scalar_select %p204, %s19, 0
      %s206 = sadd.s32 %s205, %s203
      %s207 = smul.addr %s206, 4
      %s208 = scalar_lea.vmem %s3, %s207
      %s209 = smul.u32 128, %s18
      %p210 = scmp.lt.s32.totalorder %s209, 1023
      %s211 = scalar_select %p210, %s209, 1023
      %p212 = scmp.lt.s32.totalorder %s19, 0
      %s213 = scalar_select %p212, %s19, 0
      %s214 = sadd.s32 %s213, %s211
      %s215 = smul.addr %s214, 8
      %s216 = scalar_lea.vmem %s0, %s215
      %s217 = smul.u32 128, %s18
      %p218 = scmp.lt.s32.totalorder %s19, 0
      %s219 = scalar_select %p218, %s19, 0
      %s220 = scalar_lea.vmem %s1, %s219
      %p221 = scmp.lt.s32.totalorder %s19, 0
      %s222 = scalar_select %p221, %s19, 0
      %s223 = scalar_lea.vmem %s2, %s222
      %s224 = smul.u32 128, %s18
      %p225 = scmp.lt.s32.totalorder %s224, 1023
      %s226 = scalar_select %p225, %s224, 1023
      %p227 = scmp.lt.s32.totalorder %s19, 0
      %s228 = scalar_select %p227, %s19, 0
      %s229 = sadd.s32 %s228, %s226
      %s230 = smul.addr %s229, 4
      %s231 = scalar_lea.vmem %s3, %s230
      %s232 = smul.u32 128, %s18
      %v233 = vld [vmem:[%s216] sm:$0xff]
      %v234 = vld [vmem:[%s216 + $0x8] sm:$0xff]
      %v235 = vld [vmem:[%s216 + $0x10] sm:$0xff]
      %v236 = vld [vmem:[%s216 + $0x18] sm:$0xff]
      %v237 = vld [vmem:[%s216 + $0x20] sm:$0xff]
      %v238 = vld [vmem:[%s216 + $0x28] sm:$0xff]
      %v239 = vld [vmem:[%s216 + $0x30] sm:$0xff]
      %v240 = vld [vmem:[%s216 + $0x38] sm:$0xff]
      %v241 = vld [vmem:[%s216 + $0x40] sm:$0xff]
      %v242 = vld [vmem:[%s216 + $0x48] sm:$0xff]
      %v243 = vld [vmem:[%s216 + $0x50] sm:$0xff]
      %v244 = vld [vmem:[%s216 + $0x58] sm:$0xff]
      %v245 = vld [vmem:[%s216 + $0x60] sm:$0xff]
      %v246 = vld [vmem:[%s216 + $0x68] sm:$0xff]
      %v247 = vld [vmem:[%s216 + $0x70] sm:$0xff]
      %v248 = vld [vmem:[%s216 + $0x78] sm:$0xff]
      %v249 = vld [vmem:[%s216 + $0x80] sm:$0xff]
      %v250 = vld [vmem:[%s216 + $0x88] sm:$0xff]
      %v251 = vld [vmem:[%s216 + $0x90] sm:$0xff]
      %v252 = vld [vmem:[%s216 + $0x98] sm:$0xff]
      %v253 = vld [vmem:[%s216 + $0xa0] sm:$0xff]
      %v254 = vld [vmem:[%s216 + $0xa8] sm:$0xff]
      %v255 = vld [vmem:[%s216 + $0xb0] sm:$0xff]
      %v256 = vld [vmem:[%s216 + $0xb8] sm:$0xff]
      %v257 = vld [vmem:[%s216 + $0xc0] sm:$0xff]
      %v258 = vld [vmem:[%s216 + $0xc8] sm:$0xff]
      %v259 = vld [vmem:[%s216 + $0xd0] sm:$0xff]
      %v260 = vld [vmem:[%s216 + $0xd8] sm:$0xff]
      %v261 = vld [vmem:[%s216 + $0xe0] sm:$0xff]
      %v262 = vld [vmem:[%s216 + $0xe8] sm:$0xff]
      %v263 = vld [vmem:[%s216 + $0xf0] sm:$0xff]
      %v264 = vld [vmem:[%s216 + $0xf8] sm:$0xff]
      %v265 = vld [vmem:[%s216 + $0x100] sm:$0xff]
      %v266 = vld [vmem:[%s216 + $0x108] sm:$0xff]
      %v267 = vld [vmem:[%s216 + $0x110] sm:$0xff]
      %v268 = vld [vmem:[%s216 + $0x118] sm:$0xff]
      %v269 = vld [vmem:[%s216 + $0x120] sm:$0xff]
      %v270 = vld [vmem:[%s216 + $0x128] sm:$0xff]
      %v271 = vld [vmem:[%s216 + $0x130] sm:$0xff]
      %v272 = vld [vmem:[%s216 + $0x138] sm:$0xff]
      %v273 = vld [vmem:[%s216 + $0x140] sm:$0xff]
      %v274 = vld [vmem:[%s216 + $0x148] sm:$0xff]
      %v275 = vld [vmem:[%s216 + $0x150] sm:$0xff]
      %v276 = vld [vmem:[%s216 + $0x158] sm:$0xff]
      %v277 = vld [vmem:[%s216 + $0x160] sm:$0xff]
      %v278 = vld [vmem:[%s216 + $0x168] sm:$0xff]
      %v279 = vld [vmem:[%s216 + $0x170] sm:$0xff]
      %v280 = vld [vmem:[%s216 + $0x178] sm:$0xff]
      %v281 = vld [vmem:[%s216 + $0x180] sm:$0xff]
      %v282 = vld [vmem:[%s216 + $0x188] sm:$0xff]
      %v283 = vld [vmem:[%s216 + $0x190] sm:$0xff]
      %v284 = vld [vmem:[%s216 + $0x198] sm:$0xff]
      %v285 = vld [vmem:[%s216 + $0x1a0] sm:$0xff]
      %v286 = vld [vmem:[%s216 + $0x1a8] sm:$0xff]
      %v287 = vld [vmem:[%s216 + $0x1b0] sm:$0xff]
      %v288 = vld [vmem:[%s216 + $0x1b8] sm:$0xff]
      %v289 = vld [vmem:[%s216 + $0x1c0] sm:$0xff]
      %v290 = vld [vmem:[%s216 + $0x1c8] sm:$0xff]
      %v291 = vld [vmem:[%s216 + $0x1d0] sm:$0xff]
      %v292 = vld [vmem:[%s216 + $0x1d8] sm:$0xff]
      %v293 = vld [vmem:[%s216 + $0x1e0] sm:$0xff]
      %v294 = vld [vmem:[%s216 + $0x1e8] sm:$0xff]
      %v295 = vld [vmem:[%s216 + $0x1f0] sm:$0xff]
      %v296 = vld [vmem:[%s216 + $0x1f8] sm:$0xff]
      %v297 = vld [vmem:[%s216 + $0x200] sm:$0xff]
      %v298 = vld [vmem:[%s216 + $0x208] sm:$0xff]
      %v299 = vld [vmem:[%s216 + $0x210] sm:$0xff]
      %v300 = vld [vmem:[%s216 + $0x218] sm:$0xff]
      %v301 = vld [vmem:[%s216 + $0x220] sm:$0xff]
      %v302 = vld [vmem:[%s216 + $0x228] sm:$0xff]
      %v303 = vld [vmem:[%s216 + $0x230] sm:$0xff]
      %v304 = vld [vmem:[%s216 + $0x238] sm:$0xff]
      %v305 = vld [vmem:[%s216 + $0x240] sm:$0xff]
      %v306 = vld [vmem:[%s216 + $0x248] sm:$0xff]
      %v307 = vld [vmem:[%s216 + $0x250] sm:$0xff]
      %v308 = vld [vmem:[%s216 + $0x258] sm:$0xff]
      %v309 = vld [vmem:[%s216 + $0x260] sm:$0xff]
      %v310 = vld [vmem:[%s216 + $0x268] sm:$0xff]
      %v311 = vld [vmem:[%s216 + $0x270] sm:$0xff]
      %v312 = vld [vmem:[%s216 + $0x278] sm:$0xff]
      %v313 = vld [vmem:[%s216 + $0x280] sm:$0xff]
      %v314 = vld [vmem:[%s216 + $0x288] sm:$0xff]
      %v315 = vld [vmem:[%s216 + $0x290] sm:$0xff]
      %v316 = vld [vmem:[%s216 + $0x298] sm:$0xff]
      %v317 = vld [vmem:[%s216 + $0x2a0] sm:$0xff]
      %v318 = vld [vmem:[%s216 + $0x2a8] sm:$0xff]
      %v319 = vld [vmem:[%s216 + $0x2b0] sm:$0xff]
      %v320 = vld [vmem:[%s216 + $0x2b8] sm:$0xff]
      %v321 = vld [vmem:[%s216 + $0x2c0] sm:$0xff]
      %v322 = vld [vmem:[%s216 + $0x2c8] sm:$0xff]
      %v323 = vld [vmem:[%s216 + $0x2d0] sm:$0xff]
      %v324 = vld [vmem:[%s216 + $0x2d8] sm:$0xff]
      %v325 = vld [vmem:[%s216 + $0x2e0] sm:$0xff]
      %v326 = vld [vmem:[%s216 + $0x2e8] sm:$0xff]
      %v327 = vld [vmem:[%s216 + $0x2f0] sm:$0xff]
      %v328 = vld [vmem:[%s216 + $0x2f8] sm:$0xff]
      %v329 = vld [vmem:[%s216 + $0x300] sm:$0xff]
      %v330 = vld [vmem:[%s216 + $0x308] sm:$0xff]
      %v331 = vld [vmem:[%s216 + $0x310] sm:$0xff]
      %v332 = vld [vmem:[%s216 + $0x318] sm:$0xff]
      %v333 = vld [vmem:[%s216 + $0x320] sm:$0xff]
      %v334 = vld [vmem:[%s216 + $0x328] sm:$0xff]
      %v335 = vld [vmem:[%s216 + $0x330] sm:$0xff]
      %v336 = vld [vmem:[%s216 + $0x338] sm:$0xff]
      %v337 = vld [vmem:[%s216 + $0x340] sm:$0xff]
      %v338 = vld [vmem:[%s216 + $0x348] sm:$0xff]
      %v339 = vld [vmem:[%s216 + $0x350] sm:$0xff]
      %v340 = vld [vmem:[%s216 + $0x358] sm:$0xff]
      %v341 = vld [vmem:[%s216 + $0x360] sm:$0xff]
      %v342 = vld [vmem:[%s216 + $0x368] sm:$0xff]
      %v343 = vld [vmem:[%s216 + $0x370] sm:$0xff]
      %v344 = vld [vmem:[%s216 + $0x378] sm:$0xff]
      %v345 = vld [vmem:[%s216 + $0x380] sm:$0xff]
      %v346 = vld [vmem:[%s216 + $0x388] sm:$0xff]
      %v347 = vld [vmem:[%s216 + $0x390] sm:$0xff]
      %v348 = vld [vmem:[%s216 + $0x398] sm:$0xff]
      %v349 = vld [vmem:[%s216 + $0x3a0] sm:$0xff]
      %v350 = vld [vmem:[%s216 + $0x3a8] sm:$0xff]
      %v351 = vld [vmem:[%s216 + $0x3b0] sm:$0xff]
      %v352 = vld [vmem:[%s216 + $0x3b8] sm:$0xff]
      %v353 = vld [vmem:[%s216 + $0x3c0] sm:$0xff]
      %v354 = vld [vmem:[%s216 + $0x3c8] sm:$0xff]
      %v355 = vld [vmem:[%s216 + $0x3d0] sm:$0xff]
      %v356 = vld [vmem:[%s216 + $0x3d8] sm:$0xff]
      %v357 = vld [vmem:[%s216 + $0x3e0] sm:$0xff]
      %v358 = vld [vmem:[%s216 + $0x3e8] sm:$0xff]
      %v359 = vld [vmem:[%s216 + $0x3f0] sm:$0xff]
      %v360 = vld [vmem:[%s216 + $0x3f8] sm:$0xff]
      %v361 = vld [vmem:[%s220] sm:$0x1]
      %v363 = vperm.slane %v361, 0
      %v365 = vmul.f32 %v233, %v363
      %v366 = vmul.f32 %v234, %v363
      %v367 = vmul.f32 %v235, %v363
      %v368 = vmul.f32 %v236, %v363
      %v369 = vmul.f32 %v237, %v363
      %v370 = vmul.f32 %v238, %v363
      %v371 = vmul.f32 %v239, %v363
      %v372 = vmul.f32 %v240, %v363
      %v373 = vmul.f32 %v241, %v363
      %v374 = vmul.f32 %v242, %v363
      %v375 = vmul.f32 %v243, %v363
      %v376 = vmul.f32 %v244, %v363
      %v377 = vmul.f32 %v245, %v363
      %v378 = vmul.f32 %v246, %v363
      %v379 = vmul.f32 %v247, %v363
      %v380 = vmul.f32 %v248, %v363
      %v381 = vmul.f32 %v249, %v363
      %v382 = vmul.f32 %v250, %v363
      %v383 = vmul.f32 %v251, %v363
      %v384 = vmul.f32 %v252, %v363
      %v385 = vmul.f32 %v253, %v363
      %v386 = vmul.f32 %v254, %v363
      %v387 = vmul.f32 %v255, %v363
      %v388 = vmul.f32 %v256, %v363
      %v389 = vmul.f32 %v257, %v363
      %v390 = vmul.f32 %v258, %v363
      %v391 = vmul.f32 %v259, %v363
      %v392 = vmul.f32 %v260, %v363
      %v393 = vmul.f32 %v261, %v363
      %v394 = vmul.f32 %v262, %v363
      %v395 = vmul.f32 %v263, %v363
      %v396 = vmul.f32 %v264, %v363
      %v397 = vmul.f32 %v265, %v363
      %v398 = vmul.f32 %v266, %v363
      %v399 = vmul.f32 %v267, %v363
      %v400 = vmul.f32 %v268, %v363
      %v401 = vmul.f32 %v269, %v363
      %v402 = vmul.f32 %v270, %v363
      %v403 = vmul.f32 %v271, %v363
      %v404 = vmul.f32 %v272, %v363
      %v405 = vmul.f32 %v273, %v363
      %v406 = vmul.f32 %v274, %v363
      %v407 = vmul.f32 %v275, %v363
      %v408 = vmul.f32 %v276, %v363
      %v409 = vmul.f32 %v277, %v363
      %v410 = vmul.f32 %v278, %v363
      %v411 = vmul.f32 %v279, %v363
      %v412 = vmul.f32 %v280, %v363
      %v413 = vmul.f32 %v281, %v363
      %v414 = vmul.f32 %v282, %v363
      %v415 = vmul.f32 %v283, %v363
      %v416 = vmul.f32 %v284, %v363
      %v417 = vmul.f32 %v285, %v363
      %v418 = vmul.f32 %v286, %v363
      %v419 = vmul.f32 %v287, %v363
      %v420 = vmul.f32 %v288, %v363
      %v421 = vmul.f32 %v289, %v363
      %v422 = vmul.f32 %v290, %v363
      %v423 = vmul.f32 %v291, %v363
      %v424 = vmul.f32 %v292, %v363
      %v425 = vmul.f32 %v293, %v363
      %v426 = vmul.f32 %v294, %v363
      %v427 = vmul.f32 %v295, %v363
      %v428 = vmul.f32 %v296, %v363
      %v429 = vmul.f32 %v297, %v363
      %v430 = vmul.f32 %v298, %v363
      %v431 = vmul.f32 %v299, %v363
      %v432 = vmul.f32 %v300, %v363
      %v433 = vmul.f32 %v301, %v363
      %v434 = vmul.f32 %v302, %v363
      %v435 = vmul.f32 %v303, %v363
      %v436 = vmul.f32 %v304, %v363
      %v437 = vmul.f32 %v305, %v363
      %v438 = vmul.f32 %v306, %v363
      %v439 = vmul.f32 %v307, %v363
      %v440 = vmul.f32 %v308, %v363
      %v441 = vmul.f32 %v309, %v363
      %v442 = vmul.f32 %v310, %v363
      %v443 = vmul.f32 %v311, %v363
      %v444 = vmul.f32 %v312, %v363
      %v445 = vmul.f32 %v313, %v363
      %v446 = vmul.f32 %v314, %v363
      %v447 = vmul.f32 %v315, %v363
      %v448 = vmul.f32 %v316, %v363
      %v449 = vmul.f32 %v317, %v363
      %v450 = vmul.f32 %v318, %v363
      %v451 = vmul.f32 %v319, %v363
      %v452 = vmul.f32 %v320, %v363
      %v453 = vmul.f32 %v321, %v363
      %v454 = vmul.f32 %v322, %v363
      %v455 = vmul.f32 %v323, %v363
      %v456 = vmul.f32 %v324, %v363
      %v457 = vmul.f32 %v325, %v363
      %v458 = vmul.f32 %v326, %v363
      %v459 = vmul.f32 %v327, %v363
      %v460 = vmul.f32 %v328, %v363
      %v461 = vmul.f32 %v329, %v363
      %v462 = vmul.f32 %v330, %v363
      %v463 = vmul.f32 %v331, %v363
      %v464 = vmul.f32 %v332, %v363
      %v465 = vmul.f32 %v333, %v363
      %v466 = vmul.f32 %v334, %v363
      %v467 = vmul.f32 %v335, %v363
      %v468 = vmul.f32 %v336, %v363
      %v469 = vmul.f32 %v337, %v363
      %v470 = vmul.f32 %v338, %v363
      %v471 = vmul.f32 %v339, %v363
      %v472 = vmul.f32 %v340, %v363
      %v473 = vmul.f32 %v341, %v363
      %v474 = vmul.f32 %v342, %v363
      %v475 = vmul.f32 %v343, %v363
      %v476 = vmul.f32 %v344, %v363
      %v477 = vmul.f32 %v345, %v363
      %v478 = vmul.f32 %v346, %v363
      %v479 = vmul.f32 %v347, %v363
      %v480 = vmul.f32 %v348, %v363
      %v481 = vmul.f32 %v349, %v363
      %v482 = vmul.f32 %v350, %v363
      %v483 = vmul.f32 %v351, %v363
      %v484 = vmul.f32 %v352, %v363
      %v485 = vmul.f32 %v353, %v363
      %v486 = vmul.f32 %v354, %v363
      %v487 = vmul.f32 %v355, %v363
      %v488 = vmul.f32 %v356, %v363
      %v489 = vmul.f32 %v357, %v363
      %v490 = vmul.f32 %v358, %v363
      %v491 = vmul.f32 %v359, %v363
      %v492 = vmul.f32 %v360, %v363
      %v493 = vld [vmem:[%s223] sm:$0x1]
      %v495 = vperm.slane %v493, 0
      %v497 = vadd.f32 %v365, %v495
      %v498 = vadd.f32 %v366, %v495
      %v499 = vadd.f32 %v367, %v495
      %v500 = vadd.f32 %v368, %v495
      %v501 = vadd.f32 %v369, %v495
      %v502 = vadd.f32 %v370, %v495
      %v503 = vadd.f32 %v371, %v495
      %v504 = vadd.f32 %v372, %v495
      %v505 = vadd.f32 %v373, %v495
      %v506 = vadd.f32 %v374, %v495
      %v507 = vadd.f32 %v375, %v495
      %v508 = vadd.f32 %v376, %v495
      %v509 = vadd.f32 %v377, %v495
      %v510 = vadd.f32 %v378, %v495
      %v511 = vadd.f32 %v379, %v495
      %v512 = vadd.f32 %v380, %v495
      %v513 = vadd.f32 %v381, %v495
      %v514 = vadd.f32 %v382, %v495
      %v515 = vadd.f32 %v383, %v495
      %v516 = vadd.f32 %v384, %v495
      %v517 = vadd.f32 %v385, %v495
      %v518 = vadd.f32 %v386, %v495
      %v519 = vadd.f32 %v387, %v495
      %v520 = vadd.f32 %v388, %v495
      %v521 = vadd.f32 %v389, %v495
      %v522 = vadd.f32 %v390, %v495
      %v523 = vadd.f32 %v391, %v495
      %v524 = vadd.f32 %v392, %v495
      %v525 = vadd.f32 %v393, %v495
      %v526 = vadd.f32 %v394, %v495
      %v527 = vadd.f32 %v395, %v495
      %v528 = vadd.f32 %v396, %v495
      %v529 = vadd.f32 %v397, %v495
      %v530 = vadd.f32 %v398, %v495
      %v531 = vadd.f32 %v399, %v495
      %v532 = vadd.f32 %v400, %v495
      %v533 = vadd.f32 %v401, %v495
      %v534 = vadd.f32 %v402, %v495
      %v535 = vadd.f32 %v403, %v495
      %v536 = vadd.f32 %v404, %v495
      %v537 = vadd.f32 %v405, %v495
      %v538 = vadd.f32 %v406, %v495
      %v539 = vadd.f32 %v407, %v495
      %v540 = vadd.f32 %v408, %v495
      %v541 = vadd.f32 %v409, %v495
      %v542 = vadd.f32 %v410, %v495
      %v543 = vadd.f32 %v411, %v495
      %v544 = vadd.f32 %v412, %v495
      %v545 = vadd.f32 %v413, %v495
      %v546 = vadd.f32 %v414, %v495
      %v547 = vadd.f32 %v415, %v495
      %v548 = vadd.f32 %v416, %v495
      %v549 = vadd.f32 %v417, %v495
      %v550 = vadd.f32 %v418, %v495
      %v551 = vadd.f32 %v419, %v495
      %v552 = vadd.f32 %v420, %v495
      %v553 = vadd.f32 %v421, %v495
      %v554 = vadd.f32 %v422, %v495
      %v555 = vadd.f32 %v423, %v495
      %v556 = vadd.f32 %v424, %v495
      %v557 = vadd.f32 %v425, %v495
      %v558 = vadd.f32 %v426, %v495
      %v559 = vadd.f32 %v427, %v495
      %v560 = vadd.f32 %v428, %v495
      %v561 = vadd.f32 %v429, %v495
      %v562 = vadd.f32 %v430, %v495
      %v563 = vadd.f32 %v431, %v495
      %v564 = vadd.f32 %v432, %v495
      %v565 = vadd.f32 %v433, %v495
      %v566 = vadd.f32 %v434, %v495
      %v567 = vadd.f32 %v435, %v495
      %v568 = vadd.f32 %v436, %v495
      %v569 = vadd.f32 %v437, %v495
      %v570 = vadd.f32 %v438, %v495
      %v571 = vadd.f32 %v439, %v495
      %v572 = vadd.f32 %v440, %v495
      %v573 = vadd.f32 %v441, %v495
      %v574 = vadd.f32 %v442, %v495
      %v575 = vadd.f32 %v443, %v495
      %v576 = vadd.f32 %v444, %v495
      %v577 = vadd.f32 %v445, %v495
      %v578 = vadd.f32 %v446, %v495
      %v579 = vadd.f32 %v447, %v495
      %v580 = vadd.f32 %v448, %v495
      %v581 = vadd.f32 %v449, %v495
      %v582 = vadd.f32 %v450, %v495
      %v583 = vadd.f32 %v451, %v495
      %v584 = vadd.f32 %v452, %v495
      %v585 = vadd.f32 %v453, %v495
      %v586 = vadd.f32 %v454, %v495
      %v587 = vadd.f32 %v455, %v495
      %v588 = vadd.f32 %v456, %v495
      %v589 = vadd.f32 %v457, %v495
      %v590 = vadd.f32 %v458, %v495
      %v591 = vadd.f32 %v459, %v495
      %v592 = vadd.f32 %v460, %v495
      %v593 = vadd.f32 %v461, %v495
      %v594 = vadd.f32 %v462, %v495
      %v595 = vadd.f32 %v463, %v495
      %v596 = vadd.f32 %v464, %v495
      %v597 = vadd.f32 %v465, %v495
      %v598 = vadd.f32 %v466, %v495
      %v599 = vadd.f32 %v467, %v495
      %v600 = vadd.f32 %v468, %v495
      %v601 = vadd.f32 %v469, %v495
      %v602 = vadd.f32 %v470, %v495
      %v603 = vadd.f32 %v471, %v495
      %v604 = vadd.f32 %v472, %v495
      %v605 = vadd.f32 %v473, %v495
      %v606 = vadd.f32 %v474, %v495
      %v607 = vadd.f32 %v475, %v495
      %v608 = vadd.f32 %v476, %v495
      %v609 = vadd.f32 %v477, %v495
      %v610 = vadd.f32 %v478, %v495
      %v611 = vadd.f32 %v479, %v495
      %v612 = vadd.f32 %v480, %v495
      %v613 = vadd.f32 %v481, %v495
      %v614 = vadd.f32 %v482, %v495
      %v615 = vadd.f32 %v483, %v495
      %v616 = vadd.f32 %v484, %v495
      %v617 = vadd.f32 %v485, %v495
      %v618 = vadd.f32 %v486, %v495
      %v619 = vadd.f32 %v487, %v495
      %v620 = vadd.f32 %v488, %v495
      %v621 = vadd.f32 %v489, %v495
      %v622 = vadd.f32 %v490, %v495
      %v623 = vadd.f32 %v491, %v495
      %v624 = vadd.f32 %v492, %v495
      %vm625 = vcmp.ge.f32.partialorder %v497, 0.0
      %vm626 = vcmp.ge.f32.partialorder %v498, 0.0
      %vm627 = vcmp.ge.f32.partialorder %v499, 0.0
      %vm628 = vcmp.ge.f32.partialorder %v500, 0.0
      %vm629 = vcmp.ge.f32.partialorder %v501, 0.0
      %vm630 = vcmp.ge.f32.partialorder %v502, 0.0
      %vm631 = vcmp.ge.f32.partialorder %v503, 0.0
      %vm632 = vcmp.ge.f32.partialorder %v504, 0.0
      %vm633 = vcmp.ge.f32.partialorder %v505, 0.0
      %vm634 = vcmp.ge.f32.partialorder %v506, 0.0
      %vm635 = vcmp.ge.f32.partialorder %v507, 0.0
      %vm636 = vcmp.ge.f32.partialorder %v508, 0.0
      %vm637 = vcmp.ge.f32.partialorder %v509, 0.0
      %vm638 = vcmp.ge.f32.partialorder %v510, 0.0
      %vm639 = vcmp.ge.f32.partialorder %v511, 0.0
      %vm640 = vcmp.ge.f32.partialorder %v512, 0.0
      %vm641 = vcmp.ge.f32.partialorder %v513, 0.0
      %vm642 = vcmp.ge.f32.partialorder %v514, 0.0
      %vm643 = vcmp.ge.f32.partialorder %v515, 0.0
      %vm644 = vcmp.ge.f32.partialorder %v516, 0.0
      %vm645 = vcmp.ge.f32.partialorder %v517, 0.0
      %vm646 = vcmp.ge.f32.partialorder %v518, 0.0
      %vm647 = vcmp.ge.f32.partialorder %v519, 0.0
      %vm648 = vcmp.ge.f32.partialorder %v520, 0.0
      %vm649 = vcmp.ge.f32.partialorder %v521, 0.0
      %vm650 = vcmp.ge.f32.partialorder %v522, 0.0
      %vm651 = vcmp.ge.f32.partialorder %v523, 0.0
      %vm652 = vcmp.ge.f32.partialorder %v524, 0.0
      %vm653 = vcmp.ge.f32.partialorder %v525, 0.0
      %vm654 = vcmp.ge.f32.partialorder %v526, 0.0
      %vm655 = vcmp.ge.f32.partialorder %v527, 0.0
      %vm656 = vcmp.ge.f32.partialorder %v528, 0.0
      %vm657 = vcmp.ge.f32.partialorder %v529, 0.0
      %vm658 = vcmp.ge.f32.partialorder %v530, 0.0
      %vm659 = vcmp.ge.f32.partialorder %v531, 0.0
      %vm660 = vcmp.ge.f32.partialorder %v532, 0.0
      %vm661 = vcmp.ge.f32.partialorder %v533, 0.0
      %vm662 = vcmp.ge.f32.partialorder %v534, 0.0
      %vm663 = vcmp.ge.f32.partialorder %v535, 0.0
      %vm664 = vcmp.ge.f32.partialorder %v536, 0.0
      %vm665 = vcmp.ge.f32.partialorder %v537, 0.0
      %vm666 = vcmp.ge.f32.partialorder %v538, 0.0
      %vm667 = vcmp.ge.f32.partialorder %v539, 0.0
      %vm668 = vcmp.ge.f32.partialorder %v540, 0.0
      %vm669 = vcmp.ge.f32.partialorder %v541, 0.0
      %vm670 = vcmp.ge.f32.partialorder %v542, 0.0
      %vm671 = vcmp.ge.f32.partialorder %v543, 0.0
      %vm672 = vcmp.ge.f32.partialorder %v544, 0.0
      %vm673 = vcmp.ge.f32.partialorder %v545, 0.0
      %vm674 = vcmp.ge.f32.partialorder %v546, 0.0
      %vm675 = vcmp.ge.f32.partialorder %v547, 0.0
      %vm676 = vcmp.ge.f32.partialorder %v548, 0.0
      %vm677 = vcmp.ge.f32.partialorder %v549, 0.0
      %vm678 = vcmp.ge.f32.partialorder %v550, 0.0
      %vm679 = vcmp.ge.f32.partialorder %v551, 0.0
      %vm680 = vcmp.ge.f32.partialorder %v552, 0.0
      %vm681 = vcmp.ge.f32.partialorder %v553, 0.0
      %vm682 = vcmp.ge.f32.partialorder %v554, 0.0
      %vm683 = vcmp.ge.f32.partialorder %v555, 0.0
      %vm684 = vcmp.ge.f32.partialorder %v556, 0.0
      %vm685 = vcmp.ge.f32.partialorder %v557, 0.0
      %vm686 = vcmp.ge.f32.partialorder %v558, 0.0
      %vm687 = vcmp.ge.f32.partialorder %v559, 0.0
      %vm688 = vcmp.ge.f32.partialorder %v560, 0.0
      %vm689 = vcmp.ge.f32.partialorder %v561, 0.0
      %vm690 = vcmp.ge.f32.partialorder %v562, 0.0
      %vm691 = vcmp.ge.f32.partialorder %v563, 0.0
      %vm692 = vcmp.ge.f32.partialorder %v564, 0.0
      %vm693 = vcmp.ge.f32.partialorder %v565, 0.0
      %vm694 = vcmp.ge.f32.partialorder %v566, 0.0
      %vm695 = vcmp.ge.f32.partialorder %v567, 0.0
      %vm696 = vcmp.ge.f32.partialorder %v568, 0.0
      %vm697 = vcmp.ge.f32.partialorder %v569, 0.0
      %vm698 = vcmp.ge.f32.partialorder %v570, 0.0
      %vm699 = vcmp.ge.f32.partialorder %v571, 0.0
      %vm700 = vcmp.ge.f32.partialorder %v572, 0.0
      %vm701 = vcmp.ge.f32.partialorder %v573, 0.0
      %vm702 = vcmp.ge.f32.partialorder %v574, 0.0
      %vm703 = vcmp.ge.f32.partialorder %v575, 0.0
      %vm704 = vcmp.ge.f32.partialorder %v576, 0.0
      %vm705 = vcmp.ge.f32.partialorder %v577, 0.0
      %vm706 = vcmp.ge.f32.partialorder %v578, 0.0
      %vm707 = vcmp.ge.f32.partialorder %v579, 0.0
      %vm708 = vcmp.ge.f32.partialorder %v580, 0.0
      %vm709 = vcmp.ge.f32.partialorder %v581, 0.0
      %vm710 = vcmp.ge.f32.partialorder %v582, 0.0
      %vm711 = vcmp.ge.f32.partialorder %v583, 0.0
      %vm712 = vcmp.ge.f32.partialorder %v584, 0.0
      %vm713 = vcmp.ge.f32.partialorder %v585, 0.0
      %vm714 = vcmp.ge.f32.partialorder %v586, 0.0
      %vm715 = vcmp.ge.f32.partialorder %v587, 0.0
      %vm716 = vcmp.ge.f32.partialorder %v588, 0.0
      %vm717 = vcmp.ge.f32.partialorder %v589, 0.0
      %vm718 = vcmp.ge.f32.partialorder %v590, 0.0
      %vm719 = vcmp.ge.f32.partialorder %v591, 0.0
      %vm720 = vcmp.ge.f32.partialorder %v592, 0.0
      %vm721 = vcmp.ge.f32.partialorder %v593, 0.0
      %vm722 = vcmp.ge.f32.partialorder %v594, 0.0
      %vm723 = vcmp.ge.f32.partialorder %v595, 0.0
      %vm724 = vcmp.ge.f32.partialorder %v596, 0.0
      %vm725 = vcmp.ge.f32.partialorder %v597, 0.0
      %vm726 = vcmp.ge.f32.partialorder %v598, 0.0
      %vm727 = vcmp.ge.f32.partialorder %v599, 0.0
      %vm728 = vcmp.ge.f32.partialorder %v600, 0.0
      %vm729 = vcmp.ge.f32.partialorder %v601, 0.0
      %vm730 = vcmp.ge.f32.partialorder %v602, 0.0
      %vm731 = vcmp.ge.f32.partialorder %v603, 0.0
      %vm732 = vcmp.ge.f32.partialorder %v604, 0.0
      %vm733 = vcmp.ge.f32.partialorder %v605, 0.0
      %vm734 = vcmp.ge.f32.partialorder %v606, 0.0
      %vm735 = vcmp.ge.f32.partialorder %v607, 0.0
      %vm736 = vcmp.ge.f32.partialorder %v608, 0.0
      %vm737 = vcmp.ge.f32.partialorder %v609, 0.0
      %vm738 = vcmp.ge.f32.partialorder %v610, 0.0
      %vm739 = vcmp.ge.f32.partialorder %v611, 0.0
      %vm740 = vcmp.ge.f32.partialorder %v612, 0.0
      %vm741 = vcmp.ge.f32.partialorder %v613, 0.0
      %vm742 = vcmp.ge.f32.partialorder %v614, 0.0
      %vm743 = vcmp.ge.f32.partialorder %v615, 0.0
      %vm744 = vcmp.ge.f32.partialorder %v616, 0.0
      %vm745 = vcmp.ge.f32.partialorder %v617, 0.0
      %vm746 = vcmp.ge.f32.partialorder %v618, 0.0
      %vm747 = vcmp.ge.f32.partialorder %v619, 0.0
      %vm748 = vcmp.ge.f32.partialorder %v620, 0.0
      %vm749 = vcmp.ge.f32.partialorder %v621, 0.0
      %vm750 = vcmp.ge.f32.partialorder %v622, 0.0
      %vm751 = vcmp.ge.f32.partialorder %v623, 0.0
      %vm752 = vcmp.ge.f32.partialorder %v624, 0.0
      %v753 = vmul.f32 %v497, 0.1
      %v754 = vmul.f32 %v498, 0.1
      %v755 = vmul.f32 %v499, 0.1
      %v756 = vmul.f32 %v500, 0.1
      %v757 = vmul.f32 %v501, 0.1
      %v758 = vmul.f32 %v502, 0.1
      %v759 = vmul.f32 %v503, 0.1
      %v760 = vmul.f32 %v504, 0.1
      %v761 = vmul.f32 %v505, 0.1
      %v762 = vmul.f32 %v506, 0.1
      %v763 = vmul.f32 %v507, 0.1
      %v764 = vmul.f32 %v508, 0.1
      %v765 = vmul.f32 %v509, 0.1
      %v766 = vmul.f32 %v510, 0.1
      %v767 = vmul.f32 %v511, 0.1
      %v768 = vmul.f32 %v512, 0.1
      %v769 = vmul.f32 %v513, 0.1
      %v770 = vmul.f32 %v514, 0.1
      %v771 = vmul.f32 %v515, 0.1
      %v772 = vmul.f32 %v516, 0.1
      %v773 = vmul.f32 %v517, 0.1
      %v774 = vmul.f32 %v518, 0.1
      %v775 = vmul.f32 %v519, 0.1
      %v776 = vmul.f32 %v520, 0.1
      %v777 = vmul.f32 %v521, 0.1
      %v778 = vmul.f32 %v522, 0.1
      %v779 = vmul.f32 %v523, 0.1
      %v780 = vmul.f32 %v524, 0.1
      %v781 = vmul.f32 %v525, 0.1
      %v782 = vmul.f32 %v526, 0.1
      %v783 = vmul.f32 %v527, 0.1
      %v784 = vmul.f32 %v528, 0.1
      %v785 = vmul.f32 %v529, 0.1
      %v786 = vmul.f32 %v530, 0.1
      %v787 = vmul.f32 %v531, 0.1
      %v788 = vmul.f32 %v532, 0.1
      %v789 = vmul.f32 %v533, 0.1
      %v790 = vmul.f32 %v534, 0.1
      %v791 = vmul.f32 %v535, 0.1
      %v792 = vmul.f32 %v536, 0.1
      %v793 = vmul.f32 %v537, 0.1
      %v794 = vmul.f32 %v538, 0.1
      %v795 = vmul.f32 %v539, 0.1
      %v796 = vmul.f32 %v540, 0.1
      %v797 = vmul.f32 %v541, 0.1
      %v798 = vmul.f32 %v542, 0.1
      %v799 = vmul.f32 %v543, 0.1
      %v800 = vmul.f32 %v544, 0.1
      %v801 = vmul.f32 %v545, 0.1
      %v802 = vmul.f32 %v546, 0.1
      %v803 = vmul.f32 %v547, 0.1
      %v804 = vmul.f32 %v548, 0.1
      %v805 = vmul.f32 %v549, 0.1
      %v806 = vmul.f32 %v550, 0.1
      %v807 = vmul.f32 %v551, 0.1
      %v808 = vmul.f32 %v552, 0.1
      %v809 = vmul.f32 %v553, 0.1
      %v810 = vmul.f32 %v554, 0.1
      %v811 = vmul.f32 %v555, 0.1
      %v812 = vmul.f32 %v556, 0.1
      %v813 = vmul.f32 %v557, 0.1
      %v814 = vmul.f32 %v558, 0.1
      %v815 = vmul.f32 %v559, 0.1
      %v816 = vmul.f32 %v560, 0.1
      %v817 = vmul.f32 %v561, 0.1
      %v818 = vmul.f32 %v562, 0.1
      %v819 = vmul.f32 %v563, 0.1
      %v820 = vmul.f32 %v564, 0.1
      %v821 = vmul.f32 %v565, 0.1
      %v822 = vmul.f32 %v566, 0.1
      %v823 = vmul.f32 %v567, 0.1
      %v824 = vmul.f32 %v568, 0.1
      %v825 = vmul.f32 %v569, 0.1
      %v826 = vmul.f32 %v570, 0.1
      %v827 = vmul.f32 %v571, 0.1
      %v828 = vmul.f32 %v572, 0.1
      %v829 = vmul.f32 %v573, 0.1
      %v830 = vmul.f32 %v574, 0.1
      %v831 = vmul.f32 %v575, 0.1
      %v832 = vmul.f32 %v576, 0.1
      %v833 = vmul.f32 %v577, 0.1
      %v834 = vmul.f32 %v578, 0.1
      %v835 = vmul.f32 %v579, 0.1
      %v836 = vmul.f32 %v580, 0.1
      %v837 = vmul.f32 %v581, 0.1
      %v838 = vmul.f32 %v582, 0.1
      %v839 = vmul.f32 %v583, 0.1
      %v840 = vmul.f32 %v584, 0.1
      %v841 = vmul.f32 %v585, 0.1
      %v842 = vmul.f32 %v586, 0.1
      %v843 = vmul.f32 %v587, 0.1
      %v844 = vmul.f32 %v588, 0.1
      %v845 = vmul.f32 %v589, 0.1
      %v846 = vmul.f32 %v590, 0.1
      %v847 = vmul.f32 %v591, 0.1
      %v848 = vmul.f32 %v592, 0.1
      %v849 = vmul.f32 %v593, 0.1
      %v850 = vmul.f32 %v594, 0.1
      %v851 = vmul.f32 %v595, 0.1
      %v852 = vmul.f32 %v596, 0.1
      %v853 = vmul.f32 %v597, 0.1
      %v854 = vmul.f32 %v598, 0.1
      %v855 = vmul.f32 %v599, 0.1
      %v856 = vmul.f32 %v600, 0.1
      %v857 = vmul.f32 %v601, 0.1
      %v858 = vmul.f32 %v602, 0.1
      %v859 = vmul.f32 %v603, 0.1
      %v860 = vmul.f32 %v604, 0.1
      %v861 = vmul.f32 %v605, 0.1
      %v862 = vmul.f32 %v606, 0.1
      %v863 = vmul.f32 %v607, 0.1
      %v864 = vmul.f32 %v608, 0.1
      %v865 = vmul.f32 %v609, 0.1
      %v866 = vmul.f32 %v610, 0.1
      %v867 = vmul.f32 %v611, 0.1
      %v868 = vmul.f32 %v612, 0.1
      %v869 = vmul.f32 %v613, 0.1
      %v870 = vmul.f32 %v614, 0.1
      %v871 = vmul.f32 %v615, 0.1
      %v872 = vmul.f32 %v616, 0.1
      %v873 = vmul.f32 %v617, 0.1
      %v874 = vmul.f32 %v618, 0.1
      %v875 = vmul.f32 %v619, 0.1
      %v876 = vmul.f32 %v620, 0.1
      %v877 = vmul.f32 %v621, 0.1
      %v878 = vmul.f32 %v622, 0.1
      %v879 = vmul.f32 %v623, 0.1
      %v880 = vmul.f32 %v624, 0.1
      %v881 = vsel %vm625, %v497, %v753
      %v882 = vsel %vm626, %v498, %v754
      %v883 = vsel %vm627, %v499, %v755
      %v884 = vsel %vm628, %v500, %v756
      %v885 = vsel %vm629, %v501, %v757
      %v886 = vsel %vm630, %v502, %v758
      %v887 = vsel %vm631, %v503, %v759
      %v888 = vsel %vm632, %v504, %v760
      %v889 = vsel %vm633, %v505, %v761
      %v890 = vsel %vm634, %v506, %v762
      %v891 = vsel %vm635, %v507, %v763
      %v892 = vsel %vm636, %v508, %v764
      %v893 = vsel %vm637, %v509, %v765
      %v894 = vsel %vm638, %v510, %v766
      %v895 = vsel %vm639, %v511, %v767
      %v896 = vsel %vm640, %v512, %v768
      %v897 = vsel %vm641, %v513, %v769
      %v898 = vsel %vm642, %v514, %v770
      %v899 = vsel %vm643, %v515, %v771
      %v900 = vsel %vm644, %v516, %v772
      %v901 = vsel %vm645, %v517, %v773
      %v902 = vsel %vm646, %v518, %v774
      %v903 = vsel %vm647, %v519, %v775
      %v904 = vsel %vm648, %v520, %v776
      %v905 = vsel %vm649, %v521, %v777
      %v906 = vsel %vm650, %v522, %v778
      %v907 = vsel %vm651, %v523, %v779
      %v908 = vsel %vm652, %v524, %v780
      %v909 = vsel %vm653, %v525, %v781
      %v910 = vsel %vm654, %v526, %v782
      %v911 = vsel %vm655, %v527, %v783
      %v912 = vsel %vm656, %v528, %v784
      %v913 = vsel %vm657, %v529, %v785
      %v914 = vsel %vm658, %v530, %v786
      %v915 = vsel %vm659, %v531, %v787
      %v916 = vsel %vm660, %v532, %v788
      %v917 = vsel %vm661, %v533, %v789
      %v918 = vsel %vm662, %v534, %v790
      %v919 = vsel %vm663, %v535, %v791
      %v920 = vsel %vm664, %v536, %v792
      %v921 = vsel %vm665, %v537, %v793
      %v922 = vsel %vm666, %v538, %v794
      %v923 = vsel %vm667, %v539, %v795
      %v924 = vsel %vm668, %v540, %v796
      %v925 = vsel %vm669, %v541, %v797
      %v926 = vsel %vm670, %v542, %v798
      %v927 = vsel %vm671, %v543, %v799
      %v928 = vsel %vm672, %v544, %v800
      %v929 = vsel %vm673, %v545, %v801
      %v930 = vsel %vm674, %v546, %v802
      %v931 = vsel %vm675, %v547, %v803
      %v932 = vsel %vm676, %v548, %v804
      %v933 = vsel %vm677, %v549, %v805
      %v934 = vsel %vm678, %v550, %v806
      %v935 = vsel %vm679, %v551, %v807
      %v936 = vsel %vm680, %v552, %v808
      %v937 = vsel %vm681, %v553, %v809
      %v938 = vsel %vm682, %v554, %v810
      %v939 = vsel %vm683, %v555, %v811
      %v940 = vsel %vm684, %v556, %v812
      %v941 = vsel %vm685, %v557, %v813
      %v942 = vsel %vm686, %v558, %v814
      %v943 = vsel %vm687, %v559, %v815
      %v944 = vsel %vm688, %v560, %v816
      %v945 = vsel %vm689, %v561, %v817
      %v946 = vsel %vm690, %v562, %v818
      %v947 = vsel %vm691, %v563, %v819
      %v948 = vsel %vm692, %v564, %v820
      %v949 = vsel %vm693, %v565, %v821
      %v950 = vsel %vm694, %v566, %v822
      %v951 = vsel %vm695, %v567, %v823
      %v952 = vsel %vm696, %v568, %v824
      %v953 = vsel %vm697, %v569, %v825
      %v954 = vsel %vm698, %v570, %v826
      %v955 = vsel %vm699, %v571, %v827
      %v956 = vsel %vm700, %v572, %v828
      %v957 = vsel %vm701, %v573, %v829
      %v958 = vsel %vm702, %v574, %v830
      %v959 = vsel %vm703, %v575, %v831
      %v960 = vsel %vm704, %v576, %v832
      %v961 = vsel %vm705, %v577, %v833
      %v962 = vsel %vm706, %v578, %v834
      %v963 = vsel %vm707, %v579, %v835
      %v964 = vsel %vm708, %v580, %v836
      %v965 = vsel %vm709, %v581, %v837
      %v966 = vsel %vm710, %v582, %v838
      %v967 = vsel %vm711, %v583, %v839
      %v968 = vsel %vm712, %v584, %v840
      %v969 = vsel %vm713, %v585, %v841
      %v970 = vsel %vm714, %v586, %v842
      %v971 = vsel %vm715, %v587, %v843
      %v972 = vsel %vm716, %v588, %v844
      %v973 = vsel %vm717, %v589, %v845
      %v974 = vsel %vm718, %v590, %v846
      %v975 = vsel %vm719, %v591, %v847
      %v976 = vsel %vm720, %v592, %v848
      %v977 = vsel %vm721, %v593, %v849
      %v978 = vsel %vm722, %v594, %v850
      %v979 = vsel %vm723, %v595, %v851
      %v980 = vsel %vm724, %v596, %v852
      %v981 = vsel %vm725, %v597, %v853
      %v982 = vsel %vm726, %v598, %v854
      %v983 = vsel %vm727, %v599, %v855
      %v984 = vsel %vm728, %v600, %v856
      %v985 = vsel %vm729, %v601, %v857
      %v986 = vsel %vm730, %v602, %v858
      %v987 = vsel %vm731, %v603, %v859
      %v988 = vsel %vm732, %v604, %v860
      %v989 = vsel %vm733, %v605, %v861
      %v990 = vsel %vm734, %v606, %v862
      %v991 = vsel %vm735, %v607, %v863
      %v992 = vsel %vm736, %v608, %v864
      %v993 = vsel %vm737, %v609, %v865
      %v994 = vsel %vm738, %v610, %v866
      %v995 = vsel %vm739, %v611, %v867
      %v996 = vsel %vm740, %v612, %v868
      %v997 = vsel %vm741, %v613, %v869
      %v998 = vsel %vm742, %v614, %v870
      %v999 = vsel %vm743, %v615, %v871
      %v1000 = vsel %vm744, %v616, %v872
      %v1001 = vsel %vm745, %v617, %v873
      %v1002 = vsel %vm746, %v618, %v874
      %v1003 = vsel %vm747, %v619, %v875
      %v1004 = vsel %vm748, %v620, %v876
      %v1005 = vsel %vm749, %v621, %v877
      %v1006 = vsel %vm750, %v622, %v878
      %v1007 = vsel %vm751, %v623, %v879
      %v1008 = vsel %vm752, %v624, %v880
      %v1009 = vpack.c.bf16 %v881, %v881
      %v1010 = vpack.c.bf16 %v882, %v882
      %v1011 = vpack.c.bf16 %v883, %v883
      %v1012 = vpack.c.bf16 %v884, %v884
      %v1013 = vpack.c.bf16 %v885, %v885
      %v1014 = vpack.c.bf16 %v886, %v886
      %v1015 = vpack.c.bf16 %v887, %v887
      %v1016 = vpack.c.bf16 %v888, %v888
      %v1017 = vpack.c.bf16 %v889, %v889
      %v1018 = vpack.c.bf16 %v890, %v890
      %v1019 = vpack.c.bf16 %v891, %v891
      %v1020 = vpack.c.bf16 %v892, %v892
      %v1021 = vpack.c.bf16 %v893, %v893
      %v1022 = vpack.c.bf16 %v894, %v894
      %v1023 = vpack.c.bf16 %v895, %v895
      %v1024 = vpack.c.bf16 %v896, %v896
      %v1025 = vpack.c.bf16 %v897, %v897
      %v1026 = vpack.c.bf16 %v898, %v898
      %v1027 = vpack.c.bf16 %v899, %v899
      %v1028 = vpack.c.bf16 %v900, %v900
      %v1029 = vpack.c.bf16 %v901, %v901
      %v1030 = vpack.c.bf16 %v902, %v902
      %v1031 = vpack.c.bf16 %v903, %v903
      %v1032 = vpack.c.bf16 %v904, %v904
      %v1033 = vpack.c.bf16 %v905, %v905
      %v1034 = vpack.c.bf16 %v906, %v906
      %v1035 = vpack.c.bf16 %v907, %v907
      %v1036 = vpack.c.bf16 %v908, %v908
      %v1037 = vpack.c.bf16 %v909, %v909
      %v1038 = vpack.c.bf16 %v910, %v910
      %v1039 = vpack.c.bf16 %v911, %v911
      %v1040 = vpack.c.bf16 %v912, %v912
      %v1041 = vpack.c.bf16 %v913, %v913
      %v1042 = vpack.c.bf16 %v914, %v914
      %v1043 = vpack.c.bf16 %v915, %v915
      %v1044 = vpack.c.bf16 %v916, %v916
      %v1045 = vpack.c.bf16 %v917, %v917
      %v1046 = vpack.c.bf16 %v918, %v918
      %v1047 = vpack.c.bf16 %v919, %v919
      %v1048 = vpack.c.bf16 %v920, %v920
      %v1049 = vpack.c.bf16 %v921, %v921
      %v1050 = vpack.c.bf16 %v922, %v922
      %v1051 = vpack.c.bf16 %v923, %v923
      %v1052 = vpack.c.bf16 %v924, %v924
      %v1053 = vpack.c.bf16 %v925, %v925
      %v1054 = vpack.c.bf16 %v926, %v926
      %v1055 = vpack.c.bf16 %v927, %v927
      %v1056 = vpack.c.bf16 %v928, %v928
      %v1057 = vpack.c.bf16 %v929, %v929
      %v1058 = vpack.c.bf16 %v930, %v930
      %v1059 = vpack.c.bf16 %v931, %v931
      %v1060 = vpack.c.bf16 %v932, %v932
      %v1061 = vpack.c.bf16 %v933, %v933
      %v1062 = vpack.c.bf16 %v934, %v934
      %v1063 = vpack.c.bf16 %v935, %v935
      %v1064 = vpack.c.bf16 %v936, %v936
      %v1065 = vpack.c.bf16 %v937, %v937
      %v1066 = vpack.c.bf16 %v938, %v938
      %v1067 = vpack.c.bf16 %v939, %v939
      %v1068 = vpack.c.bf16 %v940, %v940
      %v1069 = vpack.c.bf16 %v941, %v941
      %v1070 = vpack.c.bf16 %v942, %v942
      %v1071 = vpack.c.bf16 %v943, %v943
      %v1072 = vpack.c.bf16 %v944, %v944
      %v1073 = vpack.c.bf16 %v945, %v945
      %v1074 = vpack.c.bf16 %v946, %v946
      %v1075 = vpack.c.bf16 %v947, %v947
      %v1076 = vpack.c.bf16 %v948, %v948
      %v1077 = vpack.c.bf16 %v949, %v949
      %v1078 = vpack.c.bf16 %v950, %v950
      %v1079 = vpack.c.bf16 %v951, %v951
      %v1080 = vpack.c.bf16 %v952, %v952
      %v1081 = vpack.c.bf16 %v953, %v953
      %v1082 = vpack.c.bf16 %v954, %v954
      %v1083 = vpack.c.bf16 %v955, %v955
      %v1084 = vpack.c.bf16 %v956, %v956
      %v1085 = vpack.c.bf16 %v957, %v957
      %v1086 = vpack.c.bf16 %v958, %v958
      %v1087 = vpack.c.bf16 %v959, %v959
      %v1088 = vpack.c.bf16 %v960, %v960
      %v1089 = vpack.c.bf16 %v961, %v961
      %v1090 = vpack.c.bf16 %v962, %v962
      %v1091 = vpack.c.bf16 %v963, %v963
      %v1092 = vpack.c.bf16 %v964, %v964
      %v1093 = vpack.c.bf16 %v965, %v965
      %v1094 = vpack.c.bf16 %v966, %v966
      %v1095 = vpack.c.bf16 %v967, %v967
      %v1096 = vpack.c.bf16 %v968, %v968
      %v1097 = vpack.c.bf16 %v969, %v969
      %v1098 = vpack.c.bf16 %v970, %v970
      %v1099 = vpack.c.bf16 %v971, %v971
      %v1100 = vpack.c.bf16 %v972, %v972
      %v1101 = vpack.c.bf16 %v973, %v973
      %v1102 = vpack.c.bf16 %v974, %v974
      %v1103 = vpack.c.bf16 %v975, %v975
      %v1104 = vpack.c.bf16 %v976, %v976
      %v1105 = vpack.c.bf16 %v977, %v977
      %v1106 = vpack.c.bf16 %v978, %v978
      %v1107 = vpack.c.bf16 %v979, %v979
      %v1108 = vpack.c.bf16 %v980, %v980
      %v1109 = vpack.c.bf16 %v981, %v981
      %v1110 = vpack.c.bf16 %v982, %v982
      %v1111 = vpack.c.bf16 %v983, %v983
      %v1112 = vpack.c.bf16 %v984, %v984
      %v1113 = vpack.c.bf16 %v985, %v985
      %v1114 = vpack.c.bf16 %v986, %v986
      %v1115 = vpack.c.bf16 %v987, %v987
      %v1116 = vpack.c.bf16 %v988, %v988
      %v1117 = vpack.c.bf16 %v989, %v989
      %v1118 = vpack.c.bf16 %v990, %v990
      %v1119 = vpack.c.bf16 %v991, %v991
      %v1120 = vpack.c.bf16 %v992, %v992
      %v1121 = vpack.c.bf16 %v993, %v993
      %v1122 = vpack.c.bf16 %v994, %v994
      %v1123 = vpack.c.bf16 %v995, %v995
      %v1124 = vpack.c.bf16 %v996, %v996
      %v1125 = vpack.c.bf16 %v997, %v997
      %v1126 = vpack.c.bf16 %v998, %v998
      %v1127 = vpack.c.bf16 %v999, %v999
      %v1128 = vpack.c.bf16 %v1000, %v1000
      %v1129 = vpack.c.bf16 %v1001, %v1001
      %v1130 = vpack.c.bf16 %v1002, %v1002
      %v1131 = vpack.c.bf16 %v1003, %v1003
      %v1132 = vpack.c.bf16 %v1004, %v1004
      %v1133 = vpack.c.bf16 %v1005, %v1005
      %v1134 = vpack.c.bf16 %v1006, %v1006
      %v1135 = vpack.c.bf16 %v1007, %v1007
      %v1136 = vpack.c.bf16 %v1008, %v1008
      %vm1137 = vcmask 257024
      %1138 = vst.msk [vmem:[%s231] sm:$0xf] %vm1137, %v1009
      %1139 = vst.msk [vmem:[%s231 + $0x4] sm:$0xf] %vm1137, %v1010
      %1140 = vst.msk [vmem:[%s231 + $0x8] sm:$0xf] %vm1137, %v1011
      %1141 = vst.msk [vmem:[%s231 + $0xc] sm:$0xf] %vm1137, %v1012
      %1142 = vst.msk [vmem:[%s231 + $0x10] sm:$0xf] %vm1137, %v1013
      %1143 = vst.msk [vmem:[%s231 + $0x14] sm:$0xf] %vm1137, %v1014
      %1144 = vst.msk [vmem:[%s231 + $0x18] sm:$0xf] %vm1137, %v1015
      %1145 = vst.msk [vmem:[%s231 + $0x1c] sm:$0xf] %vm1137, %v1016
      %1146 = vst.msk [vmem:[%s231 + $0x20] sm:$0xf] %vm1137, %v1017
      %1147 = vst.msk [vmem:[%s231 + $0x24] sm:$0xf] %vm1137, %v1018
      %1148 = vst.msk [vmem:[%s231 + $0x28] sm:$0xf] %vm1137, %v1019
      %1149 = vst.msk [vmem:[%s231 + $0x2c] sm:$0xf] %vm1137, %v1020
      %1150 = vst.msk [vmem:[%s231 + $0x30] sm:$0xf] %vm1137, %v1021
      %1151 = vst.msk [vmem:[%s231 + $0x34] sm:$0xf] %vm1137, %v1022
      %1152 = vst.msk [vmem:[%s231 + $0x38] sm:$0xf] %vm1137, %v1023
      %1153 = vst.msk [vmem:[%s231 + $0x3c] sm:$0xf] %vm1137, %v1024
      %1154 = vst.msk [vmem:[%s231 + $0x40] sm:$0xf] %vm1137, %v1025
      %1155 = vst.msk [vmem:[%s231 + $0x44] sm:$0xf] %vm1137, %v1026
      %1156 = vst.msk [vmem:[%s231 + $0x48] sm:$0xf] %vm1137, %v1027
      %1157 = vst.msk [vmem:[%s231 + $0x4c] sm:$0xf] %vm1137, %v1028
      %1158 = vst.msk [vmem:[%s231 + $0x50] sm:$0xf] %vm1137, %v1029
      %1159 = vst.msk [vmem:[%s231 + $0x54] sm:$0xf] %vm1137, %v1030
      %1160 = vst.msk [vmem:[%s231 + $0x58] sm:$0xf] %vm1137, %v1031
      %1161 = vst.msk [vmem:[%s231 + $0x5c] sm:$0xf] %vm1137, %v1032
      %1162 = vst.msk [vmem:[%s231 + $0x60] sm:$0xf] %vm1137, %v1033
      %1163 = vst.msk [vmem:[%s231 + $0x64] sm:$0xf] %vm1137, %v1034
      %1164 = vst.msk [vmem:[%s231 + $0x68] sm:$0xf] %vm1137, %v1035
      %1165 = vst.msk [vmem:[%s231 + $0x6c] sm:$0xf] %vm1137, %v1036
      %1166 = vst.msk [vmem:[%s231 + $0x70] sm:$0xf] %vm1137, %v1037
      %1167 = vst.msk [vmem:[%s231 + $0x74] sm:$0xf] %vm1137, %v1038
      %1168 = vst.msk [vmem:[%s231 + $0x78] sm:$0xf] %vm1137, %v1039
      %1169 = vst.msk [vmem:[%s231 + $0x7c] sm:$0xf] %vm1137, %v1040
      %1170 = vst.msk [vmem:[%s231 + $0x80] sm:$0xf] %vm1137, %v1041
      %1171 = vst.msk [vmem:[%s231 + $0x84] sm:$0xf] %vm1137, %v1042
      %1172 = vst.msk [vmem:[%s231 + $0x88] sm:$0xf] %vm1137, %v1043
      %1173 = vst.msk [vmem:[%s231 + $0x8c] sm:$0xf] %vm1137, %v1044
      %1174 = vst.msk [vmem:[%s231 + $0x90] sm:$0xf] %vm1137, %v1045
      %1175 = vst.msk [vmem:[%s231 + $0x94] sm:$0xf] %vm1137, %v1046
      %1176 = vst.msk [vmem:[%s231 + $0x98] sm:$0xf] %vm1137, %v1047
      %1177 = vst.msk [vmem:[%s231 + $0x9c] sm:$0xf] %vm1137, %v1048
      %1178 = vst.msk [vmem:[%s231 + $0xa0] sm:$0xf] %vm1137, %v1049
      %1179 = vst.msk [vmem:[%s231 + $0xa4] sm:$0xf] %vm1137, %v1050
      %1180 = vst.msk [vmem:[%s231 + $0xa8] sm:$0xf] %vm1137, %v1051
      %1181 = vst.msk [vmem:[%s231 + $0xac] sm:$0xf] %vm1137, %v1052
      %1182 = vst.msk [vmem:[%s231 + $0xb0] sm:$0xf] %vm1137, %v1053
      %1183 = vst.msk [vmem:[%s231 + $0xb4] sm:$0xf] %vm1137, %v1054
      %1184 = vst.msk [vmem:[%s231 + $0xb8] sm:$0xf] %vm1137, %v1055
      %1185 = vst.msk [vmem:[%s231 + $0xbc] sm:$0xf] %vm1137, %v1056
      %1186 = vst.msk [vmem:[%s231 + $0xc0] sm:$0xf] %vm1137, %v1057
      %1187 = vst.msk [vmem:[%s231 + $0xc4] sm:$0xf] %vm1137, %v1058
      %1188 = vst.msk [vmem:[%s231 + $0xc8] sm:$0xf] %vm1137, %v1059
      %1189 = vst.msk [vmem:[%s231 + $0xcc] sm:$0xf] %vm1137, %v1060
      %1190 = vst.msk [vmem:[%s231 + $0xd0] sm:$0xf] %vm1137, %v1061
      %1191 = vst.msk [vmem:[%s231 + $0xd4] sm:$0xf] %vm1137, %v1062
      %1192 = vst.msk [vmem:[%s231 + $0xd8] sm:$0xf] %vm1137, %v1063
      %1193 = vst.msk [vmem:[%s231 + $0xdc] sm:$0xf] %vm1137, %v1064
      %1194 = vst.msk [vmem:[%s231 + $0xe0] sm:$0xf] %vm1137, %v1065
      %1195 = vst.msk [vmem:[%s231 + $0xe4] sm:$0xf] %vm1137, %v1066
      %1196 = vst.msk [vmem:[%s231 + $0xe8] sm:$0xf] %vm1137, %v1067
      %1197 = vst.msk [vmem:[%s231 + $0xec] sm:$0xf] %vm1137, %v1068
      %1198 = vst.msk [vmem:[%s231 + $0xf0] sm:$0xf] %vm1137, %v1069
      %1199 = vst.msk [vmem:[%s231 + $0xf4] sm:$0xf] %vm1137, %v1070
      %1200 = vst.msk [vmem:[%s231 + $0xf8] sm:$0xf] %vm1137, %v1071
      %1201 = vst.msk [vmem:[%s231 + $0xfc] sm:$0xf] %vm1137, %v1072
      %1202 = vst.msk [vmem:[%s231 + $0x100] sm:$0xf] %vm1137, %v1073
      %1203 = vst.msk [vmem:[%s231 + $0x104] sm:$0xf] %vm1137, %v1074
      %1204 = vst.msk [vmem:[%s231 + $0x108] sm:$0xf] %vm1137, %v1075
      %1205 = vst.msk [vmem:[%s231 + $0x10c] sm:$0xf] %vm1137, %v1076
      %1206 = vst.msk [vmem:[%s231 + $0x110] sm:$0xf] %vm1137, %v1077
      %1207 = vst.msk [vmem:[%s231 + $0x114] sm:$0xf] %vm1137, %v1078
      %1208 = vst.msk [vmem:[%s231 + $0x118] sm:$0xf] %vm1137, %v1079
      %1209 = vst.msk [vmem:[%s231 + $0x11c] sm:$0xf] %vm1137, %v1080
      %1210 = vst.msk [vmem:[%s231 + $0x120] sm:$0xf] %vm1137, %v1081
      %1211 = vst.msk [vmem:[%s231 + $0x124] sm:$0xf] %vm1137, %v1082
      %1212 = vst.msk [vmem:[%s231 + $0x128] sm:$0xf] %vm1137, %v1083
      %1213 = vst.msk [vmem:[%s231 + $0x12c] sm:$0xf] %vm1137, %v1084
      %1214 = vst.msk [vmem:[%s231 + $0x130] sm:$0xf] %vm1137, %v1085
      %1215 = vst.msk [vmem:[%s231 + $0x134] sm:$0xf] %vm1137, %v1086
      %1216 = vst.msk [vmem:[%s231 + $0x138] sm:$0xf] %vm1137, %v1087
      %1217 = vst.msk [vmem:[%s231 + $0x13c] sm:$0xf] %vm1137, %v1088
      %1218 = vst.msk [vmem:[%s231 + $0x140] sm:$0xf] %vm1137, %v1089
      %1219 = vst.msk [vmem:[%s231 + $0x144] sm:$0xf] %vm1137, %v1090
      %1220 = vst.msk [vmem:[%s231 + $0x148] sm:$0xf] %vm1137, %v1091
      %1221 = vst.msk [vmem:[%s231 + $0x14c] sm:$0xf] %vm1137, %v1092
      %1222 = vst.msk [vmem:[%s231 + $0x150] sm:$0xf] %vm1137, %v1093
      %1223 = vst.msk [vmem:[%s231 + $0x154] sm:$0xf] %vm1137, %v1094
      %1224 = vst.msk [vmem:[%s231 + $0x158] sm:$0xf] %vm1137, %v1095
      %1225 = vst.msk [vmem:[%s231 + $0x15c] sm:$0xf] %vm1137, %v1096
      %1226 = vst.msk [vmem:[%s231 + $0x160] sm:$0xf] %vm1137, %v1097
      %1227 = vst.msk [vmem:[%s231 + $0x164] sm:$0xf] %vm1137, %v1098
      %1228 = vst.msk [vmem:[%s231 + $0x168] sm:$0xf] %vm1137, %v1099
      %1229 = vst.msk [vmem:[%s231 + $0x16c] sm:$0xf] %vm1137, %v1100
      %1230 = vst.msk [vmem:[%s231 + $0x170] sm:$0xf] %vm1137, %v1101
      %1231 = vst.msk [vmem:[%s231 + $0x174] sm:$0xf] %vm1137, %v1102
      %1232 = vst.msk [vmem:[%s231 + $0x178] sm:$0xf] %vm1137, %v1103
      %1233 = vst.msk [vmem:[%s231 + $0x17c] sm:$0xf] %vm1137, %v1104
      %1234 = vst.msk [vmem:[%s231 + $0x180] sm:$0xf] %vm1137, %v1105
      %1235 = vst.msk [vmem:[%s231 + $0x184] sm:$0xf] %vm1137, %v1106
      %1236 = vst.msk [vmem:[%s231 + $0x188] sm:$0xf] %vm1137, %v1107
      %1237 = vst.msk [vmem:[%s231 + $0x18c] sm:$0xf] %vm1137, %v1108
      %1238 = vst.msk [vmem:[%s231 + $0x190] sm:$0xf] %vm1137, %v1109
      %1239 = vst.msk [vmem:[%s231 + $0x194] sm:$0xf] %vm1137, %v1110
      %1240 = vst.msk [vmem:[%s231 + $0x198] sm:$0xf] %vm1137, %v1111
      %1241 = vst.msk [vmem:[%s231 + $0x19c] sm:$0xf] %vm1137, %v1112
      %1242 = vst.msk [vmem:[%s231 + $0x1a0] sm:$0xf] %vm1137, %v1113
      %1243 = vst.msk [vmem:[%s231 + $0x1a4] sm:$0xf] %vm1137, %v1114
      %1244 = vst.msk [vmem:[%s231 + $0x1a8] sm:$0xf] %vm1137, %v1115
      %1245 = vst.msk [vmem:[%s231 + $0x1ac] sm:$0xf] %vm1137, %v1116
      %1246 = vst.msk [vmem:[%s231 + $0x1b0] sm:$0xf] %vm1137, %v1117
      %1247 = vst.msk [vmem:[%s231 + $0x1b4] sm:$0xf] %vm1137, %v1118
      %1248 = vst.msk [vmem:[%s231 + $0x1b8] sm:$0xf] %vm1137, %v1119
      %1249 = vst.msk [vmem:[%s231 + $0x1bc] sm:$0xf] %vm1137, %v1120
      %1250 = vst.msk [vmem:[%s231 + $0x1c0] sm:$0xf] %vm1137, %v1121
      %1251 = vst.msk [vmem:[%s231 + $0x1c4] sm:$0xf] %vm1137, %v1122
      %1252 = vst.msk [vmem:[%s231 + $0x1c8] sm:$0xf] %vm1137, %v1123
      %1253 = vst.msk [vmem:[%s231 + $0x1cc] sm:$0xf] %vm1137, %v1124
      %1254 = vst.msk [vmem:[%s231 + $0x1d0] sm:$0xf] %vm1137, %v1125
      %1255 = vst.msk [vmem:[%s231 + $0x1d4] sm:$0xf] %vm1137, %v1126
      %1256 = vst.msk [vmem:[%s231 + $0x1d8] sm:$0xf] %vm1137, %v1127
      %1257 = vst.msk [vmem:[%s231 + $0x1dc] sm:$0xf] %vm1137, %v1128
      %1258 = vst.msk [vmem:[%s231 + $0x1e0] sm:$0xf] %vm1137, %v1129
      %1259 = vst.msk [vmem:[%s231 + $0x1e4] sm:$0xf] %vm1137, %v1130
      %1260 = vst.msk [vmem:[%s231 + $0x1e8] sm:$0xf] %vm1137, %v1131
      %1261 = vst.msk [vmem:[%s231 + $0x1ec] sm:$0xf] %vm1137, %v1132
      %1262 = vst.msk [vmem:[%s231 + $0x1f0] sm:$0xf] %vm1137, %v1133
      %1263 = vst.msk [vmem:[%s231 + $0x1f4] sm:$0xf] %vm1137, %v1134
      %1264 = vst.msk [vmem:[%s231 + $0x1f8] sm:$0xf] %vm1137, %v1135
      %1265 = vst.msk [vmem:[%s231 + $0x1fc] sm:$0xf] %vm1137, %v1136
      %s1266 = smul.u32 128, %s18
      %p1267 = scmp.lt.s32.totalorder %s1266, 1023
      %s1268 = scalar_select %p1267, %s1266, 1023
      %p1269 = scmp.lt.s32.totalorder %s19, 0
      %s1270 = scalar_select %p1269, %s19, 0
      %s1271 = sadd.s32 %s1270, %s1268
      %s1272 = smul.addr %s1271, 4
      %s1273 = scalar_lea.vmem %s3, %s1272
      // Predicated region
      $region33: #{conv_bn_leaky.3} parent=31 // pred_check
        %p1274 = pneg %p126
      $region34: #{conv_bn_leaky.3} parent=31 // pred_check_branch
        %1276 = sbr.rel (%p1274) target = $region36
      $region35: #{conv_bn_leaky.3} parent=31 // pred_region
        %s1277 = smul.u32 128, %s18
      $region36: #{conv_bn_leaky.3} parent=31 // pred_fallthru
        _
    $region32: #{conv_bn_leaky.3} parent=5 // pred_fallthru
      _
    %p1278 = scmp.le.s32.totalorder 2, %s9
    // Predicated region
    $region37: #{conv_bn_leaky.3} parent=5 // pred_check
      %p1279 = pneg %p1278
    $region38: #{conv_bn_leaky.3} parent=5 // pred_check_branch
      %1281 = sbr.rel (%p1279) target = $region40
    $region39: #{conv_bn_leaky.3} parent=5 // pred_region
      %s1282 = ssub.s32 %s9, 2
      // Predicated region
      $region41: #{conv_bn_leaky.3} parent=39 // pred_check
        %p1283 = pneg %p132
      $region42: #{conv_bn_leaky.3} parent=39 // pred_check_branch
        %1285 = sbr.rel (%p1283) target = $region44
      $region43: #{conv_bn_leaky.3} parent=39 // pred_region
        %s1286 = smul.u32 128, %s20
        %p1287 = scmp.lt.s32.totalorder %s1286, 1023
        %s1288 = scalar_select %p1287, %s1286, 1023
        %p1289 = scmp.lt.s32.totalorder %s21, 0
        %s1290 = scalar_select %p1289, %s21, 0
        %s1291 = sadd.s32 %s1290, %s1288
        %s1292 = smul.addr %s1291, 4
        %s1293 = scalar_lea.vmem %s3, %s1292
      $region44: #{conv_bn_leaky.3} parent=39 // pred_fallthru
        _
    $region40: #{conv_bn_leaky.3} parent=5 // pred_fallthru
      _
  $region6: #{conv_bn_leaky.3} parent=0 // loop_footer
    %s13 = sadd.s32 1, %s9
  $region7: #{conv_bn_leaky.3} parent=0 // loop_footer_branch
    %8 = sbr.rel target = $region3
  $region8: #{conv_bn_leaky.3} parent=0 // loop_exit
    _

// kernel: conv_bn_leaky.2
$region0: #{conv_bn_leaky.2}
  #allocation0 [shape = 'u32[]', space=smem, size = 0x4, offset = 0x4, fixed_abs, tag = 'smem constant byte address 0x4 - core index']
  #allocation1 [shape = 'u32[72,128]{1,0:T(1,128)}', space=vmem, size = 0x9000, scoped, tag = 'internal scratch']
  %s0 = inlined_call_operand.vmem [shape: bf16[8192,27], index: 0, kind: input, shape index: {}]
  %s1 = inlined_call_operand.vmem [shape: bf16[27,32], index: 1, kind: input, shape index: {}]
  %s2 = inlined_call_operand.vmem [shape: f32[8192,32], index: 2, kind: output, shape index: {0}]
  %s3 = inlined_call_operand.vmem [shape: f32[8,2,32], index: 3, kind: output, shape index: {1}]
  %4 = xla_tuple %s2, %s3
  %s5 = sld [smem:[#allocation0]]
  $region49: #{conv_bn_leaky.2} parent=0
    _
  %s7 = ssub.s32 1, %s5
  %s8 = scalar_select 0, %s7, %s5
  loop: start=0, step=1, limit=10
  $region2: #{conv_bn_leaky.2} parent=0 // loop_pre_header
    _
  $region3: #{conv_bn_leaky.2} parent=0 // loop_header
    %s10 = sphi 0, %s14
    %p11 = scmp.ge.s32.totalorder %s10, 10
    %s17 = sphi 0, %s29
    %s18 = sphi 0, %s25
    %s19 = sphi 0, %s17
    %s20 = sphi 0, %s18
    %s21 = sphi 0, %s19
    %s22 = sphi 0, %s20
    %s32 = sphi 0, %s34
    %s35 = sphi 0, %s32
    %s36 = sphi 0, %s35
    %s52 = sphi 0, %s36
    %s58 = sphi 0, %s60
    %s61 = sphi 0, %s58
    %s62 = sphi 0, %s61
    %s78 = sphi 0, %s62
    %s86 = sphi 0, %s88
    %s89 = sphi 0, %s86
    %s90 = sphi 0, %s89
    %s106 = sphi 0, %s90
    %s114 = sphi 0, %s116
    %s117 = sphi 0, %s114
    %s118 = sphi 0, %s117
    %s134 = sphi 0, %s118
  $region4: #{conv_bn_leaky.2} parent=0 // loop_header_branch
    %13 = sbr.rel (%p11) target = $region8
  $region5: #{conv_bn_leaky.2} parent=0 // loop_body
    %s15 = ssub.s32 %s10, 1
    %s16 = ssub.s32 %s10, 2
    %s23 = sadd.s32 1, %s18
    %p24 = scmp.ge.s32.totalorder %s23, 1
    %s25 = scalar_select %p24, 0, %s23
    %s26 = sadd.s32 1, %s17
    %s27 = scalar_select %p24, %s26, %s17
    %p28 = scmp.ge.s32.totalorder %s27, 8
    %s29 = scalar_select %p28, 0, %s27
    %s30 = ssub.s32 %s17, %s29
    %p31 = scmp.eq.s32.totalorder %s30, 0
    %s33 = sadd.s32 %s32, 1
    %s34 = scalar_select %p31, %s32, %s33
    %p37 = pneg %p31
    %p38 = scmp.eq.s32.totalorder %s10, 7
    %p39 = por %p37, %p38
    %p40 = scmp.ne.s32.totalorder %s32, %s35
    %p41 = scmp.eq.s32.totalorder %s10, 0
    %p42 = por %p40, %p41
    %p43 = scmp.ne.s32.totalorder %s32, %s35
    %p44 = scmp.eq.s32.totalorder %s15, 7
    %p45 = por %p43, %p44
    %p46 = scmp.ne.s32.totalorder %s35, %s36
    %p47 = scmp.eq.s32.totalorder %s15, 0
    %p48 = por %p46, %p47
    %p49 = scmp.ne.s32.totalorder %s35, %s36
    %p50 = scmp.eq.s32.totalorder %s16, 7
    %p51 = por %p49, %p50
    %p53 = scmp.ne.s32.totalorder %s36, %s52
    %p54 = scmp.eq.s32.totalorder %s16, 0
    %p55 = por %p53, %p54
    %s56 = ssub.s32 %s18, %s25
    %p57 = scmp.eq.s32.totalorder %s56, 0
    %s59 = sadd.s32 %s58, 1
    %s60 = scalar_select %p57, %s58, %s59
    %p63 = pneg %p57
    %p64 = scmp.eq.s32.totalorder %s10, 7
    %p65 = por %p63, %p64
    %p66 = scmp.ne.s32.totalorder %s58, %s61
    %p67 = scmp.eq.s32.totalorder %s10, 0
    %p68 = por %p66, %p67
    %p69 = scmp.ne.s32.totalorder %s58, %s61
    %p70 = scmp.eq.s32.totalorder %s15, 7
    %p71 = por %p69, %p70
    %p72 = scmp.ne.s32.totalorder %s61, %s62
    %p73 = scmp.eq.s32.totalorder %s15, 0
    %p74 = por %p72, %p73
    %p75 = scmp.ne.s32.totalorder %s61, %s62
    %p76 = scmp.eq.s32.totalorder %s16, 7
    %p77 = por %p75, %p76
    %p79 = scmp.ne.s32.totalorder %s62, %s78
    %p80 = scmp.eq.s32.totalorder %s16, 0
    %p81 = por %p79, %p80
    %s82 = ssub.s32 %s17, %s29
    %s83 = ssub.s32 %s18, %s25
    %s84 = sor.u32 %s82, %s83
    %p85 = scmp.eq.s32.totalorder %s84, 0
    %s87 = sadd.s32 %s86, 1
    %s88 = scalar_select %p85, %s86, %s87
    %p91 = pneg %p85
    %p92 = scmp.eq.s32.totalorder %s10, 7
    %p93 = por %p91, %p92
    %p94 = scmp.ne.s32.totalorder %s86, %s89
    %p95 = scmp.eq.s32.totalorder %s10, 0
    %p96 = por %p94, %p95
    %p97 = scmp.ne.s32.totalorder %s86, %s89
    %p98 = scmp.eq.s32.totalorder %s15, 7
    %p99 = por %p97, %p98
    %p100 = scmp.ne.s32.totalorder %s89, %s90
    %p101 = scmp.eq.s32.totalorder %s15, 0
    %p102 = por %p100, %p101
    %p103 = scmp.ne.s32.totalorder %s89, %s90
    %p104 = scmp.eq.s32.totalorder %s16, 7
    %p105 = por %p103, %p104
    %p107 = scmp.ne.s32.totalorder %s90, %s106
    %p108 = scmp.eq.s32.totalorder %s16, 0
    %p109 = por %p107, %p108
    %s110 = ssub.s32 %s17, %s29
    %s111 = ssub.s32 %s18, %s25
    %s112 = sor.u32 %s110, %s111
    %p113 = scmp.eq.s32.totalorder %s112, 0
    %s115 = sadd.s32 %s114, 1
    %s116 = scalar_select %p113, %s114, %s115
    %p119 = pneg %p113
    %p120 = scmp.eq.s32.totalorder %s10, 7
    %p121 = por %p119, %p120
    %p122 = scmp.ne.s32.totalorder %s114, %s117
    %p123 = scmp.eq.s32.totalorder %s10, 0
    %p124 = por %p122, %p123
    %p125 = scmp.ne.s32.totalorder %s114, %s117
    %p126 = scmp.eq.s32.totalorder %s15, 7
    %p127 = por %p125, %p126
    %p128 = scmp.ne.s32.totalorder %s117, %s118
    %p129 = scmp.eq.s32.totalorder %s15, 0
    %p130 = por %p128, %p129
    %p131 = scmp.ne.s32.totalorder %s117, %s118
    %p132 = scmp.eq.s32.totalorder %s16, 7
    %p133 = por %p131, %p132
    %p135 = scmp.ne.s32.totalorder %s118, %s134
    %p136 = scmp.eq.s32.totalorder %s16, 0
    %p137 = por %p135, %p136
    %p138 = scmp.le.s32.totalorder 1, %s10
    %p139 = scmp.lt.s32.totalorder %s10, 9
    %p140 = pnand %p138, %p139
    %p141 = pneg %p140
    // Predicated region
    $region9: #{conv_bn_leaky.2} parent=5 // pred_check
      _
    $region10: #{conv_bn_leaky.2} parent=5 // pred_check_branch
      %143 = sbr.rel (%p140) target = $region12
    $region11: #{conv_bn_leaky.2} parent=5 // pred_region
      %s144 = ssub.s32 %s10, 1
      // Predicated region
      $region13: #{conv_bn_leaky.2} parent=11 // pred_check
        %p145 = pneg %p74
      $region14: #{conv_bn_leaky.2} parent=11 // pred_check_branch
        %147 = sbr.rel (%p145) target = $region16
      $region15: #{conv_bn_leaky.2} parent=11 // pred_region
        %p148 = scmp.lt.s32.totalorder %s20, 0
        %s149 = scalar_select %p148, %s20, 0
        %s150 = smul.addr %s149, 4
        %s151 = scalar_lea.vmem %s1, %s150
      $region16: #{conv_bn_leaky.2} parent=11 // pred_fallthru
        _
    $region12: #{conv_bn_leaky.2} parent=5 // pred_fallthru
      _
    %p152 = scmp.lt.s32.totalorder %s10, 8
    // Predicated region
    $region17: #{conv_bn_leaky.2} parent=5 // pred_check
      %p153 = pneg %p152
    $region18: #{conv_bn_leaky.2} parent=5 // pred_check_branch
      %155 = sbr.rel (%p153) target = $region20
    $region19: #{conv_bn_leaky.2} parent=5 // pred_region
      // Predicated region
      $region21: #{conv_bn_leaky.2} parent=19 // pred_check
        %p156 = pneg %p42
      $region22: #{conv_bn_leaky.2} parent=19 // pred_check_branch
        %158 = sbr.rel (%p156) target = $region24
      $region23: #{conv_bn_leaky.2} parent=19 // pred_region
        %s159 = smul.u32 128, %s17
        %p160 = scmp.lt.s32.totalorder %s159, 1023
        %s161 = scalar_select %p160, %s159, 1023
        %s162 = smul.addr %s161, 4
        %s163 = scalar_lea.vmem %s0, %s162
        %s164 = smul.u32 128, %s17
      $region24: #{conv_bn_leaky.2} parent=19 // pred_fallthru
        _
    $region20: #{conv_bn_leaky.2} parent=5 // pred_fallthru
      _
    %p165 = scmp.le.s32.totalorder 1, %s10
    %p166 = scmp.lt.s32.totalorder %s10, 9
    %p167 = pnand %p165, %p166
    %p168 = pneg %p167
    // Predicated region
    $region25: #{conv_bn_leaky.2} parent=5 // pred_check
      _
    $region26: #{conv_bn_leaky.2} parent=5 // pred_check_branch
      %170 = sbr.rel (%p167) target = $region28
    $region27: #{conv_bn_leaky.2} parent=5 // pred_region
      %s171 = ssub.s32 %s10, 1
      %s172 = smul.u32 128, %s19
      %p173 = scmp.lt.s32.totalorder %s172, 1023
      %s174 = scalar_select %p173, %s172, 1023
      %s175 = smul.addr %s174, 4
      %s176 = scalar_lea.vmem %s0, %s175
      %p177 = pneg %p48
      %p178 = pneg %p45
      %p179 = scmp.lt.s32.totalorder %s20, 0
      %s180 = scalar_select %p179, %s20, 0
      %s181 = smul.addr %s180, 4
      %s182 = scalar_lea.vmem %s1, %s181
      %p183 = pneg %p74
      %p184 = pneg %p71
      %p185 = pneg %p102
      %p186 = pneg %p99
      %s187 = smul.u32 128, %s19
      %p188 = scmp.lt.s32.totalorder %s187, 1023
      %s189 = scalar_select %p188, %s187, 1023
      %p190 = scmp.lt.s32.totalorder %s20, 0
      %s191 = scalar_select %p190, %s20, 0
      %s192 = sadd.s32 %s191, %s189
      %s193 = smul.addr %s192, 8
      %s194 = scalar_lea.vmem %s2, %s193
      %p195 = pneg %p130
      %p196 = pneg %p127
      %p197 = scmp.lt.s32.totalorder %s19, 7
      %s198 = scalar_select %p197, %s19, 7
      %p199 = scmp.lt.s32.totalorder %s20, 0
      %s200 = scalar_select %p199, %s20, 0
      %s201 = sadd.s32 %s200, %s198
      %s202 = smul.addr %s201, 2
      %s203 = scalar_lea.vmem %s3, %s202
      %s204 = smul.u32 128, %s19
      %p205 = scmp.lt.s32.totalorder %s204, 1023
      %s206 = scalar_select %p205, %s204, 1023
      %s207 = smul.addr %s206, 4
      %s208 = scalar_lea.vmem %s0, %s207
      %s209 = smul.u32 128, %s19
      %p210 = scmp.lt.s32.totalorder %s20, 0
      %s211 = scalar_select %p210, %s20, 0
      %s212 = smul.addr %s211, 4
      %s213 = scalar_lea.vmem %s1, %s212
      %s214 = smul.u32 128, %s19
      %p215 = scmp.lt.s32.totalorder %s214, 1023
      %s216 = scalar_select %p215, %s214, 1023
      %p217 = scmp.lt.s32.totalorder %s20, 0
      %s218 = scalar_select %p217, %s20, 0
      %s219 = sadd.s32 %s218, %s216
      %s220 = smul.addr %s219, 8
      %s221 = scalar_lea.vmem %s2, %s220
      %s222 = smul.u32 128, %s19
      %p223 = scmp.lt.s32.totalorder %s19, 7
      %s224 = scalar_select %p223, %s19, 7
      %p225 = scmp.lt.s32.totalorder %s20, 0
      %s226 = scalar_select %p225, %s20, 0
      %s227 = sadd.s32 %s226, %s224
      %s228 = smul.addr %s227, 2
      %s229 = scalar_lea.vmem %s3, %s228
      %v231 = vld [vmem:[%s208] sm:$0xf]
      %v232 = vld [vmem:[%s208 + $0x4] sm:$0xf]
      %v233 = vld [vmem:[%s208 + $0x8] sm:$0xf]
      %v234 = vld [vmem:[%s208 + $0xc] sm:$0xf]
      %v235 = vld [vmem:[%s208 + $0x10] sm:$0xf]
      %v236 = vld [vmem:[%s208 + $0x14] sm:$0xf]
      %v237 = vld [vmem:[%s208 + $0x18] sm:$0xf]
      %v238 = vld [vmem:[%s208 + $0x1c] sm:$0xf]
      %v239 = vld [vmem:[%s208 + $0x20] sm:$0xf]
      %v240 = vld [vmem:[%s208 + $0x24] sm:$0xf]
      %v241 = vld [vmem:[%s208 + $0x28] sm:$0xf]
      %v242 = vld [vmem:[%s208 + $0x2c] sm:$0xf]
      %v243 = vld [vmem:[%s208 + $0x30] sm:$0xf]
      %v244 = vld [vmem:[%s208 + $0x34] sm:$0xf]
      %v245 = vld [vmem:[%s208 + $0x38] sm:$0xf]
      %v246 = vld [vmem:[%s208 + $0x3c] sm:$0xf]
      %v247 = vld [vmem:[%s208 + $0x40] sm:$0xf]
      %v248 = vld [vmem:[%s208 + $0x44] sm:$0xf]
      %v249 = vld [vmem:[%s208 + $0x48] sm:$0xf]
      %v250 = vld [vmem:[%s208 + $0x4c] sm:$0xf]
      %v251 = vld [vmem:[%s208 + $0x50] sm:$0xf]
      %v252 = vld [vmem:[%s208 + $0x54] sm:$0xf]
      %v253 = vld [vmem:[%s208 + $0x58] sm:$0xf]
      %v254 = vld [vmem:[%s208 + $0x5c] sm:$0xf]
      %v255 = vld [vmem:[%s208 + $0x60] sm:$0xf]
      %v256 = vld [vmem:[%s208 + $0x64] sm:$0xf]
      %v257 = vld [vmem:[%s208 + $0x68] sm:$0xf]
      %v258 = vld [vmem:[%s208 + $0x6c] sm:$0xf]
      %v259 = vld [vmem:[%s208 + $0x70] sm:$0xf]
      %v260 = vld [vmem:[%s208 + $0x74] sm:$0xf]
      %v261 = vld [vmem:[%s208 + $0x78] sm:$0xf]
      %v262 = vld [vmem:[%s208 + $0x7c] sm:$0xf]
      %v263 = vld [vmem:[%s208 + $0x80] sm:$0xf]
      %v264 = vld [vmem:[%s208 + $0x84] sm:$0xf]
      %v265 = vld [vmem:[%s208 + $0x88] sm:$0xf]
      %v266 = vld [vmem:[%s208 + $0x8c] sm:$0xf]
      %v267 = vld [vmem:[%s208 + $0x90] sm:$0xf]
      %v268 = vld [vmem:[%s208 + $0x94] sm:$0xf]
      %v269 = vld [vmem:[%s208 + $0x98] sm:$0xf]
      %v270 = vld [vmem:[%s208 + $0x9c] sm:$0xf]
      %v271 = vld [vmem:[%s208 + $0xa0] sm:$0xf]
      %v272 = vld [vmem:[%s208 + $0xa4] sm:$0xf]
      %v273 = vld [vmem:[%s208 + $0xa8] sm:$0xf]
      %v274 = vld [vmem:[%s208 + $0xac] sm:$0xf]
      %v275 = vld [vmem:[%s208 + $0xb0] sm:$0xf]
      %v276 = vld [vmem:[%s208 + $0xb4] sm:$0xf]
      %v277 = vld [vmem:[%s208 + $0xb8] sm:$0xf]
      %v278 = vld [vmem:[%s208 + $0xbc] sm:$0xf]
      %v279 = vld [vmem:[%s208 + $0xc0] sm:$0xf]
      %v280 = vld [vmem:[%s208 + $0xc4] sm:$0xf]
      %v281 = vld [vmem:[%s208 + $0xc8] sm:$0xf]
      %v282 = vld [vmem:[%s208 + $0xcc] sm:$0xf]
      %v283 = vld [vmem:[%s208 + $0xd0] sm:$0xf]
      %v284 = vld [vmem:[%s208 + $0xd4] sm:$0xf]
      %v285 = vld [vmem:[%s208 + $0xd8] sm:$0xf]
      %v286 = vld [vmem:[%s208 + $0xdc] sm:$0xf]
      %v287 = vld [vmem:[%s208 + $0xe0] sm:$0xf]
      %v288 = vld [vmem:[%s208 + $0xe4] sm:$0xf]
      %v289 = vld [vmem:[%s208 + $0xe8] sm:$0xf]
      %v290 = vld [vmem:[%s208 + $0xec] sm:$0xf]
      %v291 = vld [vmem:[%s208 + $0xf0] sm:$0xf]
      %v292 = vld [vmem:[%s208 + $0xf4] sm:$0xf]
      %v293 = vld [vmem:[%s208 + $0xf8] sm:$0xf]
      %v294 = vld [vmem:[%s208 + $0xfc] sm:$0xf]
      %v295 = vld [vmem:[%s208 + $0x100] sm:$0xf]
      %v296 = vld [vmem:[%s208 + $0x104] sm:$0xf]
      %v297 = vld [vmem:[%s208 + $0x108] sm:$0xf]
      %v298 = vld [vmem:[%s208 + $0x10c] sm:$0xf]
      %v299 = vld [vmem:[%s208 + $0x110] sm:$0xf]
      %v300 = vld [vmem:[%s208 + $0x114] sm:$0xf]
      %v301 = vld [vmem:[%s208 + $0x118] sm:$0xf]
      %v302 = vld [vmem:[%s208 + $0x11c] sm:$0xf]
      %v303 = vld [vmem:[%s208 + $0x120] sm:$0xf]
      %v304 = vld [vmem:[%s208 + $0x124] sm:$0xf]
      %v305 = vld [vmem:[%s208 + $0x128] sm:$0xf]
      %v306 = vld [vmem:[%s208 + $0x12c] sm:$0xf]
      %v307 = vld [vmem:[%s208 + $0x130] sm:$0xf]
      %v308 = vld [vmem:[%s208 + $0x134] sm:$0xf]
      %v309 = vld [vmem:[%s208 + $0x138] sm:$0xf]
      %v310 = vld [vmem:[%s208 + $0x13c] sm:$0xf]
      %v311 = vld [vmem:[%s208 + $0x140] sm:$0xf]
      %v312 = vld [vmem:[%s208 + $0x144] sm:$0xf]
      %v313 = vld [vmem:[%s208 + $0x148] sm:$0xf]
      %v314 = vld [vmem:[%s208 + $0x14c] sm:$0xf]
      %v315 = vld [vmem:[%s208 + $0x150] sm:$0xf]
      %v316 = vld [vmem:[%s208 + $0x154] sm:$0xf]
      %v317 = vld [vmem:[%s208 + $0x158] sm:$0xf]
      %v318 = vld [vmem:[%s208 + $0x15c] sm:$0xf]
      %v319 = vld [vmem:[%s208 + $0x160] sm:$0xf]
      %v320 = vld [vmem:[%s208 + $0x164] sm:$0xf]
      %v321 = vld [vmem:[%s208 + $0x168] sm:$0xf]
      %v322 = vld [vmem:[%s208 + $0x16c] sm:$0xf]
      %v323 = vld [vmem:[%s208 + $0x170] sm:$0xf]
      %v324 = vld [vmem:[%s208 + $0x174] sm:$0xf]
      %v325 = vld [vmem:[%s208 + $0x178] sm:$0xf]
      %v326 = vld [vmem:[%s208 + $0x17c] sm:$0xf]
      %v327 = vld [vmem:[%s208 + $0x180] sm:$0xf]
      %v328 = vld [vmem:[%s208 + $0x184] sm:$0xf]
      %v329 = vld [vmem:[%s208 + $0x188] sm:$0xf]
      %v330 = vld [vmem:[%s208 + $0x18c] sm:$0xf]
      %v331 = vld [vmem:[%s208 + $0x190] sm:$0xf]
      %v332 = vld [vmem:[%s208 + $0x194] sm:$0xf]
      %v333 = vld [vmem:[%s208 + $0x198] sm:$0xf]
      %v334 = vld [vmem:[%s208 + $0x19c] sm:$0xf]
      %v335 = vld [vmem:[%s208 + $0x1a0] sm:$0xf]
      %v336 = vld [vmem:[%s208 + $0x1a4] sm:$0xf]
      %v337 = vld [vmem:[%s208 + $0x1a8] sm:$0xf]
      %v338 = vld [vmem:[%s208 + $0x1ac] sm:$0xf]
      %v339 = vld [vmem:[%s208 + $0x1b0] sm:$0xf]
      %v340 = vld [vmem:[%s208 + $0x1b4] sm:$0xf]
      %v341 = vld [vmem:[%s208 + $0x1b8] sm:$0xf]
      %v342 = vld [vmem:[%s208 + $0x1bc] sm:$0xf]
      %v343 = vld [vmem:[%s208 + $0x1c0] sm:$0xf]
      %v344 = vld [vmem:[%s208 + $0x1c4] sm:$0xf]
      %v345 = vld [vmem:[%s208 + $0x1c8] sm:$0xf]
      %v346 = vld [vmem:[%s208 + $0x1cc] sm:$0xf]
      %v347 = vld [vmem:[%s208 + $0x1d0] sm:$0xf]
      %v348 = vld [vmem:[%s208 + $0x1d4] sm:$0xf]
      %v349 = vld [vmem:[%s208 + $0x1d8] sm:$0xf]
      %v350 = vld [vmem:[%s208 + $0x1dc] sm:$0xf]
      %v351 = vld [vmem:[%s208 + $0x1e0] sm:$0xf]
      %v352 = vld [vmem:[%s208 + $0x1e4] sm:$0xf]
      %v353 = vld [vmem:[%s208 + $0x1e8] sm:$0xf]
      %v354 = vld [vmem:[%s208 + $0x1ec] sm:$0xf]
      %v355 = vld [vmem:[%s208 + $0x1f0] sm:$0xf]
      %v356 = vld [vmem:[%s208 + $0x1f4] sm:$0xf]
      %v357 = vld [vmem:[%s208 + $0x1f8] sm:$0xf]
      %v358 = vld [vmem:[%s208 + $0x1fc] sm:$0xf]
      %v359 = vld [vmem:[%s213] sm:$0xf]
      %v360 = vld [vmem:[%s213 + $0x4] sm:$0xf]
      %v361 = vld [vmem:[%s213 + $0x8] sm:$0xf]
      %v362 = vld [vmem:[%s213 + $0xc] sm:$0x3]
      %v491 = vunpack.c.l.b16 %v231
      %v492 = vunpack.c.l.b16 %v232
      %v493 = vunpack.c.l.b16 %v233
      %v494 = vunpack.c.l.b16 %v234
      %v495 = vunpack.c.l.b16 %v235
      %v496 = vunpack.c.l.b16 %v236
      %v497 = vunpack.c.l.b16 %v237
      %v498 = vunpack.c.l.b16 %v238
      %v499 = vunpack.c.l.b16 %v239
      %v500 = vunpack.c.l.b16 %v240
      %v501 = vunpack.c.l.b16 %v241
      %v502 = vunpack.c.l.b16 %v242
      %v503 = vunpack.c.l.b16 %v243
      %v504 = vunpack.c.l.b16 %v244
      %v505 = vunpack.c.l.b16 %v245
      %v506 = vunpack.c.l.b16 %v246
      %v507 = vunpack.c.l.b16 %v247
      %v508 = vunpack.c.l.b16 %v248
      %v509 = vunpack.c.l.b16 %v249
      %v510 = vunpack.c.l.b16 %v250
      %v511 = vunpack.c.l.b16 %v251
      %v512 = vunpack.c.l.b16 %v252
      %v513 = vunpack.c.l.b16 %v253
      %v514 = vunpack.c.l.b16 %v254
      %v515 = vunpack.c.l.b16 %v255
      %v516 = vunpack.c.l.b16 %v256
      %v517 = vunpack.c.l.b16 %v257
      %v518 = vunpack.c.l.b16 %v258
      %v519 = vunpack.c.l.b16 %v259
      %v520 = vunpack.c.l.b16 %v260
      %v521 = vunpack.c.l.b16 %v261
      %v522 = vunpack.c.l.b16 %v262
      %v523 = vunpack.c.l.b16 %v263
      %v524 = vunpack.c.l.b16 %v264
      %v525 = vunpack.c.l.b16 %v265
      %v526 = vunpack.c.l.b16 %v266
      %v527 = vunpack.c.l.b16 %v267
      %v528 = vunpack.c.l.b16 %v268
      %v529 = vunpack.c.l.b16 %v269
      %v530 = vunpack.c.l.b16 %v270
      %v531 = vunpack.c.l.b16 %v271
      %v532 = vunpack.c.l.b16 %v272
      %v533 = vunpack.c.l.b16 %v273
      %v534 = vunpack.c.l.b16 %v274
      %v535 = vunpack.c.l.b16 %v275
      %v536 = vunpack.c.l.b16 %v276
      %v537 = vunpack.c.l.b16 %v277
      %v538 = vunpack.c.l.b16 %v278
      %v539 = vunpack.c.l.b16 %v279
      %v540 = vunpack.c.l.b16 %v280
      %v541 = vunpack.c.l.b16 %v281
      %v542 = vunpack.c.l.b16 %v282
      %v543 = vunpack.c.l.b16 %v283
      %v544 = vunpack.c.l.b16 %v284
      %v545 = vunpack.c.l.b16 %v285
      %v546 = vunpack.c.l.b16 %v286
      %v547 = vunpack.c.l.b16 %v287
      %v548 = vunpack.c.l.b16 %v288
      %v549 = vunpack.c.l.b16 %v289
      %v550 = vunpack.c.l.b16 %v290
      %v551 = vunpack.c.l.b16 %v291
      %v552 = vunpack.c.l.b16 %v292
      %v553 = vunpack.c.l.b16 %v293
      %v554 = vunpack.c.l.b16 %v294
      %v555 = vunpack.c.l.b16 %v295
      %v556 = vunpack.c.l.b16 %v296
      %v557 = vunpack.c.l.b16 %v297
      %v558 = vunpack.c.l.b16 %v298
      %v559 = vunpack.c.l.b16 %v299
      %v560 = vunpack.c.l.b16 %v300
      %v561 = vunpack.c.l.b16 %v301
      %v562 = vunpack.c.l.b16 %v302
      %v563 = vunpack.c.l.b16 %v303
      %v564 = vunpack.c.l.b16 %v304
      %v565 = vunpack.c.l.b16 %v305
      %v566 = vunpack.c.l.b16 %v306
      %v567 = vunpack.c.l.b16 %v307
      %v568 = vunpack.c.l.b16 %v308
      %v569 = vunpack.c.l.b16 %v309
      %v570 = vunpack.c.l.b16 %v310
      %v571 = vunpack.c.l.b16 %v311
      %v572 = vunpack.c.l.b16 %v312
      %v573 = vunpack.c.l.b16 %v313
      %v574 = vunpack.c.l.b16 %v314
      %v575 = vunpack.c.l.b16 %v315
      %v576 = vunpack.c.l.b16 %v316
      %v577 = vunpack.c.l.b16 %v317
      %v578 = vunpack.c.l.b16 %v318
      %v579 = vunpack.c.l.b16 %v319
      %v580 = vunpack.c.l.b16 %v320
      %v581 = vunpack.c.l.b16 %v321
      %v582 = vunpack.c.l.b16 %v322
      %v583 = vunpack.c.l.b16 %v323
      %v584 = vunpack.c.l.b16 %v324
      %v585 = vunpack.c.l.b16 %v325
      %v586 = vunpack.c.l.b16 %v326
      %v587 = vunpack.c.l.b16 %v327
      %v588 = vunpack.c.l.b16 %v328
      %v589 = vunpack.c.l.b16 %v329
      %v590 = vunpack.c.l.b16 %v330
      %v591 = vunpack.c.l.b16 %v331
      %v592 = vunpack.c.l.b16 %v332
      %v593 = vunpack.c.l.b16 %v333
      %v594 = vunpack.c.l.b16 %v334
      %v595 = vunpack.c.l.b16 %v335
      %v596 = vunpack.c.l.b16 %v336
      %v597 = vunpack.c.l.b16 %v337
      %v598 = vunpack.c.l.b16 %v338
      %v599 = vunpack.c.l.b16 %v339
      %v600 = vunpack.c.l.b16 %v340
      %v601 = vunpack.c.l.b16 %v341
      %v602 = vunpack.c.l.b16 %v342
      %v603 = vunpack.c.l.b16 %v343
      %v604 = vunpack.c.l.b16 %v344
      %v605 = vunpack.c.l.b16 %v345
      %v606 = vunpack.c.l.b16 %v346
      %v607 = vunpack.c.l.b16 %v347
      %v608 = vunpack.c.l.b16 %v348
      %v609 = vunpack.c.l.b16 %v349
      %v610 = vunpack.c.l.b16 %v350
      %v611 = vunpack.c.l.b16 %v351
      %v612 = vunpack.c.l.b16 %v352
      %v613 = vunpack.c.l.b16 %v353
      %v614 = vunpack.c.l.b16 %v354
      %v615 = vunpack.c.l.b16 %v355
      %v616 = vunpack.c.l.b16 %v356
      %v617 = vunpack.c.l.b16 %v357
      %v618 = vunpack.c.l.b16 %v358
      %v619 = vpack.c.b16 %v492, %v491
      %v620 = vpack.c.b16 %v494, %v493
      %v621 = vpack.c.b16 %v496, %v495
      %v622 = vpack.c.b16 %v498, %v497
      %v623 = vpack.c.b16 %v500, %v499
      %v624 = vpack.c.b16 %v502, %v501
      %v625 = vpack.c.b16 %v504, %v503
      %v626 = vpack.c.b16 %v506, %v505
      %v627 = vpack.c.b16 %v508, %v507
      %v628 = vpack.c.b16 %v510, %v509
      %v629 = vpack.c.b16 %v512, %v511
      %v630 = vpack.c.b16 %v514, %v513
      %v631 = vpack.c.b16 %v516, %v515
      %v632 = vpack.c.b16 %v518, %v517
      %v633 = vpack.c.b16 %v520, %v519
      %v634 = vpack.c.b16 %v522, %v521
      %v635 = vpack.c.b16 %v524, %v523
      %v636 = vpack.c.b16 %v526, %v525
      %v637 = vpack.c.b16 %v528, %v527
      %v638 = vpack.c.b16 %v530, %v529
      %v639 = vpack.c.b16 %v532, %v531
      %v640 = vpack.c.b16 %v534, %v533
      %v641 = vpack.c.b16 %v536, %v535
      %v642 = vpack.c.b16 %v538, %v537
      %v643 = vpack.c.b16 %v540, %v539
      %v644 = vpack.c.b16 %v542, %v541
      %v645 = vpack.c.b16 %v544, %v543
      %v646 = vpack.c.b16 %v546, %v545
      %v647 = vpack.c.b16 %v548, %v547
      %v648 = vpack.c.b16 %v550, %v549
      %v649 = vpack.c.b16 %v552, %v551
      %v650 = vpack.c.b16 %v554, %v553
      %v651 = vpack.c.b16 %v556, %v555
      %v652 = vpack.c.b16 %v558, %v557
      %v653 = vpack.c.b16 %v560, %v559
      %v654 = vpack.c.b16 %v562, %v561
      %v655 = vpack.c.b16 %v564, %v563
      %v656 = vpack.c.b16 %v566, %v565
      %v657 = vpack.c.b16 %v568, %v567
      %v658 = vpack.c.b16 %v570, %v569
      %v659 = vpack.c.b16 %v572, %v571
      %v660 = vpack.c.b16 %v574, %v573
      %v661 = vpack.c.b16 %v576, %v575
      %v662 = vpack.c.b16 %v578, %v577
      %v663 = vpack.c.b16 %v580, %v579
      %v664 = vpack.c.b16 %v582, %v581
      %v665 = vpack.c.b16 %v584, %v583
      %v666 = vpack.c.b16 %v586, %v585
      %v667 = vpack.c.b16 %v588, %v587
      %v668 = vpack.c.b16 %v590, %v589
      %v669 = vpack.c.b16 %v592, %v591
      %v670 = vpack.c.b16 %v594, %v593
      %v671 = vpack.c.b16 %v596, %v595
      %v672 = vpack.c.b16 %v598, %v597
      %v673 = vpack.c.b16 %v600, %v599
      %v674 = vpack.c.b16 %v602, %v601
      %v675 = vpack.c.b16 %v604, %v603
      %v676 = vpack.c.b16 %v606, %v605
      %v677 = vpack.c.b16 %v608, %v607
      %v678 = vpack.c.b16 %v610, %v609
      %v679 = vpack.c.b16 %v612, %v611
      %v680 = vpack.c.b16 %v614, %v613
      %v681 = vpack.c.b16 %v616, %v615
      %v682 = vpack.c.b16 %v618, %v617
      %v687 = vunpack.c.l.b16 %v359
      %v688 = vunpack.c.l.b16 %v360
      %v689 = vunpack.c.l.b16 %v361
      %v690 = vunpack.c.l.b16 %v362
      %v691 = vpack.c.b16 %v688, %v687
      %v692 = vpack.c.b16 %v690, %v689
      %vm694 = vcmask 220160
      %v696 = vsel %vm694, %v619, 0
      %v699 = vsel %vm694, %v620, 0
      %v702 = vsel %vm694, %v621, 0
      %v705 = vsel %vm694, %v622, 0
      %v708 = vsel %vm694, %v623, 0
      %v711 = vsel %vm694, %v624, 0
      %v714 = vsel %vm694, %v625, 0
      %v717 = vsel %vm694, %v626, 0
      %v720 = vsel %vm694, %v627, 0
      %v723 = vsel %vm694, %v628, 0
      %v726 = vsel %vm694, %v629, 0
      %v729 = vsel %vm694, %v630, 0
      %v732 = vsel %vm694, %v631, 0
      %v735 = vsel %vm694, %v632, 0
      %v738 = vsel %vm694, %v633, 0
      %v741 = vsel %vm694, %v634, 0
      %v744 = vsel %vm694, %v635, 0
      %v747 = vsel %vm694, %v636, 0
      %v750 = vsel %vm694, %v637, 0
      %v753 = vsel %vm694, %v638, 0
      %v756 = vsel %vm694, %v639, 0
      %v759 = vsel %vm694, %v640, 0
      %v762 = vsel %vm694, %v641, 0
      %v765 = vsel %vm694, %v642, 0
      %v768 = vsel %vm694, %v643, 0
      %v771 = vsel %vm694, %v644, 0
      %v774 = vsel %vm694, %v645, 0
      %v777 = vsel %vm694, %v646, 0
      %v780 = vsel %vm694, %v647, 0
      %v783 = vsel %vm694, %v648, 0
      %v786 = vsel %vm694, %v649, 0
      %v789 = vsel %vm694, %v650, 0
      %v792 = vsel %vm694, %v651, 0
      %v795 = vsel %vm694, %v652, 0
      %v798 = vsel %vm694, %v653, 0
      %v801 = vsel %vm694, %v654, 0
      %v804 = vsel %vm694, %v655, 0
      %v807 = vsel %vm694, %v656, 0
      %v810 = vsel %vm694, %v657, 0
      %v813 = vsel %vm694, %v658, 0
      %v816 = vsel %vm694, %v659, 0
      %v819 = vsel %vm694, %v660, 0
      %v822 = vsel %vm694, %v661, 0
      %v825 = vsel %vm694, %v662, 0
      %v828 = vsel %vm694, %v663, 0
      %v831 = vsel %vm694, %v664, 0
      %v834 = vsel %vm694, %v665, 0
      %v837 = vsel %vm694, %v666, 0
      %v840 = vsel %vm694, %v667, 0
      %v843 = vsel %vm694, %v668, 0
      %v846 = vsel %vm694, %v669, 0
      %v849 = vsel %vm694, %v670, 0
      %v852 = vsel %vm694, %v671, 0
      %v855 = vsel %vm694, %v672, 0
      %v858 = vsel %vm694, %v673, 0
      %v861 = vsel %vm694, %v674, 0
      %v864 = vsel %vm694, %v675, 0
      %v867 = vsel %vm694, %v676, 0
      %v870 = vsel %vm694, %v677, 0
      %v873 = vsel %vm694, %v678, 0
      %v876 = vsel %vm694, %v679, 0
      %v879 = vsel %vm694, %v680, 0
      %v882 = vsel %vm694, %v681, 0
      %v885 = vsel %vm694, %v682, 0
      %vm887 = vcmask 1044480
      %vm888 = vcmask 1045504
      %v889 = vsel %vm887, 4294967295, 65535
      %v890 = vsel %vm888, %v889, 0
      %v892 = vand.u32 %v692, %v890
      %894 = vmatpush.bf16.msra.mxu0 0
      %895 = vmatpush.bf16.msra.mxu0 0
      %896 = vmatpush.bf16.msra.mxu0 0
      %897 = vmatpush.bf16.msra.mxu0 0
      %898 = vmatpush.bf16.msra.mxu0 0
      %899 = vmatpush.bf16.msra.mxu0 0
      %900 = vmatpush.bf16.msra.mxu0 %v892
      %901 = vmatpush.bf16.msra.mxu0 %v691
      %902 = vmatmul.bf16.gmra.mxu0 %v696
      %v903 = vpop.f32.mrf.mxu0
      %v904 = vadd.f32 0.0, %v903
      %v905 = vpop.f32.mrf.mxu0
      %v906 = vadd.f32 0.0, %v905
      %907 = vmatmul.bf16.gmra.mxu0 %v699
      %v908 = vpop.f32.mrf.mxu0
      %v909 = vadd.f32 0.0, %v908
      %v910 = vpop.f32.mrf.mxu0
      %v911 = vadd.f32 0.0, %v910
      %912 = vmatmul.bf16.gmra.mxu0 %v702
      %v913 = vpop.f32.mrf.mxu0
      %v914 = vadd.f32 0.0, %v913
      %v915 = vpop.f32.mrf.mxu0
      %v916 = vadd.f32 0.0, %v915
      %917 = vmatmul.bf16.gmra.mxu0 %v705
      %v918 = vpop.f32.mrf.mxu0
      %v919 = vadd.f32 0.0, %v918
      %v920 = vpop.f32.mrf.mxu0
      %v921 = vadd.f32 0.0, %v920
      %922 = vmatmul.bf16.gmra.mxu0 %v708
      %v923 = vpop.f32.mrf.mxu0
      %v924 = vadd.f32 0.0, %v923
      %v925 = vpop.f32.mrf.mxu0
      %v926 = vadd.f32 0.0, %v925
      %927 = vmatmul.bf16.gmra.mxu0 %v711
      %v928 = vpop.f32.mrf.mxu0
      %v929 = vadd.f32 0.0, %v928
      %v930 = vpop.f32.mrf.mxu0
      %v931 = vadd.f32 0.0, %v930
      %932 = vmatmul.bf16.gmra.mxu0 %v714
      %v933 = vpop.f32.mrf.mxu0
      %v934 = vadd.f32 0.0, %v933
      %v935 = vpop.f32.mrf.mxu0
      %v936 = vadd.f32 0.0, %v935
      %937 = vmatmul.bf16.gmra.mxu0 %v717
      %v938 = vpop.f32.mrf.mxu0
      %v939 = vadd.f32 0.0, %v938
      %v940 = vpop.f32.mrf.mxu0
      %v941 = vadd.f32 0.0, %v940
      %942 = vmatmul.bf16.gmra.mxu0 %v720
      %v943 = vpop.f32.mrf.mxu0
      %v944 = vadd.f32 0.0, %v943
      %v945 = vpop.f32.mrf.mxu0
      %v946 = vadd.f32 0.0, %v945
      %947 = vmatmul.bf16.gmra.mxu0 %v723
      %v948 = vpop.f32.mrf.mxu0
      %v949 = vadd.f32 0.0, %v948
      %v950 = vpop.f32.mrf.mxu0
      %v951 = vadd.f32 0.0, %v950
      %952 = vmatmul.bf16.gmra.mxu0 %v726
      %v953 = vpop.f32.mrf.mxu0
      %v954 = vadd.f32 0.0, %v953
      %v955 = vpop.f32.mrf.mxu0
      %v956 = vadd.f32 0.0, %v955
      %957 = vmatmul.bf16.gmra.mxu0 %v729
      %v958 = vpop.f32.mrf.mxu0
      %v959 = vadd.f32 0.0, %v958
      %v960 = vpop.f32.mrf.mxu0
      %v961 = vadd.f32 0.0, %v960
      %962 = vmatmul.bf16.gmra.mxu0 %v732
      %v963 = vpop.f32.mrf.mxu0
      %v964 = vadd.f32 0.0, %v963
      %v965 = vpop.f32.mrf.mxu0
      %v966 = vadd.f32 0.0, %v965
      %967 = vmatmul.bf16.gmra.mxu0 %v735
      %v968 = vpop.f32.mrf.mxu0
      %v969 = vadd.f32 0.0, %v968
      %v970 = vpop.f32.mrf.mxu0
      %v971 = vadd.f32 0.0, %v970
      %972 = vmatmul.bf16.gmra.mxu0 %v738
      %v973 = vpop.f32.mrf.mxu0
      %v974 = vadd.f32 0.0, %v973
      %v975 = vpop.f32.mrf.mxu0
      %v976 = vadd.f32 0.0, %v975
      %977 = vmatmul.bf16.gmra.mxu0 %v741
      %v978 = vpop.f32.mrf.mxu0
      %v979 = vadd.f32 0.0, %v978
      %v980 = vpop.f32.mrf.mxu0
      %v981 = vadd.f32 0.0, %v980
      %982 = vmatmul.bf16.gmra.mxu0 %v744
      %v983 = vpop.f32.mrf.mxu0
      %v984 = vadd.f32 0.0, %v983
      %v985 = vpop.f32.mrf.mxu0
      %v986 = vadd.f32 0.0, %v985
      %987 = vmatmul.bf16.gmra.mxu0 %v747
      %v988 = vpop.f32.mrf.mxu0
      %v989 = vadd.f32 0.0, %v988
      %v990 = vpop.f32.mrf.mxu0
      %v991 = vadd.f32 0.0, %v990
      %992 = vmatmul.bf16.gmra.mxu0 %v750
      %v993 = vpop.f32.mrf.mxu0
      %v994 = vadd.f32 0.0, %v993
      %v995 = vpop.f32.mrf.mxu0
      %v996 = vadd.f32 0.0, %v995
      %997 = vmatmul.bf16.gmra.mxu0 %v753
      %v998 = vpop.f32.mrf.mxu0
      %v999 = vadd.f32 0.0, %v998
      %v1000 = vpop.f32.mrf.mxu0
      %v1001 = vadd.f32 0.0, %v1000
      %1002 = vmatmul.bf16.gmra.mxu0 %v756
      %v1003 = vpop.f32.mrf.mxu0
      %v1004 = vadd.f32 0.0, %v1003
      %v1005 = vpop.f32.mrf.mxu0
      %v1006 = vadd.f32 0.0, %v1005
      %1007 = vmatmul.bf16.gmra.mxu0 %v759
      %v1008 = vpop.f32.mrf.mxu0
      %v1009 = vadd.f32 0.0, %v1008
      %v1010 = vpop.f32.mrf.mxu0
      %v1011 = vadd.f32 0.0, %v1010
      %1012 = vmatmul.bf16.gmra.mxu0 %v762
      %v1013 = vpop.f32.mrf.mxu0
      %v1014 = vadd.f32 0.0, %v1013
      %v1015 = vpop.f32.mrf.mxu0
      %v1016 = vadd.f32 0.0, %v1015
      %1017 = vmatmul.bf16.gmra.mxu0 %v765
      %v1018 = vpop.f32.mrf.mxu0
      %v1019 = vadd.f32 0.0, %v1018
      %v1020 = vpop.f32.mrf.mxu0
      %v1021 = vadd.f32 0.0, %v1020
      %1022 = vmatmul.bf16.gmra.mxu0 %v768
      %v1023 = vpop.f32.mrf.mxu0
      %v1024 = vadd.f32 0.0, %v1023
      %v1025 = vpop.f32.mrf.mxu0
      %v1026 = vadd.f32 0.0, %v1025
      %1027 = vmatmul.bf16.gmra.mxu0 %v771
      %v1028 = vpop.f32.mrf.mxu0
      %v1029 = vadd.f32 0.0, %v1028
      %v1030 = vpop.f32.mrf.mxu0
      %v1031 = vadd.f32 0.0, %v1030
      %1032 = vmatmul.bf16.gmra.mxu0 %v774
      %v1033 = vpop.f32.mrf.mxu0
      %v1034 = vadd.f32 0.0, %v1033
      %v1035 = vpop.f32.mrf.mxu0
      %v1036 = vadd.f32 0.0, %v1035
      %1037 = vmatmul.bf16.gmra.mxu0 %v777
      %v1038 = vpop.f32.mrf.mxu0
      %v1039 = vadd.f32 0.0, %v1038
      %v1040 = vpop.f32.mrf.mxu0
      %v1041 = vadd.f32 0.0, %v1040
      %1042 = vmatmul.bf16.gmra.mxu0 %v780
      %v1043 = vpop.f32.mrf.mxu0
      %v1044 = vadd.f32 0.0, %v1043
      %v1045 = vpop.f32.mrf.mxu0
      %v1046 = vadd.f32 0.0, %v1045
      %1047 = vmatmul.bf16.gmra.mxu0 %v783
      %v1048 = vpop.f32.mrf.mxu0
      %v1049 = vadd.f32 0.0, %v1048
      %v1050 = vpop.f32.mrf.mxu0
      %v1051 = vadd.f32 0.0, %v1050
      %1052 = vmatmul.bf16.gmra.mxu0 %v786
      %v1053 = vpop.f32.mrf.mxu0
      %v1054 = vadd.f32 0.0, %v1053
      %v1055 = vpop.f32.mrf.mxu0
      %v1056 = vadd.f32 0.0, %v1055
      %1057 = vmatmul.bf16.gmra.mxu0 %v789
      %v1058 = vpop.f32.mrf.mxu0
      %v1059 = vadd.f32 0.0, %v1058
      %v1060 = vpop.f32.mrf.mxu0
      %v1061 = vadd.f32 0.0, %v1060
      %1062 = vmatmul.bf16.gmra.mxu0 %v792
      %v1063 = vpop.f32.mrf.mxu0
      %v1064 = vadd.f32 0.0, %v1063
      %v1065 = vpop.f32.mrf.mxu0
      %v1066 = vadd.f32 0.0, %v1065
      %1067 = vmatmul.bf16.gmra.mxu0 %v795
      %v1068 = vpop.f32.mrf.mxu0
      %v1069 = vadd.f32 0.0, %v1068
      %v1070 = vpop.f32.mrf.mxu0
      %v1071 = vadd.f32 0.0, %v1070
      %1072 = vmatmul.bf16.gmra.mxu0 %v798
      %v1073 = vpop.f32.mrf.mxu0
      %v1074 = vadd.f32 0.0, %v1073
      %v1075 = vpop.f32.mrf.mxu0
      %v1076 = vadd.f32 0.0, %v1075
      %1077 = vmatmul.bf16.gmra.mxu0 %v801
      %v1078 = vpop.f32.mrf.mxu0
      %v1079 = vadd.f32 0.0, %v1078
      %v1080 = vpop.f32.mrf.mxu0
      %v1081 = vadd.f32 0.0, %v1080
      %1082 = vmatmul.bf16.gmra.mxu0 %v804
      %v1083 = vpop.f32.mrf.mxu0
      %v1084 = vadd.f32 0.0, %v1083
      %v1085 = vpop.f32.mrf.mxu0
      %v1086 = vadd.f32 0.0, %v1085
      %1087 = vmatmul.bf16.gmra.mxu0 %v807
      %v1088 = vpop.f32.mrf.mxu0
      %v1089 = vadd.f32 0.0, %v1088
      %v1090 = vpop.f32.mrf.mxu0
      %v1091 = vadd.f32 0.0, %v1090
      %1092 = vmatmul.bf16.gmra.mxu0 %v810
      %v1093 = vpop.f32.mrf.mxu0
      %v1094 = vadd.f32 0.0, %v1093
      %v1095 = vpop.f32.mrf.mxu0
      %v1096 = vadd.f32 0.0, %v1095
      %1097 = vmatmul.bf16.gmra.mxu0 %v813
      %v1098 = vpop.f32.mrf.mxu0
      %v1099 = vadd.f32 0.0, %v1098
      %v1100 = vpop.f32.mrf.mxu0
      %v1101 = vadd.f32 0.0, %v1100
      %1102 = vmatmul.bf16.gmra.mxu0 %v816
      %v1103 = vpop.f32.mrf.mxu0
      %v1104 = vadd.f32 0.0, %v1103
      %v1105 = vpop.f32.mrf.mxu0
      %v1106 = vadd.f32 0.0, %v1105
      %1107 = vmatmul.bf16.gmra.mxu0 %v819
      %v1108 = vpop.f32.mrf.mxu0
      %v1109 = vadd.f32 0.0, %v1108
      %v1110 = vpop.f32.mrf.mxu0
      %v1111 = vadd.f32 0.0, %v1110
      %1112 = vmatmul.bf16.gmra.mxu0 %v822
      %v1113 = vpop.f32.mrf.mxu0
      %v1114 = vadd.f32 0.0, %v1113
      %v1115 = vpop.f32.mrf.mxu0
      %v1116 = vadd.f32 0.0, %v1115
      %1117 = vmatmul.bf16.gmra.mxu0 %v825
      %v1118 = vpop.f32.mrf.mxu0
      %v1119 = vadd.f32 0.0, %v1118
      %v1120 = vpop.f32.mrf.mxu0
      %v1121 = vadd.f32 0.0, %v1120
      %1122 = vmatmul.bf16.gmra.mxu0 %v828
      %v1123 = vpop.f32.mrf.mxu0
      %v1124 = vadd.f32 0.0, %v1123
      %v1125 = vpop.f32.mrf.mxu0
      %v1126 = vadd.f32 0.0, %v1125
      %1127 = vmatmul.bf16.gmra.mxu0 %v831
      %v1128 = vpop.f32.mrf.mxu0
      %v1129 = vadd.f32 0.0, %v1128
      %v1130 = vpop.f32.mrf.mxu0
      %v1131 = vadd.f32 0.0, %v1130
      %1132 = vmatmul.bf16.gmra.mxu0 %v834
      %v1133 = vpop.f32.mrf.mxu0
      %v1134 = vadd.f32 0.0, %v1133
      %v1135 = vpop.f32.mrf.mxu0
      %v1136 = vadd.f32 0.0, %v1135
      %1137 = vmatmul.bf16.gmra.mxu0 %v837
      %v1138 = vpop.f32.mrf.mxu0
      %v1139 = vadd.f32 0.0, %v1138
      %v1140 = vpop.f32.mrf.mxu0
      %v1141 = vadd.f32 0.0, %v1140
      %1142 = vmatmul.bf16.gmra.mxu0 %v840
      %v1143 = vpop.f32.mrf.mxu0
      %v1144 = vadd.f32 0.0, %v1143
      %v1145 = vpop.f32.mrf.mxu0
      %v1146 = vadd.f32 0.0, %v1145
      %1147 = vmatmul.bf16.gmra.mxu0 %v843
      %v1148 = vpop.f32.mrf.mxu0
      %v1149 = vadd.f32 0.0, %v1148
      %v1150 = vpop.f32.mrf.mxu0
      %v1151 = vadd.f32 0.0, %v1150
      %1152 = vmatmul.bf16.gmra.mxu0 %v846
      %v1153 = vpop.f32.mrf.mxu0
      %v1154 = vadd.f32 0.0, %v1153
      %v1155 = vpop.f32.mrf.mxu0
      %v1156 = vadd.f32 0.0, %v1155
      %1157 = vmatmul.bf16.gmra.mxu0 %v849
      %v1158 = vpop.f32.mrf.mxu0
      %v1159 = vadd.f32 0.0, %v1158
      %v1160 = vpop.f32.mrf.mxu0
      %v1161 = vadd.f32 0.0, %v1160
      %1162 = vmatmul.bf16.gmra.mxu0 %v852
      %v1163 = vpop.f32.mrf.mxu0
      %v1164 = vadd.f32 0.0, %v1163
      %v1165 = vpop.f32.mrf.mxu0
      %v1166 = vadd.f32 0.0, %v1165
      %1167 = vmatmul.bf16.gmra.mxu0 %v855
      %v1168 = vpop.f32.mrf.mxu0
      %v1169 = vadd.f32 0.0, %v1168
      %v1170 = vpop.f32.mrf.mxu0
      %v1171 = vadd.f32 0.0, %v1170
      %1172 = vmatmul.bf16.gmra.mxu0 %v858
      %v1173 = vpop.f32.mrf.mxu0
      %v1174 = vadd.f32 0.0, %v1173
      %v1175 = vpop.f32.mrf.mxu0
      %v1176 = vadd.f32 0.0, %v1175
      %1177 = vmatmul.bf16.gmra.mxu0 %v861
      %v1178 = vpop.f32.mrf.mxu0
      %v1179 = vadd.f32 0.0, %v1178
      %v1180 = vpop.f32.mrf.mxu0
      %v1181 = vadd.f32 0.0, %v1180
      %1182 = vmatmul.bf16.gmra.mxu0 %v864
      %v1183 = vpop.f32.mrf.mxu0
      %v1184 = vadd.f32 0.0, %v1183
      %v1185 = vpop.f32.mrf.mxu0
      %v1186 = vadd.f32 0.0, %v1185
      %1187 = vmatmul.bf16.gmra.mxu0 %v867
      %v1188 = vpop.f32.mrf.mxu0
      %v1189 = vadd.f32 0.0, %v1188
      %v1190 = vpop.f32.mrf.mxu0
      %v1191 = vadd.f32 0.0, %v1190
      %1192 = vmatmul.bf16.gmra.mxu0 %v870
      %v1193 = vpop.f32.mrf.mxu0
      %v1194 = vadd.f32 0.0, %v1193
      %v1195 = vpop.f32.mrf.mxu0
      %v1196 = vadd.f32 0.0, %v1195
      %1197 = vmatmul.bf16.gmra.mxu0 %v873
      %v1198 = vpop.f32.mrf.mxu0
      %v1199 = vadd.f32 0.0, %v1198
      %v1200 = vpop.f32.mrf.mxu0
      %v1201 = vadd.f32 0.0, %v1200
      %1202 = vmatmul.bf16.gmra.mxu0 %v876
      %v1203 = vpop.f32.mrf.mxu0
      %v1204 = vadd.f32 0.0, %v1203
      %v1205 = vpop.f32.mrf.mxu0
      %v1206 = vadd.f32 0.0, %v1205
      %1207 = vmatmul.bf16.gmra.mxu0 %v879
      %v1208 = vpop.f32.mrf.mxu0
      %v1209 = vadd.f32 0.0, %v1208
      %v1210 = vpop.f32.mrf.mxu0
      %v1211 = vadd.f32 0.0, %v1210
      %1212 = vmatmul.bf16.gmra.mxu0 %v882
      %v1213 = vpop.f32.mrf.mxu0
      %v1214 = vadd.f32 0.0, %v1213
      %v1215 = vpop.f32.mrf.mxu0
      %v1216 = vadd.f32 0.0, %v1215
      %1217 = vmatmul.bf16.gmra.mxu0 %v885
      %v1218 = vpop.f32.mrf.mxu0
      %v1219 = vadd.f32 0.0, %v1218
      %v1220 = vpop.f32.mrf.mxu0
      %v1221 = vadd.f32 0.0, %v1220
      %1222 = vdwg.mxu0
      %vm1223 = vcmask 261120
      %1224 = vst.msk [vmem:[%s221] sm:$0xff] %vm1223, %v904
      %1225 = vst.msk [vmem:[%s221 + $0x8] sm:$0xff] %vm1223, %v906
      %1226 = vst.msk [vmem:[%s221 + $0x10] sm:$0xff] %vm1223, %v909
      %1227 = vst.msk [vmem:[%s221 + $0x18] sm:$0xff] %vm1223, %v911
      %1228 = vst.msk [vmem:[%s221 + $0x20] sm:$0xff] %vm1223, %v914
      %1229 = vst.msk [vmem:[%s221 + $0x28] sm:$0xff] %vm1223, %v916
      %1230 = vst.msk [vmem:[%s221 + $0x30] sm:$0xff] %vm1223, %v919
      %1231 = vst.msk [vmem:[%s221 + $0x38] sm:$0xff] %vm1223, %v921
      %1232 = vst.msk [vmem:[%s221 + $0x40] sm:$0xff] %vm1223, %v924
      %1233 = vst.msk [vmem:[%s221 + $0x48] sm:$0xff] %vm1223, %v926
      %1234 = vst.msk [vmem:[%s221 + $0x50] sm:$0xff] %vm1223, %v929
      %1235 = vst.msk [vmem:[%s221 + $0x58] sm:$0xff] %vm1223, %v931
      %1236 = vst.msk [vmem:[%s221 + $0x60] sm:$0xff] %vm1223, %v934
      %1237 = vst.msk [vmem:[%s221 + $0x68] sm:$0xff] %vm1223, %v936
      %1238 = vst.msk [vmem:[%s221 + $0x70] sm:$0xff] %vm1223, %v939
      %1239 = vst.msk [vmem:[%s221 + $0x78] sm:$0xff] %vm1223, %v941
      %1240 = vst.msk [vmem:[%s221 + $0x80] sm:$0xff] %vm1223, %v944
      %1241 = vst.msk [vmem:[%s221 + $0x88] sm:$0xff] %vm1223, %v946
      %1242 = vst.msk [vmem:[%s221 + $0x90] sm:$0xff] %vm1223, %v949
      %1243 = vst.msk [vmem:[%s221 + $0x98] sm:$0xff] %vm1223, %v951
      %1244 = vst.msk [vmem:[%s221 + $0xa0] sm:$0xff] %vm1223, %v954
      %1245 = vst.msk [vmem:[%s221 + $0xa8] sm:$0xff] %vm1223, %v956
      %1246 = vst.msk [vmem:[%s221 + $0xb0] sm:$0xff] %vm1223, %v959
      %1247 = vst.msk [vmem:[%s221 + $0xb8] sm:$0xff] %vm1223, %v961
      %1248 = vst.msk [vmem:[%s221 + $0xc0] sm:$0xff] %vm1223, %v964
      %1249 = vst.msk [vmem:[%s221 + $0xc8] sm:$0xff] %vm1223, %v966
      %1250 = vst.msk [vmem:[%s221 + $0xd0] sm:$0xff] %vm1223, %v969
      %1251 = vst.msk [vmem:[%s221 + $0xd8] sm:$0xff] %vm1223, %v971
      %1252 = vst.msk [vmem:[%s221 + $0xe0] sm:$0xff] %vm1223, %v974
      %1253 = vst.msk [vmem:[%s221 + $0xe8] sm:$0xff] %vm1223, %v976
      %1254 = vst.msk [vmem:[%s221 + $0xf0] sm:$0xff] %vm1223, %v979
      %1255 = vst.msk [vmem:[%s221 + $0xf8] sm:$0xff] %vm1223, %v981
      %1256 = vst.msk [vmem:[%s221 + $0x100] sm:$0xff] %vm1223, %v984
      %1257 = vst.msk [vmem:[%s221 + $0x108] sm:$0xff] %vm1223, %v986
      %1258 = vst.msk [vmem:[%s221 + $0x110] sm:$0xff] %vm1223, %v989
      %1259 = vst.msk [vmem:[%s221 + $0x118] sm:$0xff] %vm1223, %v991
      %1260 = vst.msk [vmem:[%s221 + $0x120] sm:$0xff] %vm1223, %v994
      %1261 = vst.msk [vmem:[%s221 + $0x128] sm:$0xff] %vm1223, %v996
      %1262 = vst.msk [vmem:[%s221 + $0x130] sm:$0xff] %vm1223, %v999
      %1263 = vst.msk [vmem:[%s221 + $0x138] sm:$0xff] %vm1223, %v1001
      %1264 = vst.msk [vmem:[%s221 + $0x140] sm:$0xff] %vm1223, %v1004
      %1265 = vst.msk [vmem:[%s221 + $0x148] sm:$0xff] %vm1223, %v1006
      %1266 = vst.msk [vmem:[%s221 + $0x150] sm:$0xff] %vm1223, %v1009
      %1267 = vst.msk [vmem:[%s221 + $0x158] sm:$0xff] %vm1223, %v1011
      %1268 = vst.msk [vmem:[%s221 + $0x160] sm:$0xff] %vm1223, %v1014
      %1269 = vst.msk [vmem:[%s221 + $0x168] sm:$0xff] %vm1223, %v1016
      %1270 = vst.msk [vmem:[%s221 + $0x170] sm:$0xff] %vm1223, %v1019
      %1271 = vst.msk [vmem:[%s221 + $0x178] sm:$0xff] %vm1223, %v1021
      %1272 = vst.msk [vmem:[%s221 + $0x180] sm:$0xff] %vm1223, %v1024
      %1273 = vst.msk [vmem:[%s221 + $0x188] sm:$0xff] %vm1223, %v1026
      %1274 = vst.msk [vmem:[%s221 + $0x190] sm:$0xff] %vm1223, %v1029
      %1275 = vst.msk [vmem:[%s221 + $0x198] sm:$0xff] %vm1223, %v1031
      %1276 = vst.msk [vmem:[%s221 + $0x1a0] sm:$0xff] %vm1223, %v1034
      %1277 = vst.msk [vmem:[%s221 + $0x1a8] sm:$0xff] %vm1223, %v1036
      %1278 = vst.msk [vmem:[%s221 + $0x1b0] sm:$0xff] %vm1223, %v1039
      %1279 = vst.msk [vmem:[%s221 + $0x1b8] sm:$0xff] %vm1223, %v1041
      %1280 = vst.msk [vmem:[%s221 + $0x1c0] sm:$0xff] %vm1223, %v1044
      %1281 = vst.msk [vmem:[%s221 + $0x1c8] sm:$0xff] %vm1223, %v1046
      %1282 = vst.msk [vmem:[%s221 + $0x1d0] sm:$0xff] %vm1223, %v1049
      %1283 = vst.msk [vmem:[%s221 + $0x1d8] sm:$0xff] %vm1223, %v1051
      %1284 = vst.msk [vmem:[%s221 + $0x1e0] sm:$0xff] %vm1223, %v1054
      %1285 = vst.msk [vmem:[%s221 + $0x1e8] sm:$0xff] %vm1223, %v1056
      %1286 = vst.msk [vmem:[%s221 + $0x1f0] sm:$0xff] %vm1223, %v1059
      %1287 = vst.msk [vmem:[%s221 + $0x1f8] sm:$0xff] %vm1223, %v1061
      %1288 = vst.msk [vmem:[%s221 + $0x200] sm:$0xff] %vm1223, %v1064
      %1289 = vst.msk [vmem:[%s221 + $0x208] sm:$0xff] %vm1223, %v1066
      %1290 = vst.msk [vmem:[%s221 + $0x210] sm:$0xff] %vm1223, %v1069
      %1291 = vst.msk [vmem:[%s221 + $0x218] sm:$0xff] %vm1223, %v1071
      %1292 = vst.msk [vmem:[%s221 + $0x220] sm:$0xff] %vm1223, %v1074
      %1293 = vst.msk [vmem:[%s221 + $0x228] sm:$0xff] %vm1223, %v1076
      %1294 = vst.msk [vmem:[%s221 + $0x230] sm:$0xff] %vm1223, %v1079
      %1295 = vst.msk [vmem:[%s221 + $0x238] sm:$0xff] %vm1223, %v1081
      %1296 = vst.msk [vmem:[%s221 + $0x240] sm:$0xff] %vm1223, %v1084
      %1297 = vst.msk [vmem:[%s221 + $0x248] sm:$0xff] %vm1223, %v1086
      %1298 = vst.msk [vmem:[%s221 + $0x250] sm:$0xff] %vm1223, %v1089
      %1299 = vst.msk [vmem:[%s221 + $0x258] sm:$0xff] %vm1223, %v1091
      %1300 = vst.msk [vmem:[%s221 + $0x260] sm:$0xff] %vm1223, %v1094
      %1301 = vst.msk [vmem:[%s221 + $0x268] sm:$0xff] %vm1223, %v1096
      %1302 = vst.msk [vmem:[%s221 + $0x270] sm:$0xff] %vm1223, %v1099
      %1303 = vst.msk [vmem:[%s221 + $0x278] sm:$0xff] %vm1223, %v1101
      %1304 = vst.msk [vmem:[%s221 + $0x280] sm:$0xff] %vm1223, %v1104
      %1305 = vst.msk [vmem:[%s221 + $0x288] sm:$0xff] %vm1223, %v1106
      %1306 = vst.msk [vmem:[%s221 + $0x290] sm:$0xff] %vm1223, %v1109
      %1307 = vst.msk [vmem:[%s221 + $0x298] sm:$0xff] %vm1223, %v1111
      %1308 = vst.msk [vmem:[%s221 + $0x2a0] sm:$0xff] %vm1223, %v1114
      %1309 = vst.msk [vmem:[%s221 + $0x2a8] sm:$0xff] %vm1223, %v1116
      %1310 = vst.msk [vmem:[%s221 + $0x2b0] sm:$0xff] %vm1223, %v1119
      %1311 = vst.msk [vmem:[%s221 + $0x2b8] sm:$0xff] %vm1223, %v1121
      %1312 = vst.msk [vmem:[%s221 + $0x2c0] sm:$0xff] %vm1223, %v1124
      %1313 = vst.msk [vmem:[%s221 + $0x2c8] sm:$0xff] %vm1223, %v1126
      %1314 = vst.msk [vmem:[%s221 + $0x2d0] sm:$0xff] %vm1223, %v1129
      %1315 = vst.msk [vmem:[%s221 + $0x2d8] sm:$0xff] %vm1223, %v1131
      %1316 = vst.msk [vmem:[%s221 + $0x2e0] sm:$0xff] %vm1223, %v1134
      %1317 = vst.msk [vmem:[%s221 + $0x2e8] sm:$0xff] %vm1223, %v1136
      %1318 = vst.msk [vmem:[%s221 + $0x2f0] sm:$0xff] %vm1223, %v1139
      %1319 = vst.msk [vmem:[%s221 + $0x2f8] sm:$0xff] %vm1223, %v1141
      %1320 = vst.msk [vmem:[%s221 + $0x300] sm:$0xff] %vm1223, %v1144
      %1321 = vst.msk [vmem:[%s221 + $0x308] sm:$0xff] %vm1223, %v1146
      %1322 = vst.msk [vmem:[%s221 + $0x310] sm:$0xff] %vm1223, %v1149
      %1323 = vst.msk [vmem:[%s221 + $0x318] sm:$0xff] %vm1223, %v1151
      %1324 = vst.msk [vmem:[%s221 + $0x320] sm:$0xff] %vm1223, %v1154
      %1325 = vst.msk [vmem:[%s221 + $0x328] sm:$0xff] %vm1223, %v1156
      %1326 = vst.msk [vmem:[%s221 + $0x330] sm:$0xff] %vm1223, %v1159
      %1327 = vst.msk [vmem:[%s221 + $0x338] sm:$0xff] %vm1223, %v1161
      %1328 = vst.msk [vmem:[%s221 + $0x340] sm:$0xff] %vm1223, %v1164
      %1329 = vst.msk [vmem:[%s221 + $0x348] sm:$0xff] %vm1223, %v1166
      %1330 = vst.msk [vmem:[%s221 + $0x350] sm:$0xff] %vm1223, %v1169
      %1331 = vst.msk [vmem:[%s221 + $0x358] sm:$0xff] %vm1223, %v1171
      %1332 = vst.msk [vmem:[%s221 + $0x360] sm:$0xff] %vm1223, %v1174
      %1333 = vst.msk [vmem:[%s221 + $0x368] sm:$0xff] %vm1223, %v1176
      %1334 = vst.msk [vmem:[%s221 + $0x370] sm:$0xff] %vm1223, %v1179
      %1335 = vst.msk [vmem:[%s221 + $0x378] sm:$0xff] %vm1223, %v1181
      %1336 = vst.msk [vmem:[%s221 + $0x380] sm:$0xff] %vm1223, %v1184
      %1337 = vst.msk [vmem:[%s221 + $0x388] sm:$0xff] %vm1223, %v1186
      %1338 = vst.msk [vmem:[%s221 + $0x390] sm:$0xff] %vm1223, %v1189
      %1339 = vst.msk [vmem:[%s221 + $0x398] sm:$0xff] %vm1223, %v1191
      %1340 = vst.msk [vmem:[%s221 + $0x3a0] sm:$0xff] %vm1223, %v1194
      %1341 = vst.msk [vmem:[%s221 + $0x3a8] sm:$0xff] %vm1223, %v1196
      %1342 = vst.msk [vmem:[%s221 + $0x3b0] sm:$0xff] %vm1223, %v1199
      %1343 = vst.msk [vmem:[%s221 + $0x3b8] sm:$0xff] %vm1223, %v1201
      %1344 = vst.msk [vmem:[%s221 + $0x3c0] sm:$0xff] %vm1223, %v1204
      %1345 = vst.msk [vmem:[%s221 + $0x3c8] sm:$0xff] %vm1223, %v1206
      %1346 = vst.msk [vmem:[%s221 + $0x3d0] sm:$0xff] %vm1223, %v1209
      %1347 = vst.msk [vmem:[%s221 + $0x3d8] sm:$0xff] %vm1223, %v1211
      %1348 = vst.msk [vmem:[%s221 + $0x3e0] sm:$0xff] %vm1223, %v1214
      %1349 = vst.msk [vmem:[%s221 + $0x3e8] sm:$0xff] %vm1223, %v1216
      %1350 = vst.msk [vmem:[%s221 + $0x3f0] sm:$0xff] %vm1223, %v1219
      %1351 = vst.msk [vmem:[%s221 + $0x3f8] sm:$0xff] %vm1223, %v1221
      %v1352 = vsel %vm1223, %v904, 0.0
      %v1353 = vsel %vm1223, %v906, 0.0
      %v1354 = vadd.f32 %v1352, %v1353
      %v1355 = vsel %vm1223, %v909, 0.0
      %v1356 = vadd.f32 %v1354, %v1355
      %v1357 = vsel %vm1223, %v911, 0.0
      %v1358 = vadd.f32 %v1356, %v1357
      %v1359 = vsel %vm1223, %v914, 0.0
      %v1360 = vadd.f32 %v1358, %v1359
      %v1361 = vsel %vm1223, %v916, 0.0
      %v1362 = vadd.f32 %v1360, %v1361
      %v1363 = vsel %vm1223, %v919, 0.0
      %v1364 = vadd.f32 %v1362, %v1363
      %v1365 = vsel %vm1223, %v921, 0.0
      %v1366 = vadd.f32 %v1364, %v1365
      %v1367 = vsel %vm1223, %v924, 0.0
      %v1368 = vadd.f32 %v1366, %v1367
      %v1369 = vsel %vm1223, %v926, 0.0
      %v1370 = vadd.f32 %v1368, %v1369
      %v1371 = vsel %vm1223, %v929, 0.0
      %v1372 = vadd.f32 %v1370, %v1371
      %v1373 = vsel %vm1223, %v931, 0.0
      %v1374 = vadd.f32 %v1372, %v1373
      %v1375 = vsel %vm1223, %v934, 0.0
      %v1376 = vadd.f32 %v1374, %v1375
      %v1377 = vsel %vm1223, %v936, 0.0
      %v1378 = vadd.f32 %v1376, %v1377
      %v1379 = vsel %vm1223, %v939, 0.0
      %v1380 = vadd.f32 %v1378, %v1379
      %v1381 = vsel %vm1223, %v941, 0.0
      %v1382 = vadd.f32 %v1380, %v1381
      %v1383 = vsel %vm1223, %v944, 0.0
      %v1384 = vadd.f32 %v1382, %v1383
      %v1385 = vsel %vm1223, %v946, 0.0
      %v1386 = vadd.f32 %v1384, %v1385
      %v1387 = vsel %vm1223, %v949, 0.0
      %v1388 = vadd.f32 %v1386, %v1387
      %v1389 = vsel %vm1223, %v951, 0.0
      %v1390 = vadd.f32 %v1388, %v1389
      %v1391 = vsel %vm1223, %v954, 0.0
      %v1392 = vadd.f32 %v1390, %v1391
      %v1393 = vsel %vm1223, %v956, 0.0
      %v1394 = vadd.f32 %v1392, %v1393
      %v1395 = vsel %vm1223, %v959, 0.0
      %v1396 = vadd.f32 %v1394, %v1395
      %v1397 = vsel %vm1223, %v961, 0.0
      %v1398 = vadd.f32 %v1396, %v1397
      %v1399 = vsel %vm1223, %v964, 0.0
      %v1400 = vadd.f32 %v1398, %v1399
      %v1401 = vsel %vm1223, %v966, 0.0
      %v1402 = vadd.f32 %v1400, %v1401
      %v1403 = vsel %vm1223, %v969, 0.0
      %v1404 = vadd.f32 %v1402, %v1403
      %v1405 = vsel %vm1223, %v971, 0.0
      %v1406 = vadd.f32 %v1404, %v1405
      %v1407 = vsel %vm1223, %v974, 0.0
      %v1408 = vadd.f32 %v1406, %v1407
      %v1409 = vsel %vm1223, %v976, 0.0
      %v1410 = vadd.f32 %v1408, %v1409
      %v1411 = vsel %vm1223, %v979, 0.0
      %v1412 = vadd.f32 %v1410, %v1411
      %v1413 = vsel %vm1223, %v981, 0.0
      %v1414 = vadd.f32 %v1412, %v1413
      %v1415 = vsel %vm1223, %v984, 0.0
      %v1416 = vadd.f32 %v1414, %v1415
      %v1417 = vsel %vm1223, %v986, 0.0
      %v1418 = vadd.f32 %v1416, %v1417
      %v1419 = vsel %vm1223, %v989, 0.0
      %v1420 = vadd.f32 %v1418, %v1419
      %v1421 = vsel %vm1223, %v991, 0.0
      %v1422 = vadd.f32 %v1420, %v1421
      %v1423 = vsel %vm1223, %v994, 0.0
      %v1424 = vadd.f32 %v1422, %v1423
      %v1425 = vsel %vm1223, %v996, 0.0
      %v1426 = vadd.f32 %v1424, %v1425
      %v1427 = vsel %vm1223, %v999, 0.0
      %v1428 = vadd.f32 %v1426, %v1427
      %v1429 = vsel %vm1223, %v1001, 0.0
      %v1430 = vadd.f32 %v1428, %v1429
      %v1431 = vsel %vm1223, %v1004, 0.0
      %v1432 = vadd.f32 %v1430, %v1431
      %v1433 = vsel %vm1223, %v1006, 0.0
      %v1434 = vadd.f32 %v1432, %v1433
      %v1435 = vsel %vm1223, %v1009, 0.0
      %v1436 = vadd.f32 %v1434, %v1435
      %v1437 = vsel %vm1223, %v1011, 0.0
      %v1438 = vadd.f32 %v1436, %v1437
      %v1439 = vsel %vm1223, %v1014, 0.0
      %v1440 = vadd.f32 %v1438, %v1439
      %v1441 = vsel %vm1223, %v1016, 0.0
      %v1442 = vadd.f32 %v1440, %v1441
      %v1443 = vsel %vm1223, %v1019, 0.0
      %v1444 = vadd.f32 %v1442, %v1443
      %v1445 = vsel %vm1223, %v1021, 0.0
      %v1446 = vadd.f32 %v1444, %v1445
      %v1447 = vsel %vm1223, %v1024, 0.0
      %v1448 = vadd.f32 %v1446, %v1447
      %v1449 = vsel %vm1223, %v1026, 0.0
      %v1450 = vadd.f32 %v1448, %v1449
      %v1451 = vsel %vm1223, %v1029, 0.0
      %v1452 = vadd.f32 %v1450, %v1451
      %v1453 = vsel %vm1223, %v1031, 0.0
      %v1454 = vadd.f32 %v1452, %v1453
      %v1455 = vsel %vm1223, %v1034, 0.0
      %v1456 = vadd.f32 %v1454, %v1455
      %v1457 = vsel %vm1223, %v1036, 0.0
      %v1458 = vadd.f32 %v1456, %v1457
      %v1459 = vsel %vm1223, %v1039, 0.0
      %v1460 = vadd.f32 %v1458, %v1459
      %v1461 = vsel %vm1223, %v1041, 0.0
      %v1462 = vadd.f32 %v1460, %v1461
      %v1463 = vsel %vm1223, %v1044, 0.0
      %v1464 = vadd.f32 %v1462, %v1463
      %v1465 = vsel %vm1223, %v1046, 0.0
      %v1466 = vadd.f32 %v1464, %v1465
      %v1467 = vsel %vm1223, %v1049, 0.0
      %v1468 = vadd.f32 %v1466, %v1467
      %v1469 = vsel %vm1223, %v1051, 0.0
      %v1470 = vadd.f32 %v1468, %v1469
      %v1471 = vsel %vm1223, %v1054, 0.0
      %v1472 = vadd.f32 %v1470, %v1471
      %v1473 = vsel %vm1223, %v1056, 0.0
      %v1474 = vadd.f32 %v1472, %v1473
      %v1475 = vsel %vm1223, %v1059, 0.0
      %v1476 = vadd.f32 %v1474, %v1475
      %v1477 = vsel %vm1223, %v1061, 0.0
      %v1478 = vadd.f32 %v1476, %v1477
      %v1479 = vsel %vm1223, %v1064, 0.0
      %v1480 = vadd.f32 %v1478, %v1479
      %v1481 = vsel %vm1223, %v1066, 0.0
      %v1482 = vadd.f32 %v1480, %v1481
      %v1483 = vsel %vm1223, %v1069, 0.0
      %v1484 = vadd.f32 %v1482, %v1483
      %v1485 = vsel %vm1223, %v1071, 0.0
      %v1486 = vadd.f32 %v1484, %v1485
      %v1487 = vsel %vm1223, %v1074, 0.0
      %v1488 = vadd.f32 %v1486, %v1487
      %v1489 = vsel %vm1223, %v1076, 0.0
      %v1490 = vadd.f32 %v1488, %v1489
      %v1491 = vsel %vm1223, %v1079, 0.0
      %v1492 = vadd.f32 %v1490, %v1491
      %v1493 = vsel %vm1223, %v1081, 0.0
      %v1494 = vadd.f32 %v1492, %v1493
      %v1495 = vsel %vm1223, %v1084, 0.0
      %v1496 = vadd.f32 %v1494, %v1495
      %v1497 = vsel %vm1223, %v1086, 0.0
      %v1498 = vadd.f32 %v1496, %v1497
      %v1499 = vsel %vm1223, %v1089, 0.0
      %v1500 = vadd.f32 %v1498, %v1499
      %v1501 = vsel %vm1223, %v1091, 0.0
      %v1502 = vadd.f32 %v1500, %v1501
      %v1503 = vsel %vm1223, %v1094, 0.0
      %v1504 = vadd.f32 %v1502, %v1503
      %v1505 = vsel %vm1223, %v1096, 0.0
      %v1506 = vadd.f32 %v1504, %v1505
      %v1507 = vsel %vm1223, %v1099, 0.0
      %v1508 = vadd.f32 %v1506, %v1507
      %v1509 = vsel %vm1223, %v1101, 0.0
      %v1510 = vadd.f32 %v1508, %v1509
      %v1511 = vsel %vm1223, %v1104, 0.0
      %v1512 = vadd.f32 %v1510, %v1511
      %v1513 = vsel %vm1223, %v1106, 0.0
      %v1514 = vadd.f32 %v1512, %v1513
      %v1515 = vsel %vm1223, %v1109, 0.0
      %v1516 = vadd.f32 %v1514, %v1515
      %v1517 = vsel %vm1223, %v1111, 0.0
      %v1518 = vadd.f32 %v1516, %v1517
      %v1519 = vsel %vm1223, %v1114, 0.0
      %v1520 = vadd.f32 %v1518, %v1519
      %v1521 = vsel %vm1223, %v1116, 0.0
      %v1522 = vadd.f32 %v1520, %v1521
      %v1523 = vsel %vm1223, %v1119, 0.0
      %v1524 = vadd.f32 %v1522, %v1523
      %v1525 = vsel %vm1223, %v1121, 0.0
      %v1526 = vadd.f32 %v1524, %v1525
      %v1527 = vsel %vm1223, %v1124, 0.0
      %v1528 = vadd.f32 %v1526, %v1527
      %v1529 = vsel %vm1223, %v1126, 0.0
      %v1530 = vadd.f32 %v1528, %v1529
      %v1531 = vsel %vm1223, %v1129, 0.0
      %v1532 = vadd.f32 %v1530, %v1531
      %v1533 = vsel %vm1223, %v1131, 0.0
      %v1534 = vadd.f32 %v1532, %v1533
      %v1535 = vsel %vm1223, %v1134, 0.0
      %v1536 = vadd.f32 %v1534, %v1535
      %v1537 = vsel %vm1223, %v1136, 0.0
      %v1538 = vadd.f32 %v1536, %v1537
      %v1539 = vsel %vm1223, %v1139, 0.0
      %v1540 = vadd.f32 %v1538, %v1539
      %v1541 = vsel %vm1223, %v1141, 0.0
      %v1542 = vadd.f32 %v1540, %v1541
      %v1543 = vsel %vm1223, %v1144, 0.0
      %v1544 = vadd.f32 %v1542, %v1543
      %v1545 = vsel %vm1223, %v1146, 0.0
      %v1546 = vadd.f32 %v1544, %v1545
      %v1547 = vsel %vm1223, %v1149, 0.0
      %v1548 = vadd.f32 %v1546, %v1547
      %v1549 = vsel %vm1223, %v1151, 0.0
      %v1550 = vadd.f32 %v1548, %v1549
      %v1551 = vsel %vm1223, %v1154, 0.0
      %v1552 = vadd.f32 %v1550, %v1551
      %v1553 = vsel %vm1223, %v1156, 0.0
      %v1554 = vadd.f32 %v1552, %v1553
      %v1555 = vsel %vm1223, %v1159, 0.0
      %v1556 = vadd.f32 %v1554, %v1555
      %v1557 = vsel %vm1223, %v1161, 0.0
      %v1558 = vadd.f32 %v1556, %v1557
      %v1559 = vsel %vm1223, %v1164, 0.0
      %v1560 = vadd.f32 %v1558, %v1559
      %v1561 = vsel %vm1223, %v1166, 0.0
      %v1562 = vadd.f32 %v1560, %v1561
      %v1563 = vsel %vm1223, %v1169, 0.0
      %v1564 = vadd.f32 %v1562, %v1563
      %v1565 = vsel %vm1223, %v1171, 0.0
      %v1566 = vadd.f32 %v1564, %v1565
      %v1567 = vsel %vm1223, %v1174, 0.0
      %v1568 = vadd.f32 %v1566, %v1567
      %v1569 = vsel %vm1223, %v1176, 0.0
      %v1570 = vadd.f32 %v1568, %v1569
      %v1571 = vsel %vm1223, %v1179, 0.0
      %v1572 = vadd.f32 %v1570, %v1571
      %v1573 = vsel %vm1223, %v1181, 0.0
      %v1574 = vadd.f32 %v1572, %v1573
      %v1575 = vsel %vm1223, %v1184, 0.0
      %v1576 = vadd.f32 %v1574, %v1575
      %v1577 = vsel %vm1223, %v1186, 0.0
      %v1578 = vadd.f32 %v1576, %v1577
      %v1579 = vsel %vm1223, %v1189, 0.0
      %v1580 = vadd.f32 %v1578, %v1579
      %v1581 = vsel %vm1223, %v1191, 0.0
      %v1582 = vadd.f32 %v1580, %v1581
      %v1583 = vsel %vm1223, %v1194, 0.0
      %v1584 = vadd.f32 %v1582, %v1583
      %v1585 = vsel %vm1223, %v1196, 0.0
      %v1586 = vadd.f32 %v1584, %v1585
      %v1587 = vsel %vm1223, %v1199, 0.0
      %v1588 = vadd.f32 %v1586, %v1587
      %v1589 = vsel %vm1223, %v1201, 0.0
      %v1590 = vadd.f32 %v1588, %v1589
      %v1591 = vsel %vm1223, %v1204, 0.0
      %v1592 = vadd.f32 %v1590, %v1591
      %v1593 = vsel %vm1223, %v1206, 0.0
      %v1594 = vadd.f32 %v1592, %v1593
      %v1595 = vsel %vm1223, %v1209, 0.0
      %v1596 = vadd.f32 %v1594, %v1595
      %v1597 = vsel %vm1223, %v1211, 0.0
      %v1598 = vadd.f32 %v1596, %v1597
      %v1599 = vsel %vm1223, %v1214, 0.0
      %v1600 = vadd.f32 %v1598, %v1599
      %v1601 = vsel %vm1223, %v1216, 0.0
      %v1602 = vadd.f32 %v1600, %v1601
      %v1603 = vsel %vm1223, %v1219, 0.0
      %v1604 = vadd.f32 %v1602, %v1603
      %v1605 = vsel %vm1223, %v1221, 0.0
      %v1606 = vadd.f32 %v1604, %v1605
      %v1607 = vrot.slane %v1606, 4
      %v1608 = vadd.f32 %v1606, %v1607
      %v1609 = vrot.slane %v1608, 2
      %v1610 = vadd.f32 %v1608, %v1609
      %v1611 = vrot.slane %v1610, 1
      %v1612 = vadd.f32 %v1610, %v1611
      %v1613 = vmul.f32 %v904, %v904
      %v1614 = vmul.f32 %v906, %v906
      %v1615 = vmul.f32 %v909, %v909
      %v1616 = vmul.f32 %v911, %v911
      %v1617 = vmul.f32 %v914, %v914
      %v1618 = vmul.f32 %v916, %v916
      %v1619 = vmul.f32 %v919, %v919
      %v1620 = vmul.f32 %v921, %v921
      %v1621 = vmul.f32 %v924, %v924
      %v1622 = vmul.f32 %v926, %v926
      %v1623 = vmul.f32 %v929, %v929
      %v1624 = vmul.f32 %v931, %v931
      %v1625 = vmul.f32 %v934, %v934
      %v1626 = vmul.f32 %v936, %v936
      %v1627 = vmul.f32 %v939, %v939
      %v1628 = vmul.f32 %v941, %v941
      %v1629 = vmul.f32 %v944, %v944
      %v1630 = vmul.f32 %v946, %v946
      %v1631 = vmul.f32 %v949, %v949
      %v1632 = vmul.f32 %v951, %v951
      %v1633 = vmul.f32 %v954, %v954
      %v1634 = vmul.f32 %v956, %v956
      %v1635 = vmul.f32 %v959, %v959
      %v1636 = vmul.f32 %v961, %v961
      %v1637 = vmul.f32 %v964, %v964
      %v1638 = vmul.f32 %v966, %v966
      %v1639 = vmul.f32 %v969, %v969
      %v1640 = vmul.f32 %v971, %v971
      %v1641 = vmul.f32 %v974, %v974
      %v1642 = vmul.f32 %v976, %v976
      %v1643 = vmul.f32 %v979, %v979
      %v1644 = vmul.f32 %v981, %v981
      %v1645 = vmul.f32 %v984, %v984
      %v1646 = vmul.f32 %v986, %v986
      %v1647 = vmul.f32 %v989, %v989
      %v1648 = vmul.f32 %v991, %v991
      %v1649 = vmul.f32 %v994, %v994
      %v1650 = vmul.f32 %v996, %v996
      %v1651 = vmul.f32 %v999, %v999
      %v1652 = vmul.f32 %v1001, %v1001
      %v1653 = vmul.f32 %v1004, %v1004
      %v1654 = vmul.f32 %v1006, %v1006
      %v1655 = vmul.f32 %v1009, %v1009
      %v1656 = vmul.f32 %v1011, %v1011
      %v1657 = vmul.f32 %v1014, %v1014
      %v1658 = vmul.f32 %v1016, %v1016
      %v1659 = vmul.f32 %v1019, %v1019
      %v1660 = vmul.f32 %v1021, %v1021
      %v1661 = vmul.f32 %v1024, %v1024
      %v1662 = vmul.f32 %v1026, %v1026
      %v1663 = vmul.f32 %v1029, %v1029
      %v1664 = vmul.f32 %v1031, %v1031
      %v1665 = vmul.f32 %v1034, %v1034
      %v1666 = vmul.f32 %v1036, %v1036
      %v1667 = vmul.f32 %v1039, %v1039
      %v1668 = vmul.f32 %v1041, %v1041
      %v1669 = vmul.f32 %v1044, %v1044
      %v1670 = vmul.f32 %v1046, %v1046
      %v1671 = vmul.f32 %v1049, %v1049
      %v1672 = vmul.f32 %v1051, %v1051
      %v1673 = vmul.f32 %v1054, %v1054
      %v1674 = vmul.f32 %v1056, %v1056
      %v1675 = vmul.f32 %v1059, %v1059
      %v1676 = vmul.f32 %v1061, %v1061
      %v1677 = vmul.f32 %v1064, %v1064
      %v1678 = vmul.f32 %v1066, %v1066
      %v1679 = vmul.f32 %v1069, %v1069
      %v1680 = vmul.f32 %v1071, %v1071
      %v1681 = vmul.f32 %v1074, %v1074
      %v1682 = vmul.f32 %v1076, %v1076
      %v1683 = vmul.f32 %v1079, %v1079
      %v1684 = vmul.f32 %v1081, %v1081
      %v1685 = vmul.f32 %v1084, %v1084
      %v1686 = vmul.f32 %v1086, %v1086
      %v1687 = vmul.f32 %v1089, %v1089
      %v1688 = vmul.f32 %v1091, %v1091
      %v1689 = vmul.f32 %v1094, %v1094
      %v1690 = vmul.f32 %v1096, %v1096
      %v1691 = vmul.f32 %v1099, %v1099
      %v1692 = vmul.f32 %v1101, %v1101
      %v1693 = vmul.f32 %v1104, %v1104
      %v1694 = vmul.f32 %v1106, %v1106
      %v1695 = vmul.f32 %v1109, %v1109
      %v1696 = vmul.f32 %v1111, %v1111
      %v1697 = vmul.f32 %v1114, %v1114
      %v1698 = vmul.f32 %v1116, %v1116
      %v1699 = vmul.f32 %v1119, %v1119
      %v1700 = vmul.f32 %v1121, %v1121
      %v1701 = vmul.f32 %v1124, %v1124
      %v1702 = vmul.f32 %v1126, %v1126
      %v1703 = vmul.f32 %v1129, %v1129
      %v1704 = vmul.f32 %v1131, %v1131
      %v1705 = vmul.f32 %v1134, %v1134
      %v1706 = vmul.f32 %v1136, %v1136
      %v1707 = vmul.f32 %v1139, %v1139
      %v1708 = vmul.f32 %v1141, %v1141
      %v1709 = vmul.f32 %v1144, %v1144
      %v1710 = vmul.f32 %v1146, %v1146
      %v1711 = vmul.f32 %v1149, %v1149
      %v1712 = vmul.f32 %v1151, %v1151
      %v1713 = vmul.f32 %v1154, %v1154
      %v1714 = vmul.f32 %v1156, %v1156
      %v1715 = vmul.f32 %v1159, %v1159
      %v1716 = vmul.f32 %v1161, %v1161
      %v1717 = vmul.f32 %v1164, %v1164
      %v1718 = vmul.f32 %v1166, %v1166
      %v1719 = vmul.f32 %v1169, %v1169
      %v1720 = vmul.f32 %v1171, %v1171
      %v1721 = vmul.f32 %v1174, %v1174
      %v1722 = vmul.f32 %v1176, %v1176
      %v1723 = vmul.f32 %v1179, %v1179
      %v1724 = vmul.f32 %v1181, %v1181
      %v1725 = vmul.f32 %v1184, %v1184
      %v1726 = vmul.f32 %v1186, %v1186
      %v1727 = vmul.f32 %v1189, %v1189
      %v1728 = vmul.f32 %v1191, %v1191
      %v1729 = vmul.f32 %v1194, %v1194
      %v1730 = vmul.f32 %v1196, %v1196
      %v1731 = vmul.f32 %v1199, %v1199
      %v1732 = vmul.f32 %v1201, %v1201
      %v1733 = vmul.f32 %v1204, %v1204
      %v1734 = vmul.f32 %v1206, %v1206
      %v1735 = vmul.f32 %v1209, %v1209
      %v1736 = vmul.f32 %v1211, %v1211
      %v1737 = vmul.f32 %v1214, %v1214
      %v1738 = vmul.f32 %v1216, %v1216
      %v1739 = vmul.f32 %v1219, %v1219
      %v1740 = vmul.f32 %v1221, %v1221
      %v1741 = vsel %vm1223, %v1613, 0.0
      %v1742 = vsel %vm1223, %v1614, 0.0
      %v1743 = vadd.f32 %v1741, %v1742
      %v1744 = vsel %vm1223, %v1615, 0.0
      %v1745 = vadd.f32 %v1743, %v1744
      %v1746 = vsel %vm1223, %v1616, 0.0
      %v1747 = vadd.f32 %v1745, %v1746
      %v1748 = vsel %vm1223, %v1617, 0.0
      %v1749 = vadd.f32 %v1747, %v1748
      %v1750 = vsel %vm1223, %v1618, 0.0
      %v1751 = vadd.f32 %v1749, %v1750
      %v1752 = vsel %vm1223, %v1619, 0.0
      %v1753 = vadd.f32 %v1751, %v1752
      %v1754 = vsel %vm1223, %v1620, 0.0
      %v1755 = vadd.f32 %v1753, %v1754
      %v1756 = vsel %vm1223, %v1621, 0.0
      %v1757 = vadd.f32 %v1755, %v1756
      %v1758 = vsel %vm1223, %v1622, 0.0
      %v1759 = vadd.f32 %v1757, %v1758
      %v1760 = vsel %vm1223, %v1623, 0.0
      %v1761 = vadd.f32 %v1759, %v1760
      %v1762 = vsel %vm1223, %v1624, 0.0
      %v1763 = vadd.f32 %v1761, %v1762
      %v1764 = vsel %vm1223, %v1625, 0.0
      %v1765 = vadd.f32 %v1763, %v1764
      %v1766 = vsel %vm1223, %v1626, 0.0
      %v1767 = vadd.f32 %v1765, %v1766
      %v1768 = vsel %vm1223, %v1627, 0.0
      %v1769 = vadd.f32 %v1767, %v1768
      %v1770 = vsel %vm1223, %v1628, 0.0
      %v1771 = vadd.f32 %v1769, %v1770
      %v1772 = vsel %vm1223, %v1629, 0.0
      %v1773 = vadd.f32 %v1771, %v1772
      %v1774 = vsel %vm1223, %v1630, 0.0
      %v1775 = vadd.f32 %v1773, %v1774
      %v1776 = vsel %vm1223, %v1631, 0.0
      %v1777 = vadd.f32 %v1775, %v1776
      %v1778 = vsel %vm1223, %v1632, 0.0
      %v1779 = vadd.f32 %v1777, %v1778
      %v1780 = vsel %vm1223, %v1633, 0.0
      %v1781 = vadd.f32 %v1779, %v1780
      %v1782 = vsel %vm1223, %v1634, 0.0
      %v1783 = vadd.f32 %v1781, %v1782
      %v1784 = vsel %vm1223, %v1635, 0.0
      %v1785 = vadd.f32 %v1783, %v1784
      %v1786 = vsel %vm1223, %v1636, 0.0
      %v1787 = vadd.f32 %v1785, %v1786
      %v1788 = vsel %vm1223, %v1637, 0.0
      %v1789 = vadd.f32 %v1787, %v1788
      %v1790 = vsel %vm1223, %v1638, 0.0
      %v1791 = vadd.f32 %v1789, %v1790
      %v1792 = vsel %vm1223, %v1639, 0.0
      %v1793 = vadd.f32 %v1791, %v1792
      %v1794 = vsel %vm1223, %v1640, 0.0
      %v1795 = vadd.f32 %v1793, %v1794
      %v1796 = vsel %vm1223, %v1641, 0.0
      %v1797 = vadd.f32 %v1795, %v1796
      %v1798 = vsel %vm1223, %v1642, 0.0
      %v1799 = vadd.f32 %v1797, %v1798
      %v1800 = vsel %vm1223, %v1643, 0.0
      %v1801 = vadd.f32 %v1799, %v1800
      %v1802 = vsel %vm1223, %v1644, 0.0
      %v1803 = vadd.f32 %v1801, %v1802
      %v1804 = vsel %vm1223, %v1645, 0.0
      %v1805 = vadd.f32 %v1803, %v1804
      %v1806 = vsel %vm1223, %v1646, 0.0
      %v1807 = vadd.f32 %v1805, %v1806
      %v1808 = vsel %vm1223, %v1647, 0.0
      %v1809 = vadd.f32 %v1807, %v1808
      %v1810 = vsel %vm1223, %v1648, 0.0
      %v1811 = vadd.f32 %v1809, %v1810
      %v1812 = vsel %vm1223, %v1649, 0.0
      %v1813 = vadd.f32 %v1811, %v1812
      %v1814 = vsel %vm1223, %v1650, 0.0
      %v1815 = vadd.f32 %v1813, %v1814
      %v1816 = vsel %vm1223, %v1651, 0.0
      %v1817 = vadd.f32 %v1815, %v1816
      %v1818 = vsel %vm1223, %v1652, 0.0
      %v1819 = vadd.f32 %v1817, %v1818
      %v1820 = vsel %vm1223, %v1653, 0.0
      %v1821 = vadd.f32 %v1819, %v1820
      %v1822 = vsel %vm1223, %v1654, 0.0
      %v1823 = vadd.f32 %v1821, %v1822
      %v1824 = vsel %vm1223, %v1655, 0.0
      %v1825 = vadd.f32 %v1823, %v1824
      %v1826 = vsel %vm1223, %v1656, 0.0
      %v1827 = vadd.f32 %v1825, %v1826
      %v1828 = vsel %vm1223, %v1657, 0.0
      %v1829 = vadd.f32 %v1827, %v1828
      %v1830 = vsel %vm1223, %v1658, 0.0
      %v1831 = vadd.f32 %v1829, %v1830
      %v1832 = vsel %vm1223, %v1659, 0.0
      %v1833 = vadd.f32 %v1831, %v1832
      %v1834 = vsel %vm1223, %v1660, 0.0
      %v1835 = vadd.f32 %v1833, %v1834
      %v1836 = vsel %vm1223, %v1661, 0.0
      %v1837 = vadd.f32 %v1835, %v1836
      %v1838 = vsel %vm1223, %v1662, 0.0
      %v1839 = vadd.f32 %v1837, %v1838
      %v1840 = vsel %vm1223, %v1663, 0.0
      %v1841 = vadd.f32 %v1839, %v1840
      %v1842 = vsel %vm1223, %v1664, 0.0
      %v1843 = vadd.f32 %v1841, %v1842
      %v1844 = vsel %vm1223, %v1665, 0.0
      %v1845 = vadd.f32 %v1843, %v1844
      %v1846 = vsel %vm1223, %v1666, 0.0
      %v1847 = vadd.f32 %v1845, %v1846
      %v1848 = vsel %vm1223, %v1667, 0.0
      %v1849 = vadd.f32 %v1847, %v1848
      %v1850 = vsel %vm1223, %v1668, 0.0
      %v1851 = vadd.f32 %v1849, %v1850
      %v1852 = vsel %vm1223, %v1669, 0.0
      %v1853 = vadd.f32 %v1851, %v1852
      %v1854 = vsel %vm1223, %v1670, 0.0
      %v1855 = vadd.f32 %v1853, %v1854
      %v1856 = vsel %vm1223, %v1671, 0.0
      %v1857 = vadd.f32 %v1855, %v1856
      %v1858 = vsel %vm1223, %v1672, 0.0
      %v1859 = vadd.f32 %v1857, %v1858
      %v1860 = vsel %vm1223, %v1673, 0.0
      %v1861 = vadd.f32 %v1859, %v1860
      %v1862 = vsel %vm1223, %v1674, 0.0
      %v1863 = vadd.f32 %v1861, %v1862
      %v1864 = vsel %vm1223, %v1675, 0.0
      %v1865 = vadd.f32 %v1863, %v1864
      %v1866 = vsel %vm1223, %v1676, 0.0
      %v1867 = vadd.f32 %v1865, %v1866
      %v1868 = vsel %vm1223, %v1677, 0.0
      %v1869 = vadd.f32 %v1867, %v1868
      %v1870 = vsel %vm1223, %v1678, 0.0
      %v1871 = vadd.f32 %v1869, %v1870
      %v1872 = vsel %vm1223, %v1679, 0.0
      %v1873 = vadd.f32 %v1871, %v1872
      %v1874 = vsel %vm1223, %v1680, 0.0
      %v1875 = vadd.f32 %v1873, %v1874
      %v1876 = vsel %vm1223, %v1681, 0.0
      %v1877 = vadd.f32 %v1875, %v1876
      %v1878 = vsel %vm1223, %v1682, 0.0
      %v1879 = vadd.f32 %v1877, %v1878
      %v1880 = vsel %vm1223, %v1683, 0.0
      %v1881 = vadd.f32 %v1879, %v1880
      %v1882 = vsel %vm1223, %v1684, 0.0
      %v1883 = vadd.f32 %v1881, %v1882
      %v1884 = vsel %vm1223, %v1685, 0.0
      %v1885 = vadd.f32 %v1883, %v1884
      %v1886 = vsel %vm1223, %v1686, 0.0
      %v1887 = vadd.f32 %v1885, %v1886
      %v1888 = vsel %vm1223, %v1687, 0.0
      %v1889 = vadd.f32 %v1887, %v1888
      %v1890 = vsel %vm1223, %v1688, 0.0
      %v1891 = vadd.f32 %v1889, %v1890
      %v1892 = vsel %vm1223, %v1689, 0.0
      %v1893 = vadd.f32 %v1891, %v1892
      %v1894 = vsel %vm1223, %v1690, 0.0
      %v1895 = vadd.f32 %v1893, %v1894
      %v1896 = vsel %vm1223, %v1691, 0.0
      %v1897 = vadd.f32 %v1895, %v1896
      %v1898 = vsel %vm1223, %v1692, 0.0
      %v1899 = vadd.f32 %v1897, %v1898
      %v1900 = vsel %vm1223, %v1693, 0.0
      %v1901 = vadd.f32 %v1899, %v1900
      %v1902 = vsel %vm1223, %v1694, 0.0
      %v1903 = vadd.f32 %v1901, %v1902
      %v1904 = vsel %vm1223, %v1695, 0.0
      %v1905 = vadd.f32 %v1903, %v1904
      %v1906 = vsel %vm1223, %v1696, 0.0
      %v1907 = vadd.f32 %v1905, %v1906
      %v1908 = vsel %vm1223, %v1697, 0.0
      %v1909 = vadd.f32 %v1907, %v1908
      %v1910 = vsel %vm1223, %v1698, 0.0
      %v1911 = vadd.f32 %v1909, %v1910
      %v1912 = vsel %vm1223, %v1699, 0.0
      %v1913 = vadd.f32 %v1911, %v1912
      %v1914 = vsel %vm1223, %v1700, 0.0
      %v1915 = vadd.f32 %v1913, %v1914
      %v1916 = vsel %vm1223, %v1701, 0.0
      %v1917 = vadd.f32 %v1915, %v1916
      %v1918 = vsel %vm1223, %v1702, 0.0
      %v1919 = vadd.f32 %v1917, %v1918
      %v1920 = vsel %vm1223, %v1703, 0.0
      %v1921 = vadd.f32 %v1919, %v1920
      %v1922 = vsel %vm1223, %v1704, 0.0
      %v1923 = vadd.f32 %v1921, %v1922
      %v1924 = vsel %vm1223, %v1705, 0.0
      %v1925 = vadd.f32 %v1923, %v1924
      %v1926 = vsel %vm1223, %v1706, 0.0
      %v1927 = vadd.f32 %v1925, %v1926
      %v1928 = vsel %vm1223, %v1707, 0.0
      %v1929 = vadd.f32 %v1927, %v1928
      %v1930 = vsel %vm1223, %v1708, 0.0
      %v1931 = vadd.f32 %v1929, %v1930
      %v1932 = vsel %vm1223, %v1709, 0.0
      %v1933 = vadd.f32 %v1931, %v1932
      %v1934 = vsel %vm1223, %v1710, 0.0
      %v1935 = vadd.f32 %v1933, %v1934
      %v1936 = vsel %vm1223, %v1711, 0.0
      %v1937 = vadd.f32 %v1935, %v1936
      %v1938 = vsel %vm1223, %v1712, 0.0
      %v1939 = vadd.f32 %v1937, %v1938
      %v1940 = vsel %vm1223, %v1713, 0.0
      %v1941 = vadd.f32 %v1939, %v1940
      %v1942 = vsel %vm1223, %v1714, 0.0
      %v1943 = vadd.f32 %v1941, %v1942
      %v1944 = vsel %vm1223, %v1715, 0.0
      %v1945 = vadd.f32 %v1943, %v1944
      %v1946 = vsel %vm1223, %v1716, 0.0
      %v1947 = vadd.f32 %v1945, %v1946
      %v1948 = vsel %vm1223, %v1717, 0.0
      %v1949 = vadd.f32 %v1947, %v1948
      %v1950 = vsel %vm1223, %v1718, 0.0
      %v1951 = vadd.f32 %v1949, %v1950
      %v1952 = vsel %vm1223, %v1719, 0.0
      %v1953 = vadd.f32 %v1951, %v1952
      %v1954 = vsel %vm1223, %v1720, 0.0
      %v1955 = vadd.f32 %v1953, %v1954
      %v1956 = vsel %vm1223, %v1721, 0.0
      %v1957 = vadd.f32 %v1955, %v1956
      %v1958 = vsel %vm1223, %v1722, 0.0
      %v1959 = vadd.f32 %v1957, %v1958
      %v1960 = vsel %vm1223, %v1723, 0.0
      %v1961 = vadd.f32 %v1959, %v1960
      %v1962 = vsel %vm1223, %v1724, 0.0
      %v1963 = vadd.f32 %v1961, %v1962
      %v1964 = vsel %vm1223, %v1725, 0.0
      %v1965 = vadd.f32 %v1963, %v1964
      %v1966 = vsel %vm1223, %v1726, 0.0
      %v1967 = vadd.f32 %v1965, %v1966
      %v1968 = vsel %vm1223, %v1727, 0.0
      %v1969 = vadd.f32 %v1967, %v1968
      %v1970 = vsel %vm1223, %v1728, 0.0
      %v1971 = vadd.f32 %v1969, %v1970
      %v1972 = vsel %vm1223, %v1729, 0.0
      %v1973 = vadd.f32 %v1971, %v1972
      %v1974 = vsel %vm1223, %v1730, 0.0
      %v1975 = vadd.f32 %v1973, %v1974
      %v1976 = vsel %vm1223, %v1731, 0.0
      %v1977 = vadd.f32 %v1975, %v1976
      %v1978 = vsel %vm1223, %v1732, 0.0
      %v1979 = vadd.f32 %v1977, %v1978
      %v1980 = vsel %vm1223, %v1733, 0.0
      %v1981 = vadd.f32 %v1979, %v1980
      %v1982 = vsel %vm1223, %v1734, 0.0
      %v1983 = vadd.f32 %v1981, %v1982
      %v1984 = vsel %vm1223, %v1735, 0.0
      %v1985 = vadd.f32 %v1983, %v1984
      %v1986 = vsel %vm1223, %v1736, 0.0
      %v1987 = vadd.f32 %v1985, %v1986
      %v1988 = vsel %vm1223, %v1737, 0.0
      %v1989 = vadd.f32 %v1987, %v1988
      %v1990 = vsel %vm1223, %v1738, 0.0
      %v1991 = vadd.f32 %v1989, %v1990
      %v1992 = vsel %vm1223, %v1739, 0.0
      %v1993 = vadd.f32 %v1991, %v1992
      %v1994 = vsel %vm1223, %v1740, 0.0
      %v1995 = vadd.f32 %v1993, %v1994
      %v1996 = vrot.slane %v1995, 4
      %v1997 = vadd.f32 %v1995, %v1996
      %v1998 = vrot.slane %v1997, 2
      %v1999 = vadd.f32 %v1997, %v1998
      %v2000 = vrot.slane %v1999, 1
      %v2001 = vadd.f32 %v1999, %v2000
      %vm2002 = vcmask 1040384
      %v2003 = vsel %vm2002, %v1612, %v2001
      %vm2004 = vcmask 254976
      %2005 = vst.msk [vmem:[%s229] sm:$0x3] %vm2004, %v2003
      %s2006 = smul.u32 128, %s19
      %p2007 = scmp.lt.s32.totalorder %s2006, 1023
      %s2008 = scalar_select %p2007, %s2006, 1023
      %p2009 = scmp.lt.s32.totalorder %s20, 0
      %s2010 = scalar_select %p2009, %s20, 0
      %s2011 = sadd.s32 %s2010, %s2008
      %s2012 = smul.addr %s2011, 8
      %s2013 = scalar_lea.vmem %s2, %s2012
      %p2014 = scmp.lt.s32.totalorder %s19, 7
      %s2015 = scalar_select %p2014, %s19, 7
      %p2016 = scmp.lt.s32.totalorder %s20, 0
      %s2017 = scalar_select %p2016, %s20, 0
      %s2018 = sadd.s32 %s2017, %s2015
      %s2019 = smul.addr %s2018, 2
      %s2020 = scalar_lea.vmem %s3, %s2019
      // Predicated region
      $region29: #{conv_bn_leaky.2} parent=27 // pred_check
        %p2021 = pneg %p99
      $region30: #{conv_bn_leaky.2} parent=27 // pred_check_branch
        %2023 = sbr.rel (%p2021) target = $region32
      $region31: #{conv_bn_leaky.2} parent=27 // pred_region
        %s2024 = smul.u32 128, %s19
      $region32: #{conv_bn_leaky.2} parent=27 // pred_fallthru
        _
      // Predicated region
      $region33: #{conv_bn_leaky.2} parent=27 // pred_check
        %p2025 = pneg %p127
      $region34: #{conv_bn_leaky.2} parent=27 // pred_check_branch
        %2027 = sbr.rel (%p2025) target = $region36
      $region35: #{conv_bn_leaky.2} parent=27 // pred_region
        _
      $region36: #{conv_bn_leaky.2} parent=27 // pred_fallthru
        _
    $region28: #{conv_bn_leaky.2} parent=5 // pred_fallthru
      _
    %p2028 = scmp.le.s32.totalorder 2, %s10
    // Predicated region
    $region37: #{conv_bn_leaky.2} parent=5 // pred_check
      %p2029 = pneg %p2028
    $region38: #{conv_bn_leaky.2} parent=5 // pred_check_branch
      %2031 = sbr.rel (%p2029) target = $region40
    $region39: #{conv_bn_leaky.2} parent=5 // pred_region
      %s2032 = ssub.s32 %s10, 2
      // Predicated region
      $region41: #{conv_bn_leaky.2} parent=39 // pred_check
        %p2033 = pneg %p105
      $region42: #{conv_bn_leaky.2} parent=39 // pred_check_branch
        %2035 = sbr.rel (%p2033) target = $region44
      $region43: #{conv_bn_leaky.2} parent=39 // pred_region
        %s2036 = smul.u32 128, %s21
        %p2037 = scmp.lt.s32.totalorder %s2036, 1023
        %s2038 = scalar_select %p2037, %s2036, 1023
        %p2039 = scmp.lt.s32.totalorder %s22, 0
        %s2040 = scalar_select %p2039, %s22, 0
        %s2041 = sadd.s32 %s2040, %s2038
        %s2042 = smul.addr %s2041, 8
        %s2043 = scalar_lea.vmem %s2, %s2042
      $region44: #{conv_bn_leaky.2} parent=39 // pred_fallthru
        _
      // Predicated region
      $region45: #{conv_bn_leaky.2} parent=39 // pred_check
        %p2044 = pneg %p133
      $region46: #{conv_bn_leaky.2} parent=39 // pred_check_branch
        %2046 = sbr.rel (%p2044) target = $region48
      $region47: #{conv_bn_leaky.2} parent=39 // pred_region
        %p2047 = scmp.lt.s32.totalorder %s21, 7
        %s2048 = scalar_select %p2047, %s21, 7
        %p2049 = scmp.lt.s32.totalorder %s22, 0
        %s2050 = scalar_select %p2049, %s22, 0
        %s2051 = sadd.s32 %s2050, %s2048
        %s2052 = smul.addr %s2051, 2
        %s2053 = scalar_lea.vmem %s3, %s2052
      $region48: #{conv_bn_leaky.2} parent=39 // pred_fallthru
        _
    $region40: #{conv_bn_leaky.2} parent=5 // pred_fallthru
      _
  $region6: #{conv_bn_leaky.2} parent=0 // loop_footer
    %s14 = sadd.s32 1, %s10
  $region7: #{conv_bn_leaky.2} parent=0 // loop_footer_branch
    %9 = sbr.rel target = $region3
  $region8: #{conv_bn_leaky.2} parent=0 // loop_exit
    _

</llo_original>
